<compile_context>
chip_gen: v5e
topology: v5e:2x2
jax: 0.10.0
libtpu: 0.0.40
codegen_flags: <defaults>
</compile_context>

<pallas_src>
import math
import jax
import jax.numpy as jnp
from jax.experimental import pallas as pl
from jax.experimental.pallas import tpu as pltpu

# ----------------------------- configuration --------------------------------
BATCH = 2
INPUT_SIZE = 7          # conv "length" / number of features
WINDOW_SIZE = 3         # conv channels and LSTM sequence length
KERNEL_SIZE = 2
DILATION_BASE = 2
LSTM_HIDDEN = 160
LSTM_LAYERS = 2         # LSTM_HIDDEN * LSTM_LAYERS == 320 == linear_2.in_features

# Derived exactly as in CausalDilatedConvNet.__init__
NUM_DILATION_LAYERS = int(
    math.log((WINDOW_SIZE - 1) * (DILATION_BASE - 1) / (KERNEL_SIZE - 1) + 1)
    / math.log(DILATION_BASE)) + 1
# TODO(synk): `self.sub_small_num_layer` is undefined in the PyTorch source
# (AttributeError as written); interpreted here as num_layers, with dilation and
# padding frozen at the last value of the preceding temporal loop — exactly what
# the Python closure in the source produces.
NUM_SPATIAL_LAYERS = NUM_DILATION_LAYERS
DIL_LAST = DILATION_BASE ** (NUM_DILATION_LAYERS - 1)
PAD_LAST = DIL_LAST * (KERNEL_SIZE - 1)

# Per-branch pre-maxpool lengths and post-maxpool lengths (MaxPool1d k=s=2, floor mode).
L1 = INPUT_SIZE + NUM_SPATIAL_LAYERS * DIL_LAST * (KERNEL_SIZE - 1)   # spatial branch
P1 = L1 // 2
L2 = INPUT_SIZE - 3 + 1                                               # causal_1d branch
P2 = L2 // 2
L3 = 2 * INPUT_SIZE - 1                                               # causal_full branch
P3 = L3 // 2
RECEPTIVE = P1 + P2 + P3

# Module's own formula for linear_1.in_features must equal the real concat length.
_scd = int((INPUT_SIZE + (KERNEL_SIZE - 1)
            * sum(DILATION_BASE ** i for i in range(NUM_DILATION_LAYERS))) / 2)
_c1d = int((INPUT_SIZE - 3 + 1) / 2)
_f1d = int((INPUT_SIZE + (INPUT_SIZE - 1)) / 2)
assert _scd + _c1d + _f1d == RECEPTIVE, "config inconsistent with module formula"
assert LSTM_HIDDEN * LSTM_LAYERS == 320, "linear_2 expects 320 input features"

VMEM = pltpu.MemorySpace.VMEM
H4 = 4 * LSTM_HIDDEN                                                  # packed gate width


# ----------------------------- in-kernel helpers -----------------------------
def _conv1d(x, w, b, dilation, padding):
    """PyTorch-semantics Conv1d with symmetric zero padding.

    x: (B, Cin, L) value, w: (K, Cout, Cin) value (taps leading), b: (1, Cout, 1).
    """
    B, Cin, L = x.shape
    K, Cout, _ = w.shape
    L_out = L + 2 * padding - dilation * (K - 1)
    if padding > 0:
        z = jnp.zeros((B, Cin, padding), dtype=x.dtype)
        xp = jnp.concatenate([z, x, z], axis=-1)
    else:
        xp = x
    # single batch-broadcast of the whole weight per layer (hoisted out of tap loop)
    wb = jnp.broadcast_to(w[:, None], (K, B, Cout, Cin))
    acc = jnp.broadcast_to(b, (B, Cout, L_out)).astype(jnp.float32)
    for j in range(K):                       # static unroll over taps
        acc = acc + jnp.einsum(
            'boc,bcl->bol', wb[j], xp[:, :, j * dilation: j * dilation + L_out],
            preferred_element_type=jnp.float32)
    return acc


# ----------------------------- fused forward kernel --------------------------
def magnitude14_kernel(x_ref, ws_ref, bs_ref, wc_ref, bc_ref, wf_ref, bf_ref,
                       w1e_ref, b1_ref, wih0_ref, whh_ref, wih1_ref,
                       blstm_ref, w2_ref, b2_ref, o_ref):
    B, T, H = BATCH, WINDOW_SIZE, LSTM_HIDDEN
    x = x_ref[...].astype(jnp.float32)                       # (B, W, C)

    # ---- CausalDilatedConvNet ("autoencoder") --------------------------------
    h1 = x
    for i in range(NUM_SPATIAL_LAYERS):                      # spatial dilated convs
        h1 = _conv1d(h1, ws_ref[i], bs_ref[i], DIL_LAST, PAD_LAST)
    h2 = _conv1d(x, wc_ref[...], bc_ref[...], 1, 0)          # Conv1d(k=3, pad=0)
    h3 = _conv1d(x, wf_ref[...], bf_ref[...], 1, INPUT_SIZE - 1)  # Conv1d(k=C, pad=C-1)

    # MaxPool1d(k=2,s=2) + concat(dim=2) + Linear(receptive_field, 2), fused:
    # adjacent-pair max on the VPU, even-index selection folded into zero-interleaved
    # weight rows (built host-side), concat folded into per-branch weight row splits.
    w1e = w1e_ref[...]

    def pool_lin(h, w_rows):
        m = jnp.maximum(h[:, :, :-1], h[:, :, 1:])           # (B, W, L-1)
        wb = jnp.broadcast_to(w_rows[None], (B,) + w_rows.shape)
        return jnp.einsum('bcl,bld->bcd', m, wb, preferred_element_type=jnp.float32)

    ae = (pool_lin(h1, w1e[:L1 - 1])
          + pool_lin(h2, w1e[L1 - 1:L1 - 1 + L2 - 1])
          + pool_lin(h3, w1e[L1 - 1 + L2 - 1:])
          + b1_ref[...])
    ae = jnp.maximum(ae, 0.0)                                 # ReLU -> (B, W, 2)

    # ---- 2-layer LSTM (batch_first, seq_len = window_size) --------------------
    wih0 = wih0_ref[...]                                      # (2,   4H) packed i|f|g|o
    wih1 = wih1_ref[...]                                      # (H,   4H)
    whh0 = whh_ref[0]                                         # (H,   4H)
    whh1 = whh_ref[1]                                         # (H,   4H)
    b0 = blstm_ref[0:1, :]                                    # (1,   4H)  (b_ih + b_hh)
    b1l = blstm_ref[1:2, :]

    def run_layer(xp, whh, collect):
        h = jnp.zeros((B, H), jnp.float32)
        c = jnp.zeros((B, H), jnp.float32)
        hs = []
        for t in range(T):                                    # static unroll (T small)
            # single lane-dense (B,H)x(H,4H) matmul per step; h0 == 0 so skip at t==0
            z = xp[t] if t == 0 else xp[t] + jnp.dot(
                h, whh, preferred_element_type=jnp.float32)
            i_g = jax.nn.sigmoid(z[:, 0:H])                   # PyTorch gate order i,f,g,o
            f_g = jax.nn.sigmoid(z[:, H:2 * H])
            g_g = jnp.tanh(z[:, 2 * H:3 * H])
            o_g = jax.nn.sigmoid(z[:, 3 * H:4 * H])
            c = f_g * c + i_g * g_g
            h = o_g * jnp.tanh(c)
            if collect:
                hs.append(h)
        return hs, h

    # layer 0: input projection (+ bias) hoisted out of the recurrence
    xp0 = [jnp.dot(ae[:, t, :], wih0, preferred_element_type=jnp.float32) + b0
           for t in range(T)]
    h0_seq, h0_last = run_layer(xp0, whh0, collect=True)

    # layer 1: only h_last is consumed downstream -> never materialize its sequence
    xp1 = [jnp.dot(h0_seq[t], wih1, preferred_element_type=jnp.float32) + b1l
           for t in range(T)]
    _, h1_last = run_layer(xp1, whh1, collect=False)

    # ---- head: linear_2 (320 -> 1) + dropout(eval) + sigmoid -------------------
    # h_n.permute(1,0,2).reshape(B,-1) == [h_layer0 | h_layer1]; the concat is folded
    # into a row split of w2.
    # TODO(synk): nn.Dropout(0.2) is the identity in eval mode; training-mode
    # stochastic dropout is intentionally not implemented.
    w2 = w2_ref[...]
    logit = (jnp.dot(h0_last, w2[:H], preferred_element_type=jnp.float32)
             + jnp.dot(h1_last, w2[H:], preferred_element_type=jnp.float32)
             + b2_ref[...])
    o_ref[...] = jax.nn.sigmoid(logit)


_N_IN = 15
_FUSED = pl.pallas_call(
    magnitude14_kernel,
    out_shape=jax.ShapeDtypeStruct((BATCH, 1), jnp.float32),
    in_specs=[pl.BlockSpec(memory_space=VMEM) for _ in range(_N_IN)],
    out_specs=pl.BlockSpec(memory_space=VMEM),
)


# ----------------------------- parameters ------------------------------------
def init_params(key):
    W, C, K, H = WINDOW_SIZE, INPUT_SIZE, KERNEL_SIZE, LSTM_HIDDEN
    ks = jax.random.split(key, 14)

    def unif(k, shape, fan_in):
        b = 1.0 / math.sqrt(fan_in)
        return jax.random.uniform(k, shape, jnp.float32, -b, b)

    def xavier(k, shape):
        b = math.sqrt(6.0 / (shape[0] + shape[1]))
        return jax.random.uniform(k, shape, jnp.float32, -b, b)

    p = {}
    # conv weights: torch (Cout, Cin, K) -> stored taps-first (K, Cout, Cin)
    ws = unif(ks[0], (NUM_SPATIAL_LAYERS, W, W, K), W * K)
    p['ws'] = jnp.transpose(ws, (0, 3, 1, 2))
    p['bs'] = unif(ks[1], (NUM_SPATIAL_LAYERS, 1, W, 1), W * K)
    wc = unif(ks[2], (W, W, 3), W * 3)
    p['wc'] = jnp.transpose(wc, (2, 0, 1))
    p['bc'] = unif(ks[3], (1, W, 1), W * 3)
    wf = unif(ks[4], (W, W, C), W * C)
    p['wf'] = jnp.transpose(wf, (2, 0, 1))
    p['bf'] = unif(ks[5], (1, W, 1), W * C)

    # linear_1: torch (2, RECEPTIVE) -> transpose, split per pooled branch, and fold
    # the MaxPool1d(2) even-index selection into zero-interleaved rows (host-side).
    w1 = jnp.transpose(unif(ks[6], (2, RECEPTIVE), RECEPTIVE))           # (RECEPTIVE, 2)

    def expand(w_rows, length):
        e = jnp.zeros((length - 1, 2), jnp.float32)
        return e.at[0:2 * w_rows.shape[0]:2].set(w_rows)

    p['w1e'] = jnp.concatenate([expand(w1[:P1], L1),
                                expand(w1[P1:P1 + P2], L2),
                                expand(w1[P1 + P2:], L3)], axis=0)       # (L1+L2+L3-3, 2)
    p['b1'] = unif(ks[7], (1, 1, 2), RECEPTIVE)

    # LSTM (init_weights: xavier_uniform weights, zero biases); gates packed i|f|g|o
    # along the 4H axis, weights pre-transposed: wih (D_in, 4H), whh (H, 4H).
    p['wih0'] = jnp.transpose(xavier(ks[8], (4 * H, 2)))                 # (2, 4H)
    whh0 = jnp.transpose(xavier(ks[9], (4 * H, H)))                      # (H, 4H)
    p['wih1'] = jnp.transpose(xavier(ks[10], (4 * H, H)))                # (H, 4H)
    whh1 = jnp.transpose(xavier(ks[11], (4 * H, H)))                     # (H, 4H)
    p['whh'] = jnp.stack([whh0, whh1], axis=0)                           # (2, H, 4H)
    p['blstm'] = jnp.zeros((LSTM_LAYERS, 4 * H), jnp.float32)            # b_ih + b_hh

    # linear_2: torch (1, 320) -> (320, 1)
    p['w2'] = jnp.transpose(unif(ks[12], (1, LSTM_LAYERS * H), LSTM_LAYERS * H))
    p['b2'] = unif(ks[13], (1, 1), LSTM_LAYERS * H)
    return p


# ----------------------------- forward ---------------------------------------
def magnitude_14_forward(x, p):
    return _FUSED(x, p['ws'], p['bs'], p['wc'], p['bc'], p['wf'], p['bf'],
                  p['w1e'], p['b1'], p['wih0'], p['whh'], p['wih1'],
                  p['blstm'], p['w2'], p['b2'])               # (B, 1)


# ----------------------------- main -------------------------------------------
if __name__ == "__main__":
    key = jax.random.PRNGKey(0)
    pkey, xkey = jax.random.split(key)
    params = init_params(pkey)
    x = jax.random.normal(xkey, (BATCH, WINDOW_SIZE, INPUT_SIZE), jnp.float32)

    out = magnitude_14_forward(x, params)
    out = jax.block_until_ready(out)

    assert out.shape == (BATCH, 1)
    assert bool(jnp.all(jnp.isfinite(out)))
    assert bool(jnp.all((out > 0.0) & (out < 1.0)))          # sigmoid range
    print("KERNEL_OK")
</pallas_src>

<mosaic_0001>
module attributes {stable_mosaic.version = 11 : i64} {
  func.func @magnitude14_kernel(%arg0: memref<2x3x7xf32, #tpu.memory_space<vmem>>, %arg1: memref<2x2x3x3xf32, #tpu.memory_space<vmem>>, %arg2: memref<2x1x3x1xf32, #tpu.memory_space<vmem>>, %arg3: memref<3x3x3xf32, #tpu.memory_space<vmem>>, %arg4: memref<1x3x1xf32, #tpu.memory_space<vmem>>, %arg5: memref<7x3x3xf32, #tpu.memory_space<vmem>>, %arg6: memref<1x3x1xf32, #tpu.memory_space<vmem>>, %arg7: memref<26x2xf32, #tpu.memory_space<vmem>>, %arg8: memref<1x1x2xf32, #tpu.memory_space<vmem>>, %arg9: memref<2x640xf32, #tpu.memory_space<vmem>>, %arg10: memref<2x160x640xf32, #tpu.memory_space<vmem>>, %arg11: memref<160x640xf32, #tpu.memory_space<vmem>>, %arg12: memref<2x640xf32, #tpu.memory_space<vmem>>, %arg13: memref<320x1xf32, #tpu.memory_space<vmem>>, %arg14: memref<1x1xf32, #tpu.memory_space<vmem>>, %arg15: memref<2x1xf32, #tpu.memory_space<vmem>>) attributes {dimension_semantics = [], scalar_prefetch = 0 : i64, scratch_operands = 0 : i64, tpu.core_type = #tpu.core_type<tc>} {
    %c0 = arith.constant 0 : index
    %c0_0 = arith.constant 0 : index
    %c0_1 = arith.constant 0 : index
    %0 = vector.load %arg0[%c0, %c0_0, %c0_1] : memref<2x3x7xf32, #tpu.memory_space<vmem>>, vector<2x3x7xf32>
    %c0_2 = arith.constant 0 : index
    %c0_3 = arith.constant 0 : index
    %c0_4 = arith.constant 0 : index
    %c0_5 = arith.constant 0 : index
    %1 = vector.load %arg1[%c0_2, %c0_3, %c0_4, %c0_5] : memref<2x2x3x3xf32, #tpu.memory_space<vmem>>, vector<1x2x3x3xf32>
    %2 = vector.shape_cast %1 : vector<1x2x3x3xf32> to vector<2x3x3xf32>
    %c0_6 = arith.constant 0 : index
    %c0_7 = arith.constant 0 : index
    %c0_8 = arith.constant 0 : index
    %c0_9 = arith.constant 0 : index
    %3 = vector.load %arg2[%c0_6, %c0_7, %c0_8, %c0_9] : memref<2x1x3x1xf32, #tpu.memory_space<vmem>>, vector<1x1x3x1xf32>
    %4 = vector.shape_cast %3 : vector<1x1x3x1xf32> to vector<1x3x1xf32>
    %cst = arith.constant 0.000000e+00 : f32
    %5 = vector.broadcast %cst : f32 to vector<2x3x2xf32>
    %6 = tpu.concatenate %5, %0, %5 in 2 : vector<2x3x2xf32>, vector<2x3x7xf32>, vector<2x3x2xf32> -> vector<2x3x11xf32>
    %7 = vector.shape_cast %2 : vector<2x3x3xf32> to vector<2x1x3x3xf32>
    %8 = vector.shape_cast %7 : vector<2x1x3x3xf32> to vector<2x1x3x3xf32>
    %9 = vector.broadcast %8 : vector<2x1x3x3xf32> to vector<2x2x3x3xf32>
    %10 = vector.shape_cast %4 : vector<1x3x1xf32> to vector<1x3x1xf32>
    %11 = vector.broadcast %10 : vector<1x3x1xf32> to vector<2x3x9xf32>
    %12 = vector.extract_strided_slice %9 {offsets = [0, 0, 0, 0], sizes = [1, 2, 3, 3], strides = [1, 1, 1, 1]} : vector<2x2x3x3xf32> to vector<1x2x3x3xf32>
    %13 = vector.shape_cast %12 : vector<1x2x3x3xf32> to vector<2x3x3xf32>
    %14 = vector.extract_strided_slice %6 {offsets = [0, 0, 0], sizes = [2, 3, 9], strides = [1, 1, 1]} : vector<2x3x11xf32> to vector<2x3x9xf32>
    "tpu.trace_start"() <{level = 10 : i32, message = "boc,bcl->bol"}> : () -> ()
    %cst_10 = arith.constant dense<0.000000e+00> : vector<2x3x9xf32>
    %15 = tpu.matmul %13, %14, %cst_10 {dimension_numbers = #tpu.dot_dimension_numbers<[2], [1], [1], [2], [0, 0, 0, 1, 1, 2], [0], [0]>} : vector<2x3x3xf32>, vector<2x3x9xf32>, vector<2x3x9xf32> -> vector<2x3x9xf32>
    "tpu.trace_stop"() : () -> ()
    %16 = arith.addf %11, %15 : vector<2x3x9xf32>
    %17 = vector.extract_strided_slice %9 {offsets = [1, 0, 0, 0], sizes = [1, 2, 3, 3], strides = [1, 1, 1, 1]} : vector<2x2x3x3xf32> to vector<1x2x3x3xf32>
    %18 = vector.shape_cast %17 : vector<1x2x3x3xf32> to vector<2x3x3xf32>
    %19 = vector.extract_strided_slice %6 {offsets = [0, 0, 2], sizes = [2, 3, 9], strides = [1, 1, 1]} : vector<2x3x11xf32> to vector<2x3x9xf32>
    "tpu.trace_start"() <{level = 10 : i32, message = "boc,bcl->bol"}> : () -> ()
    %cst_11 = arith.constant dense<0.000000e+00> : vector<2x3x9xf32>
    %20 = tpu.matmul %18, %19, %cst_11 {dimension_numbers = #tpu.dot_dimension_numbers<[2], [1], [1], [2], [0, 0, 0, 1, 1, 2], [0], [0]>} : vector<2x3x3xf32>, vector<2x3x9xf32>, vector<2x3x9xf32> -> vector<2x3x9xf32>
    "tpu.trace_stop"() : () -> ()
    %21 = arith.addf %16, %20 : vector<2x3x9xf32>
    %c1 = arith.constant 1 : index
    %c0_12 = arith.constant 0 : index
    %c0_13 = arith.constant 0 : index
    %c0_14 = arith.constant 0 : index
    %22 = vector.load %arg1[%c1, %c0_12, %c0_13, %c0_14] : memref<2x2x3x3xf32, #tpu.memory_space<vmem>>, vector<1x2x3x3xf32>
    %23 = vector.shape_cast %22 : vector<1x2x3x3xf32> to vector<2x3x3xf32>
    %c1_15 = arith.constant 1 : index
    %c0_16 = arith.constant 0 : index
    %c0_17 = arith.constant 0 : index
    %c0_18 = arith.constant 0 : index
    %24 = vector.load %arg2[%c1_15, %c0_16, %c0_17, %c0_18] : memref<2x1x3x1xf32, #tpu.memory_space<vmem>>, vector<1x1x3x1xf32>
    %25 = vector.shape_cast %24 : vector<1x1x3x1xf32> to vector<1x3x1xf32>
    %cst_19 = arith.constant 0.000000e+00 : f32
    %26 = vector.broadcast %cst_19 : f32 to vector<2x3x2xf32>
    %27 = tpu.concatenate %26, %21, %26 in 2 : vector<2x3x2xf32>, vector<2x3x9xf32>, vector<2x3x2xf32> -> vector<2x3x13xf32>
    %28 = vector.shape_cast %23 : vector<2x3x3xf32> to vector<2x1x3x3xf32>
    %29 = vector.shape_cast %28 : vector<2x1x3x3xf32> to vector<2x1x3x3xf32>
    %30 = vector.broadcast %29 : vector<2x1x3x3xf32> to vector<2x2x3x3xf32>
    %31 = vector.shape_cast %25 : vector<1x3x1xf32> to vector<1x3x1xf32>
    %32 = vector.broadcast %31 : vector<1x3x1xf32> to vector<2x3x11xf32>
    %33 = vector.extract_strided_slice %30 {offsets = [0, 0, 0, 0], sizes = [1, 2, 3, 3], strides = [1, 1, 1, 1]} : vector<2x2x3x3xf32> to vector<1x2x3x3xf32>
    %34 = vector.shape_cast %33 : vector<1x2x3x3xf32> to vector<2x3x3xf32>
    %35 = vector.extract_strided_slice %27 {offsets = [0, 0, 0], sizes = [2, 3, 11], strides = [1, 1, 1]} : vector<2x3x13xf32> to vector<2x3x11xf32>
    "tpu.trace_start"() <{level = 10 : i32, message = "boc,bcl->bol"}> : () -> ()
    %cst_20 = arith.constant dense<0.000000e+00> : vector<2x3x11xf32>
    %36 = tpu.matmul %34, %35, %cst_20 {dimension_numbers = #tpu.dot_dimension_numbers<[2], [1], [1], [2], [0, 0, 0, 1, 1, 2], [0], [0]>} : vector<2x3x3xf32>, vector<2x3x11xf32>, vector<2x3x11xf32> -> vector<2x3x11xf32>
    "tpu.trace_stop"() : () -> ()
    %37 = arith.addf %32, %36 : vector<2x3x11xf32>
    %38 = vector.extract_strided_slice %30 {offsets = [1, 0, 0, 0], sizes = [1, 2, 3, 3], strides = [1, 1, 1, 1]} : vector<2x2x3x3xf32> to vector<1x2x3x3xf32>
    %39 = vector.shape_cast %38 : vector<1x2x3x3xf32> to vector<2x3x3xf32>
    %40 = vector.extract_strided_slice %27 {offsets = [0, 0, 2], sizes = [2, 3, 11], strides = [1, 1, 1]} : vector<2x3x13xf32> to vector<2x3x11xf32>
    "tpu.trace_start"() <{level = 10 : i32, message = "boc,bcl->bol"}> : () -> ()
    %cst_21 = arith.constant dense<0.000000e+00> : vector<2x3x11xf32>
    %41 = tpu.matmul %39, %40, %cst_21 {dimension_numbers = #tpu.dot_dimension_numbers<[2], [1], [1], [2], [0, 0, 0, 1, 1, 2], [0], [0]>} : vector<2x3x3xf32>, vector<2x3x11xf32>, vector<2x3x11xf32> -> vector<2x3x11xf32>
    "tpu.trace_stop"() : () -> ()
    %42 = arith.addf %37, %41 : vector<2x3x11xf32>
    %c0_22 = arith.constant 0 : index
    %c0_23 = arith.constant 0 : index
    %c0_24 = arith.constant 0 : index
    %43 = vector.load %arg3[%c0_22, %c0_23, %c0_24] : memref<3x3x3xf32, #tpu.memory_space<vmem>>, vector<3x3x3xf32>
    %c0_25 = arith.constant 0 : index
    %c0_26 = arith.constant 0 : index
    %c0_27 = arith.constant 0 : index
    %44 = vector.load %arg4[%c0_25, %c0_26, %c0_27] : memref<1x3x1xf32, #tpu.memory_space<vmem>>, vector<1x3x1xf32>
    %45 = vector.shape_cast %43 : vector<3x3x3xf32> to vector<3x1x3x3xf32>
    %46 = vector.shape_cast %45 : vector<3x1x3x3xf32> to vector<3x1x3x3xf32>
    %47 = vector.broadcast %46 : vector<3x1x3x3xf32> to vector<3x2x3x3xf32>
    %48 = vector.shape_cast %44 : vector<1x3x1xf32> to vector<1x3x1xf32>
    %49 = vector.broadcast %48 : vector<1x3x1xf32> to vector<2x3x5xf32>
    %50 = vector.extract_strided_slice %47 {offsets = [0, 0, 0, 0], sizes = [1, 2, 3, 3], strides = [1, 1, 1, 1]} : vector<3x2x3x3xf32> to vector<1x2x3x3xf32>
    %51 = vector.shape_cast %50 : vector<1x2x3x3xf32> to vector<2x3x3xf32>
    %52 = vector.extract_strided_slice %0 {offsets = [0, 0, 0], sizes = [2, 3, 5], strides = [1, 1, 1]} : vector<2x3x7xf32> to vector<2x3x5xf32>
    "tpu.trace_start"() <{level = 10 : i32, message = "boc,bcl->bol"}> : () -> ()
    %cst_28 = arith.constant dense<0.000000e+00> : vector<2x3x5xf32>
    %53 = tpu.matmul %51, %52, %cst_28 {dimension_numbers = #tpu.dot_dimension_numbers<[2], [1], [1], [2], [0, 0, 0, 1, 1, 2], [0], [0]>} : vector<2x3x3xf32>, vector<2x3x5xf32>, vector<2x3x5xf32> -> vector<2x3x5xf32>
    "tpu.trace_stop"() : () -> ()
    %54 = arith.addf %49, %53 : vector<2x3x5xf32>
    %55 = vector.extract_strided_slice %47 {offsets = [1, 0, 0, 0], sizes = [1, 2, 3, 3], strides = [1, 1, 1, 1]} : vector<3x2x3x3xf32> to vector<1x2x3x3xf32>
    %56 = vector.shape_cast %55 : vector<1x2x3x3xf32> to vector<2x3x3xf32>
    %57 = vector.extract_strided_slice %0 {offsets = [0, 0, 1], sizes = [2, 3, 5], strides = [1, 1, 1]} : vector<2x3x7xf32> to vector<2x3x5xf32>
    "tpu.trace_start"() <{level = 10 : i32, message = "boc,bcl->bol"}> : () -> ()
    %cst_29 = arith.constant dense<0.000000e+00> : vector<2x3x5xf32>
    %58 = tpu.matmul %56, %57, %cst_29 {dimension_numbers = #tpu.dot_dimension_numbers<[2], [1], [1], [2], [0, 0, 0, 1, 1, 2], [0], [0]>} : vector<2x3x3xf32>, vector<2x3x5xf32>, vector<2x3x5xf32> -> vector<2x3x5xf32>
    "tpu.trace_stop"() : () -> ()
    %59 = arith.addf %54, %58 : vector<2x3x5xf32>
    %60 = vector.extract_strided_slice %47 {offsets = [2, 0, 0, 0], sizes = [1, 2, 3, 3], strides = [1, 1, 1, 1]} : vector<3x2x3x3xf32> to vector<1x2x3x3xf32>
    %61 = vector.shape_cast %60 : vector<1x2x3x3xf32> to vector<2x3x3xf32>
    %62 = vector.extract_strided_slice %0 {offsets = [0, 0, 2], sizes = [2, 3, 5], strides = [1, 1, 1]} : vector<2x3x7xf32> to vector<2x3x5xf32>
    "tpu.trace_start"() <{level = 10 : i32, message = "boc,bcl->bol"}> : () -> ()
    %cst_30 = arith.constant dense<0.000000e+00> : vector<2x3x5xf32>
    %63 = tpu.matmul %61, %62, %cst_30 {dimension_numbers = #tpu.dot_dimension_numbers<[2], [1], [1], [2], [0, 0, 0, 1, 1, 2], [0], [0]>} : vector<2x3x3xf32>, vector<2x3x5xf32>, vector<2x3x5xf32> -> vector<2x3x5xf32>
    "tpu.trace_stop"() : () -> ()
    %64 = arith.addf %59, %63 : vector<2x3x5xf32>
    %c0_31 = arith.constant 0 : index
    %c0_32 = arith.constant 0 : index
    %c0_33 = arith.constant 0 : index
    %65 = vector.load %arg5[%c0_31, %c0_32, %c0_33] : memref<7x3x3xf32, #tpu.memory_space<vmem>>, vector<7x3x3xf32>
    %c0_34 = arith.constant 0 : index
    %c0_35 = arith.constant 0 : index
    %c0_36 = arith.constant 0 : index
    %66 = vector.load %arg6[%c0_34, %c0_35, %c0_36] : memref<1x3x1xf32, #tpu.memory_space<vmem>>, vector<1x3x1xf32>
    %cst_37 = arith.constant 0.000000e+00 : f32
    %67 = vector.broadcast %cst_37 : f32 to vector<2x3x6xf32>
    %68 = tpu.concatenate %67, %0, %67 in 2 : vector<2x3x6xf32>, vector<2x3x7xf32>, vector<2x3x6xf32> -> vector<2x3x19xf32>
    %69 = vector.shape_cast %65 : vector<7x3x3xf32> to vector<7x1x3x3xf32>
    %70 = vector.shape_cast %69 : vector<7x1x3x3xf32> to vector<7x1x3x3xf32>
    %71 = vector.broadcast %70 : vector<7x1x3x3xf32> to vector<7x2x3x3xf32>
    %72 = vector.shape_cast %66 : vector<1x3x1xf32> to vector<1x3x1xf32>
    %73 = vector.broadcast %72 : vector<1x3x1xf32> to vector<2x3x13xf32>
    %74 = vector.extract_strided_slice %71 {offsets = [0, 0, 0, 0], sizes = [1, 2, 3, 3], strides = [1, 1, 1, 1]} : vector<7x2x3x3xf32> to vector<1x2x3x3xf32>
    %75 = vector.shape_cast %74 : vector<1x2x3x3xf32> to vector<2x3x3xf32>
    %76 = vector.extract_strided_slice %68 {offsets = [0, 0, 0], sizes = [2, 3, 13], strides = [1, 1, 1]} : vector<2x3x19xf32> to vector<2x3x13xf32>
    "tpu.trace_start"() <{level = 10 : i32, message = "boc,bcl->bol"}> : () -> ()
    %cst_38 = arith.constant dense<0.000000e+00> : vector<2x3x13xf32>
    %77 = tpu.matmul %75, %76, %cst_38 {dimension_numbers = #tpu.dot_dimension_numbers<[2], [1], [1], [2], [0, 0, 0, 1, 1, 2], [0], [0]>} : vector<2x3x3xf32>, vector<2x3x13xf32>, vector<2x3x13xf32> -> vector<2x3x13xf32>
    "tpu.trace_stop"() : () -> ()
    %78 = arith.addf %73, %77 : vector<2x3x13xf32>
    %79 = vector.extract_strided_slice %71 {offsets = [1, 0, 0, 0], sizes = [1, 2, 3, 3], strides = [1, 1, 1, 1]} : vector<7x2x3x3xf32> to vector<1x2x3x3xf32>
    %80 = vector.shape_cast %79 : vector<1x2x3x3xf32> to vector<2x3x3xf32>
    %81 = vector.extract_strided_slice %68 {offsets = [0, 0, 1], sizes = [2, 3, 13], strides = [1, 1, 1]} : vector<2x3x19xf32> to vector<2x3x13xf32>
    "tpu.trace_start"() <{level = 10 : i32, message = "boc,bcl->bol"}> : () -> ()
    %cst_39 = arith.constant dense<0.000000e+00> : vector<2x3x13xf32>
    %82 = tpu.matmul %80, %81, %cst_39 {dimension_numbers = #tpu.dot_dimension_numbers<[2], [1], [1], [2], [0, 0, 0, 1, 1, 2], [0], [0]>} : vector<2x3x3xf32>, vector<2x3x13xf32>, vector<2x3x13xf32> -> vector<2x3x13xf32>
    "tpu.trace_stop"() : () -> ()
    %83 = arith.addf %78, %82 : vector<2x3x13xf32>
    %84 = vector.extract_strided_slice %71 {offsets = [2, 0, 0, 0], sizes = [1, 2, 3, 3], strides = [1, 1, 1, 1]} : vector<7x2x3x3xf32> to vector<1x2x3x3xf32>
    %85 = vector.shape_cast %84 : vector<1x2x3x3xf32> to vector<2x3x3xf32>
    %86 = vector.extract_strided_slice %68 {offsets = [0, 0, 2], sizes = [2, 3, 13], strides = [1, 1, 1]} : vector<2x3x19xf32> to vector<2x3x13xf32>
    "tpu.trace_start"() <{level = 10 : i32, message = "boc,bcl->bol"}> : () -> ()
    %cst_40 = arith.constant dense<0.000000e+00> : vector<2x3x13xf32>
    %87 = tpu.matmul %85, %86, %cst_40 {dimension_numbers = #tpu.dot_dimension_numbers<[2], [1], [1], [2], [0, 0, 0, 1, 1, 2], [0], [0]>} : vector<2x3x3xf32>, vector<2x3x13xf32>, vector<2x3x13xf32> -> vector<2x3x13xf32>
    "tpu.trace_stop"() : () -> ()
    %88 = arith.addf %83, %87 : vector<2x3x13xf32>
    %89 = vector.extract_strided_slice %71 {offsets = [3, 0, 0, 0], sizes = [1, 2, 3, 3], strides = [1, 1, 1, 1]} : vector<7x2x3x3xf32> to vector<1x2x3x3xf32>
    %90 = vector.shape_cast %89 : vector<1x2x3x3xf32> to vector<2x3x3xf32>
    %91 = vector.extract_strided_slice %68 {offsets = [0, 0, 3], sizes = [2, 3, 13], strides = [1, 1, 1]} : vector<2x3x19xf32> to vector<2x3x13xf32>
    "tpu.trace_start"() <{level = 10 : i32, message = "boc,bcl->bol"}> : () -> ()
    %cst_41 = arith.constant dense<0.000000e+00> : vector<2x3x13xf32>
    %92 = tpu.matmul %90, %91, %cst_41 {dimension_numbers = #tpu.dot_dimension_numbers<[2], [1], [1], [2], [0, 0, 0, 1, 1, 2], [0], [0]>} : vector<2x3x3xf32>, vector<2x3x13xf32>, vector<2x3x13xf32> -> vector<2x3x13xf32>
    "tpu.trace_stop"() : () -> ()
    %93 = arith.addf %88, %92 : vector<2x3x13xf32>
    %94 = vector.extract_strided_slice %71 {offsets = [4, 0, 0, 0], sizes = [1, 2, 3, 3], strides = [1, 1, 1, 1]} : vector<7x2x3x3xf32> to vector<1x2x3x3xf32>
    %95 = vector.shape_cast %94 : vector<1x2x3x3xf32> to vector<2x3x3xf32>
    %96 = vector.extract_strided_slice %68 {offsets = [0, 0, 4], sizes = [2, 3, 13], strides = [1, 1, 1]} : vector<2x3x19xf32> to vector<2x3x13xf32>
    "tpu.trace_start"() <{level = 10 : i32, message = "boc,bcl->bol"}> : () -> ()
    %cst_42 = arith.constant dense<0.000000e+00> : vector<2x3x13xf32>
    %97 = tpu.matmul %95, %96, %cst_42 {dimension_numbers = #tpu.dot_dimension_numbers<[2], [1], [1], [2], [0, 0, 0, 1, 1, 2], [0], [0]>} : vector<2x3x3xf32>, vector<2x3x13xf32>, vector<2x3x13xf32> -> vector<2x3x13xf32>
    "tpu.trace_stop"() : () -> ()
    %98 = arith.addf %93, %97 : vector<2x3x13xf32>
    %99 = vector.extract_strided_slice %71 {offsets = [5, 0, 0, 0], sizes = [1, 2, 3, 3], strides = [1, 1, 1, 1]} : vector<7x2x3x3xf32> to vector<1x2x3x3xf32>
    %100 = vector.shape_cast %99 : vector<1x2x3x3xf32> to vector<2x3x3xf32>
    %101 = vector.extract_strided_slice %68 {offsets = [0, 0, 5], sizes = [2, 3, 13], strides = [1, 1, 1]} : vector<2x3x19xf32> to vector<2x3x13xf32>
    "tpu.trace_start"() <{level = 10 : i32, message = "boc,bcl->bol"}> : () -> ()
    %cst_43 = arith.constant dense<0.000000e+00> : vector<2x3x13xf32>
    %102 = tpu.matmul %100, %101, %cst_43 {dimension_numbers = #tpu.dot_dimension_numbers<[2], [1], [1], [2], [0, 0, 0, 1, 1, 2], [0], [0]>} : vector<2x3x3xf32>, vector<2x3x13xf32>, vector<2x3x13xf32> -> vector<2x3x13xf32>
    "tpu.trace_stop"() : () -> ()
    %103 = arith.addf %98, %102 : vector<2x3x13xf32>
    %104 = vector.extract_strided_slice %71 {offsets = [6, 0, 0, 0], sizes = [1, 2, 3, 3], strides = [1, 1, 1, 1]} : vector<7x2x3x3xf32> to vector<1x2x3x3xf32>
    %105 = vector.shape_cast %104 : vector<1x2x3x3xf32> to vector<2x3x3xf32>
    %106 = vector.extract_strided_slice %68 {offsets = [0, 0, 6], sizes = [2, 3, 13], strides = [1, 1, 1]} : vector<2x3x19xf32> to vector<2x3x13xf32>
    "tpu.trace_start"() <{level = 10 : i32, message = "boc,bcl->bol"}> : () -> ()
    %cst_44 = arith.constant dense<0.000000e+00> : vector<2x3x13xf32>
    %107 = tpu.matmul %105, %106, %cst_44 {dimension_numbers = #tpu.dot_dimension_numbers<[2], [1], [1], [2], [0, 0, 0, 1, 1, 2], [0], [0]>} : vector<2x3x3xf32>, vector<2x3x13xf32>, vector<2x3x13xf32> -> vector<2x3x13xf32>
    "tpu.trace_stop"() : () -> ()
    %108 = arith.addf %103, %107 : vector<2x3x13xf32>
    %c0_45 = arith.constant 0 : index
    %c0_46 = arith.constant 0 : index
    %109 = vector.load %arg7[%c0_45, %c0_46] : memref<26x2xf32, #tpu.memory_space<vmem>>, vector<26x2xf32>
    %110 = vector.extract_strided_slice %109 {offsets = [0, 0], sizes = [10, 2], strides = [1, 1]} : vector<26x2xf32> to vector<10x2xf32>
    %111 = vector.extract_strided_slice %42 {offsets = [0, 0, 0], sizes = [2, 3, 10], strides = [1, 1, 1]} : vector<2x3x11xf32> to vector<2x3x10xf32>
    %112 = vector.extract_strided_slice %42 {offsets = [0, 0, 1], sizes = [2, 3, 10], strides = [1, 1, 1]} : vector<2x3x11xf32> to vector<2x3x10xf32>
    %113 = arith.maximumf %111, %112 : vector<2x3x10xf32>
    %114 = vector.shape_cast %110 : vector<10x2xf32> to vector<1x10x2xf32>
    %115 = vector.shape_cast %114 : vector<1x10x2xf32> to vector<1x10x2xf32>
    %116 = vector.broadcast %115 : vector<1x10x2xf32> to vector<2x10x2xf32>
    "tpu.trace_start"() <{level = 10 : i32, message = "bcl,bld->bcd"}> : () -> ()
    %cst_47 = arith.constant dense<0.000000e+00> : vector<2x3x2xf32>
    %117 = tpu.matmul %113, %116, %cst_47 {dimension_numbers = #tpu.dot_dimension_numbers<[2], [1], [1], [2], [0, 0, 0, 1, 1, 2], [0], [0]>} : vector<2x3x10xf32>, vector<2x10x2xf32>, vector<2x3x2xf32> -> vector<2x3x2xf32>
    "tpu.trace_stop"() : () -> ()
    %118 = vector.extract_strided_slice %109 {offsets = [10, 0], sizes = [4, 2], strides = [1, 1]} : vector<26x2xf32> to vector<4x2xf32>
    %119 = vector.extract_strided_slice %64 {offsets = [0, 0, 0], sizes = [2, 3, 4], strides = [1, 1, 1]} : vector<2x3x5xf32> to vector<2x3x4xf32>
    %120 = vector.extract_strided_slice %64 {offsets = [0, 0, 1], sizes = [2, 3, 4], strides = [1, 1, 1]} : vector<2x3x5xf32> to vector<2x3x4xf32>
    %121 = arith.maximumf %119, %120 : vector<2x3x4xf32>
    %122 = vector.shape_cast %118 : vector<4x2xf32> to vector<1x4x2xf32>
    %123 = vector.shape_cast %122 : vector<1x4x2xf32> to vector<1x4x2xf32>
    %124 = vector.broadcast %123 : vector<1x4x2xf32> to vector<2x4x2xf32>
    "tpu.trace_start"() <{level = 10 : i32, message = "bcl,bld->bcd"}> : () -> ()
    %cst_48 = arith.constant dense<0.000000e+00> : vector<2x3x2xf32>
    %125 = tpu.matmul %121, %124, %cst_48 {dimension_numbers = #tpu.dot_dimension_numbers<[2], [1], [1], [2], [0, 0, 0, 1, 1, 2], [0], [0]>} : vector<2x3x4xf32>, vector<2x4x2xf32>, vector<2x3x2xf32> -> vector<2x3x2xf32>
    "tpu.trace_stop"() : () -> ()
    %126 = arith.addf %117, %125 : vector<2x3x2xf32>
    %127 = vector.extract_strided_slice %109 {offsets = [14, 0], sizes = [12, 2], strides = [1, 1]} : vector<26x2xf32> to vector<12x2xf32>
    %128 = vector.extract_strided_slice %108 {offsets = [0, 0, 0], sizes = [2, 3, 12], strides = [1, 1, 1]} : vector<2x3x13xf32> to vector<2x3x12xf32>
    %129 = vector.extract_strided_slice %108 {offsets = [0, 0, 1], sizes = [2, 3, 12], strides = [1, 1, 1]} : vector<2x3x13xf32> to vector<2x3x12xf32>
    %130 = arith.maximumf %128, %129 : vector<2x3x12xf32>
    %131 = vector.shape_cast %127 : vector<12x2xf32> to vector<1x12x2xf32>
    %132 = vector.shape_cast %131 : vector<1x12x2xf32> to vector<1x12x2xf32>
    %133 = vector.broadcast %132 : vector<1x12x2xf32> to vector<2x12x2xf32>
    "tpu.trace_start"() <{level = 10 : i32, message = "bcl,bld->bcd"}> : () -> ()
    %cst_49 = arith.constant dense<0.000000e+00> : vector<2x3x2xf32>
    %134 = tpu.matmul %130, %133, %cst_49 {dimension_numbers = #tpu.dot_dimension_numbers<[2], [1], [1], [2], [0, 0, 0, 1, 1, 2], [0], [0]>} : vector<2x3x12xf32>, vector<2x12x2xf32>, vector<2x3x2xf32> -> vector<2x3x2xf32>
    "tpu.trace_stop"() : () -> ()
    %135 = arith.addf %126, %134 : vector<2x3x2xf32>
    %c0_50 = arith.constant 0 : index
    %c0_51 = arith.constant 0 : index
    %c0_52 = arith.constant 0 : index
    %136 = vector.load %arg8[%c0_50, %c0_51, %c0_52] : memref<1x1x2xf32, #tpu.memory_space<vmem>>, vector<1x1x2xf32>
    %137 = vector.broadcast %136 : vector<1x1x2xf32> to vector<2x3x2xf32>
    %138 = arith.addf %135, %137 : vector<2x3x2xf32>
    %cst_53 = arith.constant 0.000000e+00 : f32
    %139 = vector.broadcast %cst_53 : f32 to vector<2x3x2xf32>
    %140 = arith.maximumf %138, %139 : vector<2x3x2xf32>
    %c0_54 = arith.constant 0 : index
    %c0_55 = arith.constant 0 : index
    %141 = vector.load %arg9[%c0_54, %c0_55] : memref<2x640xf32, #tpu.memory_space<vmem>>, vector<2x640xf32>
    %c0_56 = arith.constant 0 : index
    %c0_57 = arith.constant 0 : index
    %142 = vector.load %arg11[%c0_56, %c0_57] : memref<160x640xf32, #tpu.memory_space<vmem>>, vector<160x640xf32>
    %c0_58 = arith.constant 0 : index
    %c0_59 = arith.constant 0 : index
    %c0_60 = arith.constant 0 : index
    %143 = vector.load %arg10[%c0_58, %c0_59, %c0_60] : memref<2x160x640xf32, #tpu.memory_space<vmem>>, vector<1x160x640xf32>
    %144 = vector.shape_cast %143 : vector<1x160x640xf32> to vector<160x640xf32>
    %c1_61 = arith.constant 1 : index
    %c0_62 = arith.constant 0 : index
    %c0_63 = arith.constant 0 : index
    %145 = vector.load %arg10[%c1_61, %c0_62, %c0_63] : memref<2x160x640xf32, #tpu.memory_space<vmem>>, vector<1x160x640xf32>
    %146 = vector.shape_cast %145 : vector<1x160x640xf32> to vector<160x640xf32>
    %c0_64 = arith.constant 0 : index
    %c0_65 = arith.constant 0 : index
    %147 = vector.load %arg12[%c0_64, %c0_65] : memref<2x640xf32, #tpu.memory_space<vmem>>, vector<1x640xf32>
    %c1_66 = arith.constant 1 : index
    %c0_67 = arith.constant 0 : index
    %148 = vector.load %arg12[%c1_66, %c0_67] : memref<2x640xf32, #tpu.memory_space<vmem>>, vector<1x640xf32>
    %149 = vector.extract_strided_slice %140 {offsets = [0, 0, 0], sizes = [2, 1, 2], strides = [1, 1, 1]} : vector<2x3x2xf32> to vector<2x1x2xf32>
    %150 = vector.shape_cast %149 : vector<2x1x2xf32> to vector<2x2xf32>
    %cst_68 = arith.constant dense<0.000000e+00> : vector<2x640xf32>
    %151 = tpu.matmul %150, %141, %cst_68 {dimension_numbers = #tpu.dot_dimension_numbers<[1], [0], [0], [1], [0, 0, 1, 1], [], []>} : vector<2x2xf32>, vector<2x640xf32>, vector<2x640xf32> -> vector<2x640xf32>
    %152 = vector.broadcast %147 : vector<1x640xf32> to vector<2x640xf32>
    %153 = arith.addf %151, %152 : vector<2x640xf32>
    %154 = vector.extract_strided_slice %140 {offsets = [0, 1, 0], sizes = [2, 1, 2], strides = [1, 1, 1]} : vector<2x3x2xf32> to vector<2x1x2xf32>
    %155 = vector.shape_cast %154 : vector<2x1x2xf32> to vector<2x2xf32>
    %cst_69 = arith.constant dense<0.000000e+00> : vector<2x640xf32>
    %156 = tpu.matmul %155, %141, %cst_69 {dimension_numbers = #tpu.dot_dimension_numbers<[1], [0], [0], [1], [0, 0, 1, 1], [], []>} : vector<2x2xf32>, vector<2x640xf32>, vector<2x640xf32> -> vector<2x640xf32>
    %157 = vector.broadcast %147 : vector<1x640xf32> to vector<2x640xf32>
    %158 = arith.addf %156, %157 : vector<2x640xf32>
    %159 = vector.extract_strided_slice %140 {offsets = [0, 2, 0], sizes = [2, 1, 2], strides = [1, 1, 1]} : vector<2x3x2xf32> to vector<2x1x2xf32>
    %160 = vector.shape_cast %159 : vector<2x1x2xf32> to vector<2x2xf32>
    %cst_70 = arith.constant dense<0.000000e+00> : vector<2x640xf32>
    %161 = tpu.matmul %160, %141, %cst_70 {dimension_numbers = #tpu.dot_dimension_numbers<[1], [0], [0], [1], [0, 0, 1, 1], [], []>} : vector<2x2xf32>, vector<2x640xf32>, vector<2x640xf32> -> vector<2x640xf32>
    %162 = vector.broadcast %147 : vector<1x640xf32> to vector<2x640xf32>
    %163 = arith.addf %161, %162 : vector<2x640xf32>
    %cst_71 = arith.constant 0.000000e+00 : f32
    %164 = vector.broadcast %cst_71 : f32 to vector<2x160xf32>
    %165 = vector.extract_strided_slice %153 {offsets = [0, 0], sizes = [2, 160], strides = [1, 1]} : vector<2x640xf32> to vector<2x160xf32>
    %166 = arith.negf %165 : vector<2x160xf32>
    %167 = math.exp %166 : vector<2x160xf32>
    %cst_72 = arith.constant 1.000000e+00 : f32
    %168 = vector.broadcast %cst_72 : f32 to vector<2x160xf32>
    %169 = arith.addf %168, %167 : vector<2x160xf32>
    %170 = arith.divf %168, %169 : vector<2x160xf32>
    %171 = vector.extract_strided_slice %153 {offsets = [0, 160], sizes = [2, 160], strides = [1, 1]} : vector<2x640xf32> to vector<2x160xf32>
    %172 = arith.negf %171 : vector<2x160xf32>
    %173 = math.exp %172 : vector<2x160xf32>
    %cst_73 = arith.constant 1.000000e+00 : f32
    %174 = vector.broadcast %cst_73 : f32 to vector<2x160xf32>
    %175 = arith.addf %174, %173 : vector<2x160xf32>
    %176 = arith.divf %174, %175 : vector<2x160xf32>
    %177 = vector.extract_strided_slice %153 {offsets = [0, 320], sizes = [2, 160], strides = [1, 1]} : vector<2x640xf32> to vector<2x160xf32>
    %178 = math.tanh %177 : vector<2x160xf32>
    %179 = vector.extract_strided_slice %153 {offsets = [0, 480], sizes = [2, 160], strides = [1, 1]} : vector<2x640xf32> to vector<2x160xf32>
    %180 = arith.negf %179 : vector<2x160xf32>
    %181 = math.exp %180 : vector<2x160xf32>
    %cst_74 = arith.constant 1.000000e+00 : f32
    %182 = vector.broadcast %cst_74 : f32 to vector<2x160xf32>
    %183 = arith.addf %182, %181 : vector<2x160xf32>
    %184 = arith.divf %182, %183 : vector<2x160xf32>
    %185 = arith.mulf %176, %164 : vector<2x160xf32>
    %186 = arith.mulf %170, %178 : vector<2x160xf32>
    %187 = arith.addf %185, %186 : vector<2x160xf32>
    %188 = math.tanh %187 : vector<2x160xf32>
    %189 = arith.mulf %184, %188 : vector<2x160xf32>
    %cst_75 = arith.constant dense<0.000000e+00> : vector<2x640xf32>
    %190 = tpu.matmul %189, %144, %cst_75 {dimension_numbers = #tpu.dot_dimension_numbers<[1], [0], [0], [1], [0, 0, 1, 1], [], []>} : vector<2x160xf32>, vector<160x640xf32>, vector<2x640xf32> -> vector<2x640xf32>
    %191 = arith.addf %158, %190 : vector<2x640xf32>
    %192 = vector.extract_strided_slice %191 {offsets = [0, 0], sizes = [2, 160], strides = [1, 1]} : vector<2x640xf32> to vector<2x160xf32>
    %193 = arith.negf %192 : vector<2x160xf32>
    %194 = math.exp %193 : vector<2x160xf32>
    %cst_76 = arith.constant 1.000000e+00 : f32
    %195 = vector.broadcast %cst_76 : f32 to vector<2x160xf32>
    %196 = arith.addf %195, %194 : vector<2x160xf32>
    %197 = arith.divf %195, %196 : vector<2x160xf32>
    %198 = vector.extract_strided_slice %191 {offsets = [0, 160], sizes = [2, 160], strides = [1, 1]} : vector<2x640xf32> to vector<2x160xf32>
    %199 = arith.negf %198 : vector<2x160xf32>
    %200 = math.exp %199 : vector<2x160xf32>
    %cst_77 = arith.constant 1.000000e+00 : f32
    %201 = vector.broadcast %cst_77 : f32 to vector<2x160xf32>
    %202 = arith.addf %201, %200 : vector<2x160xf32>
    %203 = arith.divf %201, %202 : vector<2x160xf32>
    %204 = vector.extract_strided_slice %191 {offsets = [0, 320], sizes = [2, 160], strides = [1, 1]} : vector<2x640xf32> to vector<2x160xf32>
    %205 = math.tanh %204 : vector<2x160xf32>
    %206 = vector.extract_strided_slice %191 {offsets = [0, 480], sizes = [2, 160], strides = [1, 1]} : vector<2x640xf32> to vector<2x160xf32>
    %207 = arith.negf %206 : vector<2x160xf32>
    %208 = math.exp %207 : vector<2x160xf32>
    %cst_78 = arith.constant 1.000000e+00 : f32
    %209 = vector.broadcast %cst_78 : f32 to vector<2x160xf32>
    %210 = arith.addf %209, %208 : vector<2x160xf32>
    %211 = arith.divf %209, %210 : vector<2x160xf32>
    %212 = arith.mulf %203, %187 : vector<2x160xf32>
    %213 = arith.mulf %197, %205 : vector<2x160xf32>
    %214 = arith.addf %212, %213 : vector<2x160xf32>
    %215 = math.tanh %214 : vector<2x160xf32>
    %216 = arith.mulf %211, %215 : vector<2x160xf32>
    %cst_79 = arith.constant dense<0.000000e+00> : vector<2x640xf32>
    %217 = tpu.matmul %216, %144, %cst_79 {dimension_numbers = #tpu.dot_dimension_numbers<[1], [0], [0], [1], [0, 0, 1, 1], [], []>} : vector<2x160xf32>, vector<160x640xf32>, vector<2x640xf32> -> vector<2x640xf32>
    %218 = arith.addf %163, %217 : vector<2x640xf32>
    %219 = vector.extract_strided_slice %218 {offsets = [0, 0], sizes = [2, 160], strides = [1, 1]} : vector<2x640xf32> to vector<2x160xf32>
    %220 = arith.negf %219 : vector<2x160xf32>
    %221 = math.exp %220 : vector<2x160xf32>
    %cst_80 = arith.constant 1.000000e+00 : f32
    %222 = vector.broadcast %cst_80 : f32 to vector<2x160xf32>
    %223 = arith.addf %222, %221 : vector<2x160xf32>
    %224 = arith.divf %222, %223 : vector<2x160xf32>
    %225 = vector.extract_strided_slice %218 {offsets = [0, 160], sizes = [2, 160], strides = [1, 1]} : vector<2x640xf32> to vector<2x160xf32>
    %226 = arith.negf %225 : vector<2x160xf32>
    %227 = math.exp %226 : vector<2x160xf32>
    %cst_81 = arith.constant 1.000000e+00 : f32
    %228 = vector.broadcast %cst_81 : f32 to vector<2x160xf32>
    %229 = arith.addf %228, %227 : vector<2x160xf32>
    %230 = arith.divf %228, %229 : vector<2x160xf32>
    %231 = vector.extract_strided_slice %218 {offsets = [0, 320], sizes = [2, 160], strides = [1, 1]} : vector<2x640xf32> to vector<2x160xf32>
    %232 = math.tanh %231 : vector<2x160xf32>
    %233 = vector.extract_strided_slice %218 {offsets = [0, 480], sizes = [2, 160], strides = [1, 1]} : vector<2x640xf32> to vector<2x160xf32>
    %234 = arith.negf %233 : vector<2x160xf32>
    %235 = math.exp %234 : vector<2x160xf32>
    %cst_82 = arith.constant 1.000000e+00 : f32
    %236 = vector.broadcast %cst_82 : f32 to vector<2x160xf32>
    %237 = arith.addf %236, %235 : vector<2x160xf32>
    %238 = arith.divf %236, %237 : vector<2x160xf32>
    %239 = arith.mulf %230, %214 : vector<2x160xf32>
    %240 = arith.mulf %224, %232 : vector<2x160xf32>
    %241 = arith.addf %239, %240 : vector<2x160xf32>
    %242 = math.tanh %241 : vector<2x160xf32>
    %243 = arith.mulf %238, %242 : vector<2x160xf32>
    %cst_83 = arith.constant dense<0.000000e+00> : vector<2x640xf32>
    %244 = tpu.matmul %189, %142, %cst_83 {dimension_numbers = #tpu.dot_dimension_numbers<[1], [0], [0], [1], [0, 0, 1, 1], [], []>} : vector<2x160xf32>, vector<160x640xf32>, vector<2x640xf32> -> vector<2x640xf32>
    %245 = vector.broadcast %148 : vector<1x640xf32> to vector<2x640xf32>
    %246 = arith.addf %244, %245 : vector<2x640xf32>
    %cst_84 = arith.constant dense<0.000000e+00> : vector<2x640xf32>
    %247 = tpu.matmul %216, %142, %cst_84 {dimension_numbers = #tpu.dot_dimension_numbers<[1], [0], [0], [1], [0, 0, 1, 1], [], []>} : vector<2x160xf32>, vector<160x640xf32>, vector<2x640xf32> -> vector<2x640xf32>
    %248 = vector.broadcast %148 : vector<1x640xf32> to vector<2x640xf32>
    %249 = arith.addf %247, %248 : vector<2x640xf32>
    %cst_85 = arith.constant dense<0.000000e+00> : vector<2x640xf32>
    %250 = tpu.matmul %243, %142, %cst_85 {dimension_numbers = #tpu.dot_dimension_numbers<[1], [0], [0], [1], [0, 0, 1, 1], [], []>} : vector<2x160xf32>, vector<160x640xf32>, vector<2x640xf32> -> vector<2x640xf32>
    %251 = vector.broadcast %148 : vector<1x640xf32> to vector<2x640xf32>
    %252 = arith.addf %250, %251 : vector<2x640xf32>
    %cst_86 = arith.constant 0.000000e+00 : f32
    %253 = vector.broadcast %cst_86 : f32 to vector<2x160xf32>
    %254 = vector.extract_strided_slice %246 {offsets = [0, 0], sizes = [2, 160], strides = [1, 1]} : vector<2x640xf32> to vector<2x160xf32>
    %255 = arith.negf %254 : vector<2x160xf32>
    %256 = math.exp %255 : vector<2x160xf32>
    %cst_87 = arith.constant 1.000000e+00 : f32
    %257 = vector.broadcast %cst_87 : f32 to vector<2x160xf32>
    %258 = arith.addf %257, %256 : vector<2x160xf32>
    %259 = arith.divf %257, %258 : vector<2x160xf32>
    %260 = vector.extract_strided_slice %246 {offsets = [0, 160], sizes = [2, 160], strides = [1, 1]} : vector<2x640xf32> to vector<2x160xf32>
    %261 = arith.negf %260 : vector<2x160xf32>
    %262 = math.exp %261 : vector<2x160xf32>
    %cst_88 = arith.constant 1.000000e+00 : f32
    %263 = vector.broadcast %cst_88 : f32 to vector<2x160xf32>
    %264 = arith.addf %263, %262 : vector<2x160xf32>
    %265 = arith.divf %263, %264 : vector<2x160xf32>
    %266 = vector.extract_strided_slice %246 {offsets = [0, 320], sizes = [2, 160], strides = [1, 1]} : vector<2x640xf32> to vector<2x160xf32>
    %267 = math.tanh %266 : vector<2x160xf32>
    %268 = vector.extract_strided_slice %246 {offsets = [0, 480], sizes = [2, 160], strides = [1, 1]} : vector<2x640xf32> to vector<2x160xf32>
    %269 = arith.negf %268 : vector<2x160xf32>
    %270 = math.exp %269 : vector<2x160xf32>
    %cst_89 = arith.constant 1.000000e+00 : f32
    %271 = vector.broadcast %cst_89 : f32 to vector<2x160xf32>
    %272 = arith.addf %271, %270 : vector<2x160xf32>
    %273 = arith.divf %271, %272 : vector<2x160xf32>
    %274 = arith.mulf %265, %253 : vector<2x160xf32>
    %275 = arith.mulf %259, %267 : vector<2x160xf32>
    %276 = arith.addf %274, %275 : vector<2x160xf32>
    %277 = math.tanh %276 : vector<2x160xf32>
    %278 = arith.mulf %273, %277 : vector<2x160xf32>
    %cst_90 = arith.constant dense<0.000000e+00> : vector<2x640xf32>
    %279 = tpu.matmul %278, %146, %cst_90 {dimension_numbers = #tpu.dot_dimension_numbers<[1], [0], [0], [1], [0, 0, 1, 1], [], []>} : vector<2x160xf32>, vector<160x640xf32>, vector<2x640xf32> -> vector<2x640xf32>
    %280 = arith.addf %249, %279 : vector<2x640xf32>
    %281 = vector.extract_strided_slice %280 {offsets = [0, 0], sizes = [2, 160], strides = [1, 1]} : vector<2x640xf32> to vector<2x160xf32>
    %282 = arith.negf %281 : vector<2x160xf32>
    %283 = math.exp %282 : vector<2x160xf32>
    %cst_91 = arith.constant 1.000000e+00 : f32
    %284 = vector.broadcast %cst_91 : f32 to vector<2x160xf32>
    %285 = arith.addf %284, %283 : vector<2x160xf32>
    %286 = arith.divf %284, %285 : vector<2x160xf32>
    %287 = vector.extract_strided_slice %280 {offsets = [0, 160], sizes = [2, 160], strides = [1, 1]} : vector<2x640xf32> to vector<2x160xf32>
    %288 = arith.negf %287 : vector<2x160xf32>
    %289 = math.exp %288 : vector<2x160xf32>
    %cst_92 = arith.constant 1.000000e+00 : f32
    %290 = vector.broadcast %cst_92 : f32 to vector<2x160xf32>
    %291 = arith.addf %290, %289 : vector<2x160xf32>
    %292 = arith.divf %290, %291 : vector<2x160xf32>
    %293 = vector.extract_strided_slice %280 {offsets = [0, 320], sizes = [2, 160], strides = [1, 1]} : vector<2x640xf32> to vector<2x160xf32>
    %294 = math.tanh %293 : vector<2x160xf32>
    %295 = vector.extract_strided_slice %280 {offsets = [0, 480], sizes = [2, 160], strides = [1, 1]} : vector<2x640xf32> to vector<2x160xf32>
    %296 = arith.negf %295 : vector<2x160xf32>
    %297 = math.exp %296 : vector<2x160xf32>
    %cst_93 = arith.constant 1.000000e+00 : f32
    %298 = vector.broadcast %cst_93 : f32 to vector<2x160xf32>
    %299 = arith.addf %298, %297 : vector<2x160xf32>
    %300 = arith.divf %298, %299 : vector<2x160xf32>
    %301 = arith.mulf %292, %276 : vector<2x160xf32>
    %302 = arith.mulf %286, %294 : vector<2x160xf32>
    %303 = arith.addf %301, %302 : vector<2x160xf32>
    %304 = math.tanh %303 : vector<2x160xf32>
    %305 = arith.mulf %300, %304 : vector<2x160xf32>
    %cst_94 = arith.constant dense<0.000000e+00> : vector<2x640xf32>
    %306 = tpu.matmul %305, %146, %cst_94 {dimension_numbers = #tpu.dot_dimension_numbers<[1], [0], [0], [1], [0, 0, 1, 1], [], []>} : vector<2x160xf32>, vector<160x640xf32>, vector<2x640xf32> -> vector<2x640xf32>
    %307 = arith.addf %252, %306 : vector<2x640xf32>
    %308 = vector.extract_strided_slice %307 {offsets = [0, 0], sizes = [2, 160], strides = [1, 1]} : vector<2x640xf32> to vector<2x160xf32>
    %309 = arith.negf %308 : vector<2x160xf32>
    %310 = math.exp %309 : vector<2x160xf32>
    %cst_95 = arith.constant 1.000000e+00 : f32
    %311 = vector.broadcast %cst_95 : f32 to vector<2x160xf32>
    %312 = arith.addf %311, %310 : vector<2x160xf32>
    %313 = arith.divf %311, %312 : vector<2x160xf32>
    %314 = vector.extract_strided_slice %307 {offsets = [0, 160], sizes = [2, 160], strides = [1, 1]} : vector<2x640xf32> to vector<2x160xf32>
    %315 = arith.negf %314 : vector<2x160xf32>
    %316 = math.exp %315 : vector<2x160xf32>
    %cst_96 = arith.constant 1.000000e+00 : f32
    %317 = vector.broadcast %cst_96 : f32 to vector<2x160xf32>
    %318 = arith.addf %317, %316 : vector<2x160xf32>
    %319 = arith.divf %317, %318 : vector<2x160xf32>
    %320 = vector.extract_strided_slice %307 {offsets = [0, 320], sizes = [2, 160], strides = [1, 1]} : vector<2x640xf32> to vector<2x160xf32>
    %321 = math.tanh %320 : vector<2x160xf32>
    %322 = vector.extract_strided_slice %307 {offsets = [0, 480], sizes = [2, 160], strides = [1, 1]} : vector<2x640xf32> to vector<2x160xf32>
    %323 = arith.negf %322 : vector<2x160xf32>
    %324 = math.exp %323 : vector<2x160xf32>
    %cst_97 = arith.constant 1.000000e+00 : f32
    %325 = vector.broadcast %cst_97 : f32 to vector<2x160xf32>
    %326 = arith.addf %325, %324 : vector<2x160xf32>
    %327 = arith.divf %325, %326 : vector<2x160xf32>
    %328 = arith.mulf %319, %303 : vector<2x160xf32>
    %329 = arith.mulf %313, %321 : vector<2x160xf32>
    %330 = arith.addf %328, %329 : vector<2x160xf32>
    %331 = math.tanh %330 : vector<2x160xf32>
    %332 = arith.mulf %327, %331 : vector<2x160xf32>
    %c0_98 = arith.constant 0 : index
    %c0_99 = arith.constant 0 : index
    %333 = vector.load %arg13[%c0_98, %c0_99] : memref<320x1xf32, #tpu.memory_space<vmem>>, vector<320x1xf32>
    %334 = vector.extract_strided_slice %333 {offsets = [0, 0], sizes = [160, 1], strides = [1, 1]} : vector<320x1xf32> to vector<160x1xf32>
    %cst_100 = arith.constant dense<0.000000e+00> : vector<2x1xf32>
    %335 = tpu.matmul %243, %334, %cst_100 {dimension_numbers = #tpu.dot_dimension_numbers<[1], [0], [0], [1], [0, 0, 1, 1], [], []>} : vector<2x160xf32>, vector<160x1xf32>, vector<2x1xf32> -> vector<2x1xf32>
    %336 = vector.extract_strided_slice %333 {offsets = [160, 0], sizes = [160, 1], strides = [1, 1]} : vector<320x1xf32> to vector<160x1xf32>
    %cst_101 = arith.constant dense<0.000000e+00> : vector<2x1xf32>
    %337 = tpu.matmul %332, %336, %cst_101 {dimension_numbers = #tpu.dot_dimension_numbers<[1], [0], [0], [1], [0, 0, 1, 1], [], []>} : vector<2x160xf32>, vector<160x1xf32>, vector<2x1xf32> -> vector<2x1xf32>
    %338 = arith.addf %335, %337 : vector<2x1xf32>
    %c0_102 = arith.constant 0 : index
    %c0_103 = arith.constant 0 : index
    %339 = vector.load %arg14[%c0_102, %c0_103] : memref<1x1xf32, #tpu.memory_space<vmem>>, vector<1x1xf32>
    %340 = vector.broadcast %339 : vector<1x1xf32> to vector<2x1xf32>
    %341 = arith.addf %338, %340 : vector<2x1xf32>
    %342 = arith.negf %341 : vector<2x1xf32>
    %343 = math.exp %342 : vector<2x1xf32>
    %cst_104 = arith.constant 1.000000e+00 : f32
    %344 = vector.broadcast %cst_104 : f32 to vector<2x1xf32>
    %345 = arith.addf %344, %343 : vector<2x1xf32>
    %346 = arith.divf %344, %345 : vector<2x1xf32>
    %c0_105 = arith.constant 0 : index
    %c0_106 = arith.constant 0 : index
    %347 = vector.load %arg15[%c0_105, %c0_106] : memref<2x1xf32, #tpu.memory_space<vmem>>, vector<2x1xf32>
    tpu.vector_store %arg15[%c0_105, %c0_106], %346 {strides = array<i32>} : memref<2x1xf32, #tpu.memory_space<vmem>>, vector<2x1xf32>,
    return
  }
}

</mosaic_0001>

<llo_original>
// kernel: tpu_custom_call.1
$region0: #{tpu_custom_call.1}
  #allocation0 [shape = 'u32[]', space=smem, size = 0x4, offset = 0x4, fixed_abs, tag = 'smem constant byte address 0x4 - core index']
  #allocation1 [shape = 'u32[72,128]{1,0:T(1,128)}', space=vmem, size = 0x9000, scoped, tag = 'internal scratch']
  #allocation2 [shape = 'f32[1,1]{1,0:T(1,128)S(1)}', space=vmem, size = 0x200, scoped, tag = 'scoped memory for tpu_custom_call.1']
  %s0 = inlined_call_operand.vmem [shape: f32[2,3,7], index: 0, kind: input, shape index: {}]
  %s1 = inlined_call_operand.vmem [shape: f32[2,2,3,3], index: 1, kind: input, shape index: {}]
  %s2 = inlined_call_operand.vmem [shape: f32[2,1,3,1], index: 2, kind: input, shape index: {}]
  %s3 = inlined_call_operand.vmem [shape: f32[3,3,3], index: 3, kind: input, shape index: {}]
  %s4 = inlined_call_operand.vmem [shape: f32[1,3,1], index: 4, kind: input, shape index: {}]
  %s5 = inlined_call_operand.vmem [shape: f32[7,3,3], index: 5, kind: input, shape index: {}]
  %s6 = inlined_call_operand.vmem [shape: f32[1,3,1], index: 6, kind: input, shape index: {}]
  %s7 = inlined_call_operand.vmem [shape: f32[26,2], index: 7, kind: input, shape index: {}]
  %s8 = inlined_call_operand.vmem [shape: f32[1,1,2], index: 8, kind: input, shape index: {}]
  %s9 = inlined_call_operand.vmem [shape: f32[2,640], index: 9, kind: input, shape index: {}]
  %s10 = inlined_call_operand.hbm [shape: f32[2,160,640], index: 10, kind: input, shape index: {}]
  %s11 = inlined_call_operand.hbm [shape: f32[160,640], index: 11, kind: input, shape index: {}]
  %s12 = inlined_call_operand.vmem [shape: f32[2,640], index: 12, kind: input, shape index: {}]
  %s13 = inlined_call_operand.vmem [shape: f32[320,1], index: 13, kind: input, shape index: {}]
  %s14 = inlined_call_operand.<no memory space> [shape: f32[1,1], index: 14, kind: input, shape index: {}]
  %s15 = inlined_call_operand.vmem [shape: f32[2,1], index: 15, kind: output, shape index: {}]
  %s16 = sld [smem:[#allocation0]]
  $region78: #{tpu_custom_call.1} parent=0
    _
  %s18 = ssub.s32 1, %s16
  %s19 = scalar_select 0, %s18, %s16
  %v20 = vstv %s14
  %21 = vst [vmem:[#allocation2] sm:$0x1] %v20
  $region1: #{tpu_custom_call.1} parent=0
    #allocation3 [shape = 'u8[819200]{0}', space=vmem, size = 0xc8000, scoped, tag = 'input window, operand 10, single buffered']
    #allocation4 [shape = 's32[1]{0}', space=sflag, size = 0x4, scoped, tag = 'scoped memory for tpu_custom_call.1']
    #allocation5 [shape = 'u8[409600]{0}', space=vmem, size = 0x64000, scoped, tag = 'input window, operand 11, single buffered']
    #allocation6 [shape = 's32[1]{0}', space=sflag, size = 0x4, scoped, tag = 'scoped memory for tpu_custom_call.1']
    %22 = vsyncpa [#allocation4], 0
    %23 = vsyncpa [#allocation6], 0
    // Predicated region
    $region2: #{tpu_custom_call.1} parent=1 // pred_check
      _
    $region3: #{tpu_custom_call.1} parent=1 // pred_check_branch
      %25 = sbr.rel (0) target = $region5
    $region4: #{tpu_custom_call.1} parent=1 // pred_region
      _
    $region5: #{tpu_custom_call.1} parent=1 // pred_fallthru
      _
    // Predicated region
    $region6: #{tpu_custom_call.1} parent=1 // pred_check
      _
    $region7: #{tpu_custom_call.1} parent=1 // pred_check_branch
      %27 = sbr.rel (0) target = $region9
    $region8: #{tpu_custom_call.1} parent=1 // pred_region
      _
    $region9: #{tpu_custom_call.1} parent=1 // pred_fallthru
      _
    // Predicated region
    $region10: #{tpu_custom_call.1} parent=1 // pred_check
      _
    $region11: #{tpu_custom_call.1} parent=1 // pred_check_branch
      %29 = sbr.rel (0) target = $region13
    $region12: #{tpu_custom_call.1} parent=1 // pred_region
      _
    $region13: #{tpu_custom_call.1} parent=1 // pred_fallthru
      _
    // Predicated region
    $region14: #{tpu_custom_call.1} parent=1 // pred_check
      _
    $region15: #{tpu_custom_call.1} parent=1 // pred_check_branch
      %31 = sbr.rel (0) target = $region17
    $region16: #{tpu_custom_call.1} parent=1 // pred_region
      _
    $region17: #{tpu_custom_call.1} parent=1 // pred_fallthru
      _
    // Predicated region
    $region18: #{tpu_custom_call.1} parent=1 // pred_check
      _
    $region19: #{tpu_custom_call.1} parent=1 // pred_check_branch
      %33 = sbr.rel (0) target = $region21
    $region20: #{tpu_custom_call.1} parent=1 // pred_region
      _
    $region21: #{tpu_custom_call.1} parent=1 // pred_fallthru
      _
    // Predicated region
    $region22: #{tpu_custom_call.1} parent=1 // pred_check
      _
    $region23: #{tpu_custom_call.1} parent=1 // pred_check_branch
      %35 = sbr.rel (0) target = $region25
    $region24: #{tpu_custom_call.1} parent=1 // pred_region
      _
    $region25: #{tpu_custom_call.1} parent=1 // pred_fallthru
      _
    // Predicated region
    $region26: #{tpu_custom_call.1} parent=1 // pred_check
      _
    $region27: #{tpu_custom_call.1} parent=1 // pred_check_branch
      %37 = sbr.rel (0) target = $region29
    $region28: #{tpu_custom_call.1} parent=1 // pred_region
      _
    $region29: #{tpu_custom_call.1} parent=1 // pred_fallthru
      _
    // Predicated region
    $region30: #{tpu_custom_call.1} parent=1 // pred_check
      _
    $region31: #{tpu_custom_call.1} parent=1 // pred_check_branch
      %39 = sbr.rel (0) target = $region33
    $region32: #{tpu_custom_call.1} parent=1 // pred_region
      _
    $region33: #{tpu_custom_call.1} parent=1 // pred_fallthru
      _
    // Predicated region
    $region34: #{tpu_custom_call.1} parent=1 // pred_check
      _
    $region35: #{tpu_custom_call.1} parent=1 // pred_check_branch
      %41 = sbr.rel (0) target = $region37
    $region36: #{tpu_custom_call.1} parent=1 // pred_region
      _
    $region37: #{tpu_custom_call.1} parent=1 // pred_fallthru
      _
    // Predicated region
    $region38: #{tpu_custom_call.1} parent=1 // pred_check
      _
    $region39: #{tpu_custom_call.1} parent=1 // pred_check_branch
      %43 = sbr.rel (0) target = $region41
    $region40: #{tpu_custom_call.1} parent=1 // pred_region
      _
    $region41: #{tpu_custom_call.1} parent=1 // pred_fallthru
      _
    // Predicated region
    $region42: #{tpu_custom_call.1} parent=1 // pred_check
      _
    $region43: #{tpu_custom_call.1} parent=1 // pred_check_branch
      %45 = sbr.rel (0) target = $region45
    $region44: #{tpu_custom_call.1} parent=1 // pred_region
      %47 = vsyncadd [#allocation4], 0
      %s48 = sshll.u32 %s10, 4
      %s49 = int_to_ptr.hbm [resolvable:$true] %s48
      %s50 = sshll.u32 [#allocation3], 4
      %s51 = int_to_ptr.vmem [resolvable:$true] %s50
      %56 = dma.hbm_to_vmem [thread:$0]  %s49, 25600, %s51, [#allocation4], 640, 640, 40
    $region45: #{tpu_custom_call.1} parent=1 // pred_fallthru
      _
    // Predicated region
    $region46: #{tpu_custom_call.1} parent=1 // pred_check
      _
    $region47: #{tpu_custom_call.1} parent=1 // pred_check_branch
      %58 = sbr.rel (0) target = $region49
    $region48: #{tpu_custom_call.1} parent=1 // pred_region
      %60 = vsyncadd [#allocation6], 0
      %s61 = sshll.u32 %s11, 4
      %s62 = int_to_ptr.hbm [resolvable:$true] %s61
      %s63 = sshll.u32 [#allocation5], 4
      %s64 = int_to_ptr.vmem [resolvable:$true] %s63
      %69 = dma.hbm_to_vmem [thread:$0]  %s62, 12800, %s64, [#allocation6], 640, 640, 40
    $region49: #{tpu_custom_call.1} parent=1 // pred_fallthru
      _
    // Predicated region
    $region50: #{tpu_custom_call.1} parent=1 // pred_check
      _
    $region51: #{tpu_custom_call.1} parent=1 // pred_check_branch
      %71 = sbr.rel (0) target = $region53
    $region52: #{tpu_custom_call.1} parent=1 // pred_region
      _
    $region53: #{tpu_custom_call.1} parent=1 // pred_fallthru
      _
    // Predicated region
    $region54: #{tpu_custom_call.1} parent=1 // pred_check
      _
    $region55: #{tpu_custom_call.1} parent=1 // pred_check_branch
      %73 = sbr.rel (0) target = $region57
    $region56: #{tpu_custom_call.1} parent=1 // pred_region
      _
    $region57: #{tpu_custom_call.1} parent=1 // pred_fallthru
      _
    // Predicated region
    $region58: #{tpu_custom_call.1} parent=1 // pred_check
      _
    $region59: #{tpu_custom_call.1} parent=1 // pred_check_branch
      %75 = sbr.rel (0) target = $region61
    $region60: #{tpu_custom_call.1} parent=1 // pred_region
      _
    $region61: #{tpu_custom_call.1} parent=1 // pred_fallthru
      _
    // Predicated region
    $region62: #{tpu_custom_call.1} parent=1 // pred_check
      _
    $region63: #{tpu_custom_call.1} parent=1 // pred_check_branch
      %77 = sbr.rel (0) target = $region65
    $region64: #{tpu_custom_call.1} parent=1 // pred_region
      %79 = dma.done [#allocation4], 25600
    $region65: #{tpu_custom_call.1} parent=1 // pred_fallthru
      _
    // Predicated region
    $region66: #{tpu_custom_call.1} parent=1 // pred_check
      _
    $region67: #{tpu_custom_call.1} parent=1 // pred_check_branch
      %81 = sbr.rel (0) target = $region69
    $region68: #{tpu_custom_call.1} parent=1 // pred_region
      %83 = dma.done [#allocation6], 12800
    $region69: #{tpu_custom_call.1} parent=1 // pred_fallthru
      _
    %v84 = vld [vmem:[%s0] sm:$0x7]
    %v85 = vld [vmem:[%s0 + $0x4] sm:$0x7]
    %v86 = vld [vmem:[%s1] sm:$0x7]
    %v87 = vld [vmem:[%s1 + $0x4] sm:$0x7]
    %v88 = vld [vmem:[%s2] sm:$0x7]
    %91 = vrot.lane.b32.xlu0 %v84, 2
    %v92 = vpop.permute.xlu0 %91
    %93 = vrot.lane.b32.xlu0 %v85, 2
    %v94 = vpop.permute.xlu0 %93
    %vm97 = vcmask 15360
    %v98 = vsel %vm97, 0.0, %v92
    %v99 = vsel %vm97, 0.0, %v94
    %vm100 = vcmask 72704
    %v101 = vsel %vm100, %v98, 0.0
    %v102 = vsel %vm100, %v99, 0.0
    %104 = vset.pattern.permute.xlu0 0
    %105 = vperm.xlu0 %104, %v88
    %v106 = vpop.permute.xlu0 %105
    %vm108 = vcmask 23552
    %v110 = vsel %vm108, %v86, 0
    %vm112 = vcmask 1042432
    %v114 = vsel %vm112, %v101, 0
    %116 = vmatpush.msra.mxu0 0.0
    %117 = vmatpush.msra.mxu0 0.0
    %118 = vmatpush.msra.mxu0 0.0
    %119 = vmatpush.msra.mxu0 0.0
    %120 = vmatpush.msra.mxu0 0.0
    %121 = vmatpush.msra.mxu0 0.0
    %122 = vmatpush.msra.mxu0 0.0
    %123 = vmatpush.msra.mxu0 0.0
    %124 = vmatpush.msra.mxu0 0.0
    %125 = vmatpush.msra.mxu0 0.0
    %126 = vmatpush.msra.mxu0 0.0
    %127 = vmatpush.msra.mxu0 0.0
    %128 = vmatpush.msra.mxu0 0.0
    %129 = vmatpush.msra.mxu0 0.0
    %130 = vmatpush.msra.mxu0 0.0
    %131 = vmatpush.msra.mxu0 %v114
    %132 = vmatmul.f32.gmra.mxu0 %v110
    %v133 = vpop.f32.mrf.mxu0
    %v134 = vadd.f32 0.0, %v133
    %135 = vdwg.mxu0
    %v137 = vsel %vm112, %v102, 0
    %139 = vmatpush.msra.mxu0 0.0
    %140 = vmatpush.msra.mxu0 0.0
    %141 = vmatpush.msra.mxu0 0.0
    %142 = vmatpush.msra.mxu0 0.0
    %143 = vmatpush.msra.mxu0 0.0
    %144 = vmatpush.msra.mxu0 0.0
    %145 = vmatpush.msra.mxu0 0.0
    %146 = vmatpush.msra.mxu0 0.0
    %147 = vmatpush.msra.mxu0 0.0
    %148 = vmatpush.msra.mxu0 0.0
    %149 = vmatpush.msra.mxu0 0.0
    %150 = vmatpush.msra.mxu0 0.0
    %151 = vmatpush.msra.mxu0 0.0
    %152 = vmatpush.msra.mxu0 0.0
    %153 = vmatpush.msra.mxu0 0.0
    %154 = vmatpush.msra.mxu0 %v137
    %155 = vmatmul.f32.gmra.mxu0 %v110
    %v156 = vpop.f32.mrf.mxu0
    %v157 = vadd.f32 0.0, %v156
    %158 = vdwg.mxu0
    %v159 = vadd.f32 %v106, %v134
    %v160 = vadd.f32 %v106, %v157
    %161 = vrot.lane.b32.xlu0 %v101, 126
    %v162 = vpop.permute.xlu0 %161
    %v164 = vsel %vm108, %v87, 0
    %v166 = vsel %vm112, %v162, 0
    %168 = vmatpush.msra.mxu0 0.0
    %169 = vmatpush.msra.mxu0 0.0
    %170 = vmatpush.msra.mxu0 0.0
    %171 = vmatpush.msra.mxu0 0.0
    %172 = vmatpush.msra.mxu0 0.0
    %173 = vmatpush.msra.mxu0 0.0
    %174 = vmatpush.msra.mxu0 0.0
    %175 = vmatpush.msra.mxu0 0.0
    %176 = vmatpush.msra.mxu0 0.0
    %177 = vmatpush.msra.mxu0 0.0
    %178 = vmatpush.msra.mxu0 0.0
    %179 = vmatpush.msra.mxu0 0.0
    %180 = vmatpush.msra.mxu0 0.0
    %181 = vmatpush.msra.mxu0 0.0
    %182 = vmatpush.msra.mxu0 0.0
    %183 = vmatpush.msra.mxu0 %v166
    %184 = vmatmul.f32.gmra.mxu0 %v164
    %v185 = vpop.f32.mrf.mxu0
    %v186 = vadd.f32 0.0, %v185
    %187 = vdwg.mxu0
    %188 = vrot.lane.b32.xlu0 %v102, 126
    %v189 = vpop.permute.xlu0 %188
    %v190 = vsel %vm112, %v189, 0
    %192 = vmatpush.msra.mxu0 0.0
    %193 = vmatpush.msra.mxu0 0.0
    %194 = vmatpush.msra.mxu0 0.0
    %195 = vmatpush.msra.mxu0 0.0
    %196 = vmatpush.msra.mxu0 0.0
    %197 = vmatpush.msra.mxu0 0.0
    %198 = vmatpush.msra.mxu0 0.0
    %199 = vmatpush.msra.mxu0 0.0
    %200 = vmatpush.msra.mxu0 0.0
    %201 = vmatpush.msra.mxu0 0.0
    %202 = vmatpush.msra.mxu0 0.0
    %203 = vmatpush.msra.mxu0 0.0
    %204 = vmatpush.msra.mxu0 0.0
    %205 = vmatpush.msra.mxu0 0.0
    %206 = vmatpush.msra.mxu0 0.0
    %207 = vmatpush.msra.mxu0 %v190
    %208 = vmatmul.f32.gmra.mxu0 %v164
    %v209 = vpop.f32.mrf.mxu0
    %v210 = vadd.f32 0.0, %v209
    %211 = vdwg.mxu0
    %v212 = vadd.f32 %v159, %v186
    %v213 = vadd.f32 %v160, %v210
    %s214 = scalar_lea.vmem %s1, 8
    %v215 = vld [vmem:[%s214] sm:$0x7]
    %v216 = vld [vmem:[%s214 + $0x4] sm:$0x7]
    %s217 = scalar_lea.vmem %s2, 4
    %v218 = vld [vmem:[%s217] sm:$0x7]
    %221 = vrot.lane.b32.xlu0 %v212, 2
    %v222 = vpop.permute.xlu0 %221
    %223 = vrot.lane.b32.xlu0 %v213, 2
    %v224 = vpop.permute.xlu0 %223
    %v227 = vsel %vm97, 0.0, %v222
    %v228 = vsel %vm97, 0.0, %v224
    %vm229 = vcmask 89088
    %v230 = vsel %vm229, %v227, 0.0
    %v231 = vsel %vm229, %v228, 0.0
    %233 = vset.pattern.permute.xlu0 0
    %234 = vperm.xlu0 %233, %v218
    %v235 = vpop.permute.xlu0 %234
    %v238 = vsel %vm108, %v215, 0
    %v241 = vsel %vm112, %v230, 0
    %243 = vmatpush.msra.mxu0 0.0
    %244 = vmatpush.msra.mxu0 0.0
    %245 = vmatpush.msra.mxu0 0.0
    %246 = vmatpush.msra.mxu0 0.0
    %247 = vmatpush.msra.mxu0 0.0
    %248 = vmatpush.msra.mxu0 0.0
    %249 = vmatpush.msra.mxu0 0.0
    %250 = vmatpush.msra.mxu0 0.0
    %251 = vmatpush.msra.mxu0 0.0
    %252 = vmatpush.msra.mxu0 0.0
    %253 = vmatpush.msra.mxu0 0.0
    %254 = vmatpush.msra.mxu0 0.0
    %255 = vmatpush.msra.mxu0 0.0
    %256 = vmatpush.msra.mxu0 0.0
    %257 = vmatpush.msra.mxu0 0.0
    %258 = vmatpush.msra.mxu0 %v241
    %259 = vmatmul.f32.gmra.mxu0 %v238
    %v260 = vpop.f32.mrf.mxu0
    %v261 = vadd.f32 0.0, %v260
    %262 = vdwg.mxu0
    %v264 = vsel %vm112, %v231, 0
    %266 = vmatpush.msra.mxu0 0.0
    %267 = vmatpush.msra.mxu0 0.0
    %268 = vmatpush.msra.mxu0 0.0
    %269 = vmatpush.msra.mxu0 0.0
    %270 = vmatpush.msra.mxu0 0.0
    %271 = vmatpush.msra.mxu0 0.0
    %272 = vmatpush.msra.mxu0 0.0
    %273 = vmatpush.msra.mxu0 0.0
    %274 = vmatpush.msra.mxu0 0.0
    %275 = vmatpush.msra.mxu0 0.0
    %276 = vmatpush.msra.mxu0 0.0
    %277 = vmatpush.msra.mxu0 0.0
    %278 = vmatpush.msra.mxu0 0.0
    %279 = vmatpush.msra.mxu0 0.0
    %280 = vmatpush.msra.mxu0 0.0
    %281 = vmatpush.msra.mxu0 %v264
    %282 = vmatmul.f32.gmra.mxu0 %v238
    %v283 = vpop.f32.mrf.mxu0
    %v284 = vadd.f32 0.0, %v283
    %285 = vdwg.mxu0
    %v286 = vadd.f32 %v235, %v261
    %v287 = vadd.f32 %v235, %v284
    %288 = vrot.lane.b32.xlu0 %v230, 126
    %v289 = vpop.permute.xlu0 %288
    %v291 = vsel %vm108, %v216, 0
    %v293 = vsel %vm112, %v289, 0
    %295 = vmatpush.msra.mxu0 0.0
    %296 = vmatpush.msra.mxu0 0.0
    %297 = vmatpush.msra.mxu0 0.0
    %298 = vmatpush.msra.mxu0 0.0
    %299 = vmatpush.msra.mxu0 0.0
    %300 = vmatpush.msra.mxu0 0.0
    %301 = vmatpush.msra.mxu0 0.0
    %302 = vmatpush.msra.mxu0 0.0
    %303 = vmatpush.msra.mxu0 0.0
    %304 = vmatpush.msra.mxu0 0.0
    %305 = vmatpush.msra.mxu0 0.0
    %306 = vmatpush.msra.mxu0 0.0
    %307 = vmatpush.msra.mxu0 0.0
    %308 = vmatpush.msra.mxu0 0.0
    %309 = vmatpush.msra.mxu0 0.0
    %310 = vmatpush.msra.mxu0 %v293
    %311 = vmatmul.f32.gmra.mxu0 %v291
    %v312 = vpop.f32.mrf.mxu0
    %v313 = vadd.f32 0.0, %v312
    %314 = vdwg.mxu0
    %315 = vrot.lane.b32.xlu0 %v231, 126
    %v316 = vpop.permute.xlu0 %315
    %v317 = vsel %vm112, %v316, 0
    %319 = vmatpush.msra.mxu0 0.0
    %320 = vmatpush.msra.mxu0 0.0
    %321 = vmatpush.msra.mxu0 0.0
    %322 = vmatpush.msra.mxu0 0.0
    %323 = vmatpush.msra.mxu0 0.0
    %324 = vmatpush.msra.mxu0 0.0
    %325 = vmatpush.msra.mxu0 0.0
    %326 = vmatpush.msra.mxu0 0.0
    %327 = vmatpush.msra.mxu0 0.0
    %328 = vmatpush.msra.mxu0 0.0
    %329 = vmatpush.msra.mxu0 0.0
    %330 = vmatpush.msra.mxu0 0.0
    %331 = vmatpush.msra.mxu0 0.0
    %332 = vmatpush.msra.mxu0 0.0
    %333 = vmatpush.msra.mxu0 0.0
    %334 = vmatpush.msra.mxu0 %v317
    %335 = vmatmul.f32.gmra.mxu0 %v291
    %v336 = vpop.f32.mrf.mxu0
    %v337 = vadd.f32 0.0, %v336
    %338 = vdwg.mxu0
    %v339 = vadd.f32 %v286, %v313
    %v340 = vadd.f32 %v287, %v337
    %v341 = vld [vmem:[%s3] sm:$0x7]
    %v342 = vld [vmem:[%s3 + $0x4] sm:$0x7]
    %v343 = vld [vmem:[%s3 + $0x8] sm:$0x7]
    %v344 = vld [vmem:[%s4] sm:$0x7]
    %346 = vset.pattern.permute.xlu0 0
    %347 = vperm.xlu0 %346, %v344
    %v348 = vpop.permute.xlu0 %347
    %v351 = vsel %vm108, %v341, 0
    %v353 = vsel %vm112, %v84, 0
    %355 = vmatpush.msra.mxu0 0.0
    %356 = vmatpush.msra.mxu0 0.0
    %357 = vmatpush.msra.mxu0 0.0
    %358 = vmatpush.msra.mxu0 0.0
    %359 = vmatpush.msra.mxu0 0.0
    %360 = vmatpush.msra.mxu0 0.0
    %361 = vmatpush.msra.mxu0 0.0
    %362 = vmatpush.msra.mxu0 0.0
    %363 = vmatpush.msra.mxu0 0.0
    %364 = vmatpush.msra.mxu0 0.0
    %365 = vmatpush.msra.mxu0 0.0
    %366 = vmatpush.msra.mxu0 0.0
    %367 = vmatpush.msra.mxu0 0.0
    %368 = vmatpush.msra.mxu0 0.0
    %369 = vmatpush.msra.mxu0 0.0
    %370 = vmatpush.msra.mxu0 %v353
    %371 = vmatmul.f32.gmra.mxu0 %v351
    %v372 = vpop.f32.mrf.mxu0
    %v373 = vadd.f32 0.0, %v372
    %374 = vdwg.mxu0
    %v375 = vsel %vm112, %v85, 0
    %377 = vmatpush.msra.mxu0 0.0
    %378 = vmatpush.msra.mxu0 0.0
    %379 = vmatpush.msra.mxu0 0.0
    %380 = vmatpush.msra.mxu0 0.0
    %381 = vmatpush.msra.mxu0 0.0
    %382 = vmatpush.msra.mxu0 0.0
    %383 = vmatpush.msra.mxu0 0.0
    %384 = vmatpush.msra.mxu0 0.0
    %385 = vmatpush.msra.mxu0 0.0
    %386 = vmatpush.msra.mxu0 0.0
    %387 = vmatpush.msra.mxu0 0.0
    %388 = vmatpush.msra.mxu0 0.0
    %389 = vmatpush.msra.mxu0 0.0
    %390 = vmatpush.msra.mxu0 0.0
    %391 = vmatpush.msra.mxu0 0.0
    %392 = vmatpush.msra.mxu0 %v375
    %393 = vmatmul.f32.gmra.mxu0 %v351
    %v394 = vpop.f32.mrf.mxu0
    %v395 = vadd.f32 0.0, %v394
    %396 = vdwg.mxu0
    %v397 = vadd.f32 %v348, %v373
    %v398 = vadd.f32 %v348, %v395
    %399 = vrot.lane.b32.xlu0 %v84, 127
    %v400 = vpop.permute.xlu0 %399
    %v402 = vsel %vm108, %v342, 0
    %v404 = vsel %vm112, %v400, 0
    %406 = vmatpush.msra.mxu0 0.0
    %407 = vmatpush.msra.mxu0 0.0
    %408 = vmatpush.msra.mxu0 0.0
    %409 = vmatpush.msra.mxu0 0.0
    %410 = vmatpush.msra.mxu0 0.0
    %411 = vmatpush.msra.mxu0 0.0
    %412 = vmatpush.msra.mxu0 0.0
    %413 = vmatpush.msra.mxu0 0.0
    %414 = vmatpush.msra.mxu0 0.0
    %415 = vmatpush.msra.mxu0 0.0
    %416 = vmatpush.msra.mxu0 0.0
    %417 = vmatpush.msra.mxu0 0.0
    %418 = vmatpush.msra.mxu0 0.0
    %419 = vmatpush.msra.mxu0 0.0
    %420 = vmatpush.msra.mxu0 0.0
    %421 = vmatpush.msra.mxu0 %v404
    %422 = vmatmul.f32.gmra.mxu0 %v402
    %v423 = vpop.f32.mrf.mxu0
    %v424 = vadd.f32 0.0, %v423
    %425 = vdwg.mxu0
    %426 = vrot.lane.b32.xlu0 %v85, 127
    %v427 = vpop.permute.xlu0 %426
    %v428 = vsel %vm112, %v427, 0
    %430 = vmatpush.msra.mxu0 0.0
    %431 = vmatpush.msra.mxu0 0.0
    %432 = vmatpush.msra.mxu0 0.0
    %433 = vmatpush.msra.mxu0 0.0
    %434 = vmatpush.msra.mxu0 0.0
    %435 = vmatpush.msra.mxu0 0.0
    %436 = vmatpush.msra.mxu0 0.0
    %437 = vmatpush.msra.mxu0 0.0
    %438 = vmatpush.msra.mxu0 0.0
    %439 = vmatpush.msra.mxu0 0.0
    %440 = vmatpush.msra.mxu0 0.0
    %441 = vmatpush.msra.mxu0 0.0
    %442 = vmatpush.msra.mxu0 0.0
    %443 = vmatpush.msra.mxu0 0.0
    %444 = vmatpush.msra.mxu0 0.0
    %445 = vmatpush.msra.mxu0 %v428
    %446 = vmatmul.f32.gmra.mxu0 %v402
    %v447 = vpop.f32.mrf.mxu0
    %v448 = vadd.f32 0.0, %v447
    %449 = vdwg.mxu0
    %v450 = vadd.f32 %v397, %v424
    %v451 = vadd.f32 %v398, %v448
    %452 = vrot.lane.b32.xlu0 %v84, 126
    %v453 = vpop.permute.xlu0 %452
    %v455 = vsel %vm108, %v343, 0
    %v457 = vsel %vm112, %v453, 0
    %459 = vmatpush.msra.mxu0 0.0
    %460 = vmatpush.msra.mxu0 0.0
    %461 = vmatpush.msra.mxu0 0.0
    %462 = vmatpush.msra.mxu0 0.0
    %463 = vmatpush.msra.mxu0 0.0
    %464 = vmatpush.msra.mxu0 0.0
    %465 = vmatpush.msra.mxu0 0.0
    %466 = vmatpush.msra.mxu0 0.0
    %467 = vmatpush.msra.mxu0 0.0
    %468 = vmatpush.msra.mxu0 0.0
    %469 = vmatpush.msra.mxu0 0.0
    %470 = vmatpush.msra.mxu0 0.0
    %471 = vmatpush.msra.mxu0 0.0
    %472 = vmatpush.msra.mxu0 0.0
    %473 = vmatpush.msra.mxu0 0.0
    %474 = vmatpush.msra.mxu0 %v457
    %475 = vmatmul.f32.gmra.mxu0 %v455
    %v476 = vpop.f32.mrf.mxu0
    %v477 = vadd.f32 0.0, %v476
    %478 = vdwg.mxu0
    %479 = vrot.lane.b32.xlu0 %v85, 126
    %v480 = vpop.permute.xlu0 %479
    %v481 = vsel %vm112, %v480, 0
    %483 = vmatpush.msra.mxu0 0.0
    %484 = vmatpush.msra.mxu0 0.0
    %485 = vmatpush.msra.mxu0 0.0
    %486 = vmatpush.msra.mxu0 0.0
    %487 = vmatpush.msra.mxu0 0.0
    %488 = vmatpush.msra.mxu0 0.0
    %489 = vmatpush.msra.mxu0 0.0
    %490 = vmatpush.msra.mxu0 0.0
    %491 = vmatpush.msra.mxu0 0.0
    %492 = vmatpush.msra.mxu0 0.0
    %493 = vmatpush.msra.mxu0 0.0
    %494 = vmatpush.msra.mxu0 0.0
    %495 = vmatpush.msra.mxu0 0.0
    %496 = vmatpush.msra.mxu0 0.0
    %497 = vmatpush.msra.mxu0 0.0
    %498 = vmatpush.msra.mxu0 %v481
    %499 = vmatmul.f32.gmra.mxu0 %v455
    %v500 = vpop.f32.mrf.mxu0
    %v501 = vadd.f32 0.0, %v500
    %502 = vdwg.mxu0
    %v503 = vadd.f32 %v450, %v477
    %v504 = vadd.f32 %v451, %v501
    %v505 = vld [vmem:[%s5] sm:$0x7]
    %v506 = vld [vmem:[%s5 + $0x4] sm:$0x7]
    %v507 = vld [vmem:[%s5 + $0x8] sm:$0x7]
    %v508 = vld [vmem:[%s5 + $0xc] sm:$0x7]
    %v509 = vld [vmem:[%s5 + $0x10] sm:$0x7]
    %v510 = vld [vmem:[%s5 + $0x14] sm:$0x7]
    %v511 = vld [vmem:[%s5 + $0x18] sm:$0x7]
    %v512 = vld [vmem:[%s6] sm:$0x7]
    %513 = vrot.lane.b32.xlu0 %v84, 6
    %v514 = vpop.permute.xlu0 %513
    %515 = vrot.lane.b32.xlu0 %v85, 6
    %v516 = vpop.permute.xlu0 %515
    %vm519 = vcmask 48128
    %v520 = vsel %vm519, 0.0, %v514
    %v521 = vsel %vm519, 0.0, %v516
    %vm522 = vcmask 105472
    %v523 = vsel %vm522, %v520, 0.0
    %v524 = vsel %vm522, %v521, 0.0
    %526 = vset.pattern.permute.xlu0 0
    %527 = vperm.xlu0 %526, %v512
    %v528 = vpop.permute.xlu0 %527
    %v531 = vsel %vm108, %v505, 0
    %v534 = vsel %vm112, %v523, 0
    %536 = vmatpush.msra.mxu0 0.0
    %537 = vmatpush.msra.mxu0 0.0
    %538 = vmatpush.msra.mxu0 0.0
    %539 = vmatpush.msra.mxu0 0.0
    %540 = vmatpush.msra.mxu0 0.0
    %541 = vmatpush.msra.mxu0 0.0
    %542 = vmatpush.msra.mxu0 0.0
    %543 = vmatpush.msra.mxu0 0.0
    %544 = vmatpush.msra.mxu0 0.0
    %545 = vmatpush.msra.mxu0 0.0
    %546 = vmatpush.msra.mxu0 0.0
    %547 = vmatpush.msra.mxu0 0.0
    %548 = vmatpush.msra.mxu0 0.0
    %549 = vmatpush.msra.mxu0 0.0
    %550 = vmatpush.msra.mxu0 0.0
    %551 = vmatpush.msra.mxu0 %v534
    %552 = vmatmul.f32.gmra.mxu0 %v531
    %v553 = vpop.f32.mrf.mxu0
    %v554 = vadd.f32 0.0, %v553
    %555 = vdwg.mxu0
    %v557 = vsel %vm112, %v524, 0
    %559 = vmatpush.msra.mxu0 0.0
    %560 = vmatpush.msra.mxu0 0.0
    %561 = vmatpush.msra.mxu0 0.0
    %562 = vmatpush.msra.mxu0 0.0
    %563 = vmatpush.msra.mxu0 0.0
    %564 = vmatpush.msra.mxu0 0.0
    %565 = vmatpush.msra.mxu0 0.0
    %566 = vmatpush.msra.mxu0 0.0
    %567 = vmatpush.msra.mxu0 0.0
    %568 = vmatpush.msra.mxu0 0.0
    %569 = vmatpush.msra.mxu0 0.0
    %570 = vmatpush.msra.mxu0 0.0
    %571 = vmatpush.msra.mxu0 0.0
    %572 = vmatpush.msra.mxu0 0.0
    %573 = vmatpush.msra.mxu0 0.0
    %574 = vmatpush.msra.mxu0 %v557
    %575 = vmatmul.f32.gmra.mxu0 %v531
    %v576 = vpop.f32.mrf.mxu0
    %v577 = vadd.f32 0.0, %v576
    %578 = vdwg.mxu0
    %v579 = vadd.f32 %v528, %v554
    %v580 = vadd.f32 %v528, %v577
    %581 = vrot.lane.b32.xlu0 %v523, 127
    %v582 = vpop.permute.xlu0 %581
    %v584 = vsel %vm108, %v506, 0
    %v586 = vsel %vm112, %v582, 0
    %588 = vmatpush.msra.mxu0 0.0
    %589 = vmatpush.msra.mxu0 0.0
    %590 = vmatpush.msra.mxu0 0.0
    %591 = vmatpush.msra.mxu0 0.0
    %592 = vmatpush.msra.mxu0 0.0
    %593 = vmatpush.msra.mxu0 0.0
    %594 = vmatpush.msra.mxu0 0.0
    %595 = vmatpush.msra.mxu0 0.0
    %596 = vmatpush.msra.mxu0 0.0
    %597 = vmatpush.msra.mxu0 0.0
    %598 = vmatpush.msra.mxu0 0.0
    %599 = vmatpush.msra.mxu0 0.0
    %600 = vmatpush.msra.mxu0 0.0
    %601 = vmatpush.msra.mxu0 0.0
    %602 = vmatpush.msra.mxu0 0.0
    %603 = vmatpush.msra.mxu0 %v586
    %604 = vmatmul.f32.gmra.mxu0 %v584
    %v605 = vpop.f32.mrf.mxu0
    %v606 = vadd.f32 0.0, %v605
    %607 = vdwg.mxu0
    %608 = vrot.lane.b32.xlu0 %v524, 127
    %v609 = vpop.permute.xlu0 %608
    %v610 = vsel %vm112, %v609, 0
    %612 = vmatpush.msra.mxu0 0.0
    %613 = vmatpush.msra.mxu0 0.0
    %614 = vmatpush.msra.mxu0 0.0
    %615 = vmatpush.msra.mxu0 0.0
    %616 = vmatpush.msra.mxu0 0.0
    %617 = vmatpush.msra.mxu0 0.0
    %618 = vmatpush.msra.mxu0 0.0
    %619 = vmatpush.msra.mxu0 0.0
    %620 = vmatpush.msra.mxu0 0.0
    %621 = vmatpush.msra.mxu0 0.0
    %622 = vmatpush.msra.mxu0 0.0
    %623 = vmatpush.msra.mxu0 0.0
    %624 = vmatpush.msra.mxu0 0.0
    %625 = vmatpush.msra.mxu0 0.0
    %626 = vmatpush.msra.mxu0 0.0
    %627 = vmatpush.msra.mxu0 %v610
    %628 = vmatmul.f32.gmra.mxu0 %v584
    %v629 = vpop.f32.mrf.mxu0
    %v630 = vadd.f32 0.0, %v629
    %631 = vdwg.mxu0
    %v632 = vadd.f32 %v579, %v606
    %v633 = vadd.f32 %v580, %v630
    %634 = vrot.lane.b32.xlu0 %v523, 126
    %v635 = vpop.permute.xlu0 %634
    %v637 = vsel %vm108, %v507, 0
    %v639 = vsel %vm112, %v635, 0
    %641 = vmatpush.msra.mxu0 0.0
    %642 = vmatpush.msra.mxu0 0.0
    %643 = vmatpush.msra.mxu0 0.0
    %644 = vmatpush.msra.mxu0 0.0
    %645 = vmatpush.msra.mxu0 0.0
    %646 = vmatpush.msra.mxu0 0.0
    %647 = vmatpush.msra.mxu0 0.0
    %648 = vmatpush.msra.mxu0 0.0
    %649 = vmatpush.msra.mxu0 0.0
    %650 = vmatpush.msra.mxu0 0.0
    %651 = vmatpush.msra.mxu0 0.0
    %652 = vmatpush.msra.mxu0 0.0
    %653 = vmatpush.msra.mxu0 0.0
    %654 = vmatpush.msra.mxu0 0.0
    %655 = vmatpush.msra.mxu0 0.0
    %656 = vmatpush.msra.mxu0 %v639
    %657 = vmatmul.f32.gmra.mxu0 %v637
    %v658 = vpop.f32.mrf.mxu0
    %v659 = vadd.f32 0.0, %v658
    %660 = vdwg.mxu0
    %661 = vrot.lane.b32.xlu0 %v524, 126
    %v662 = vpop.permute.xlu0 %661
    %v663 = vsel %vm112, %v662, 0
    %665 = vmatpush.msra.mxu0 0.0
    %666 = vmatpush.msra.mxu0 0.0
    %667 = vmatpush.msra.mxu0 0.0
    %668 = vmatpush.msra.mxu0 0.0
    %669 = vmatpush.msra.mxu0 0.0
    %670 = vmatpush.msra.mxu0 0.0
    %671 = vmatpush.msra.mxu0 0.0
    %672 = vmatpush.msra.mxu0 0.0
    %673 = vmatpush.msra.mxu0 0.0
    %674 = vmatpush.msra.mxu0 0.0
    %675 = vmatpush.msra.mxu0 0.0
    %676 = vmatpush.msra.mxu0 0.0
    %677 = vmatpush.msra.mxu0 0.0
    %678 = vmatpush.msra.mxu0 0.0
    %679 = vmatpush.msra.mxu0 0.0
    %680 = vmatpush.msra.mxu0 %v663
    %681 = vmatmul.f32.gmra.mxu0 %v637
    %v682 = vpop.f32.mrf.mxu0
    %v683 = vadd.f32 0.0, %v682
    %684 = vdwg.mxu0
    %v685 = vadd.f32 %v632, %v659
    %v686 = vadd.f32 %v633, %v683
    %687 = vrot.lane.b32.xlu0 %v523, 125
    %v688 = vpop.permute.xlu0 %687
    %v690 = vsel %vm108, %v508, 0
    %v692 = vsel %vm112, %v688, 0
    %694 = vmatpush.msra.mxu0 0.0
    %695 = vmatpush.msra.mxu0 0.0
    %696 = vmatpush.msra.mxu0 0.0
    %697 = vmatpush.msra.mxu0 0.0
    %698 = vmatpush.msra.mxu0 0.0
    %699 = vmatpush.msra.mxu0 0.0
    %700 = vmatpush.msra.mxu0 0.0
    %701 = vmatpush.msra.mxu0 0.0
    %702 = vmatpush.msra.mxu0 0.0
    %703 = vmatpush.msra.mxu0 0.0
    %704 = vmatpush.msra.mxu0 0.0
    %705 = vmatpush.msra.mxu0 0.0
    %706 = vmatpush.msra.mxu0 0.0
    %707 = vmatpush.msra.mxu0 0.0
    %708 = vmatpush.msra.mxu0 0.0
    %709 = vmatpush.msra.mxu0 %v692
    %710 = vmatmul.f32.gmra.mxu0 %v690
    %v711 = vpop.f32.mrf.mxu0
    %v712 = vadd.f32 0.0, %v711
    %713 = vdwg.mxu0
    %714 = vrot.lane.b32.xlu0 %v524, 125
    %v715 = vpop.permute.xlu0 %714
    %v716 = vsel %vm112, %v715, 0
    %718 = vmatpush.msra.mxu0 0.0
    %719 = vmatpush.msra.mxu0 0.0
    %720 = vmatpush.msra.mxu0 0.0
    %721 = vmatpush.msra.mxu0 0.0
    %722 = vmatpush.msra.mxu0 0.0
    %723 = vmatpush.msra.mxu0 0.0
    %724 = vmatpush.msra.mxu0 0.0
    %725 = vmatpush.msra.mxu0 0.0
    %726 = vmatpush.msra.mxu0 0.0
    %727 = vmatpush.msra.mxu0 0.0
    %728 = vmatpush.msra.mxu0 0.0
    %729 = vmatpush.msra.mxu0 0.0
    %730 = vmatpush.msra.mxu0 0.0
    %731 = vmatpush.msra.mxu0 0.0
    %732 = vmatpush.msra.mxu0 0.0
    %733 = vmatpush.msra.mxu0 %v716
    %734 = vmatmul.f32.gmra.mxu0 %v690
    %v735 = vpop.f32.mrf.mxu0
    %v736 = vadd.f32 0.0, %v735
    %737 = vdwg.mxu0
    %v738 = vadd.f32 %v685, %v712
    %v739 = vadd.f32 %v686, %v736
    %740 = vrot.lane.b32.xlu0 %v523, 124
    %v741 = vpop.permute.xlu0 %740
    %v743 = vsel %vm108, %v509, 0
    %v745 = vsel %vm112, %v741, 0
    %747 = vmatpush.msra.mxu0 0.0
    %748 = vmatpush.msra.mxu0 0.0
    %749 = vmatpush.msra.mxu0 0.0
    %750 = vmatpush.msra.mxu0 0.0
    %751 = vmatpush.msra.mxu0 0.0
    %752 = vmatpush.msra.mxu0 0.0
    %753 = vmatpush.msra.mxu0 0.0
    %754 = vmatpush.msra.mxu0 0.0
    %755 = vmatpush.msra.mxu0 0.0
    %756 = vmatpush.msra.mxu0 0.0
    %757 = vmatpush.msra.mxu0 0.0
    %758 = vmatpush.msra.mxu0 0.0
    %759 = vmatpush.msra.mxu0 0.0
    %760 = vmatpush.msra.mxu0 0.0
    %761 = vmatpush.msra.mxu0 0.0
    %762 = vmatpush.msra.mxu0 %v745
    %763 = vmatmul.f32.gmra.mxu0 %v743
    %v764 = vpop.f32.mrf.mxu0
    %v765 = vadd.f32 0.0, %v764
    %766 = vdwg.mxu0
    %767 = vrot.lane.b32.xlu0 %v524, 124
    %v768 = vpop.permute.xlu0 %767
    %v769 = vsel %vm112, %v768, 0
    %771 = vmatpush.msra.mxu0 0.0
    %772 = vmatpush.msra.mxu0 0.0
    %773 = vmatpush.msra.mxu0 0.0
    %774 = vmatpush.msra.mxu0 0.0
    %775 = vmatpush.msra.mxu0 0.0
    %776 = vmatpush.msra.mxu0 0.0
    %777 = vmatpush.msra.mxu0 0.0
    %778 = vmatpush.msra.mxu0 0.0
    %779 = vmatpush.msra.mxu0 0.0
    %780 = vmatpush.msra.mxu0 0.0
    %781 = vmatpush.msra.mxu0 0.0
    %782 = vmatpush.msra.mxu0 0.0
    %783 = vmatpush.msra.mxu0 0.0
    %784 = vmatpush.msra.mxu0 0.0
    %785 = vmatpush.msra.mxu0 0.0
    %786 = vmatpush.msra.mxu0 %v769
    %787 = vmatmul.f32.gmra.mxu0 %v743
    %v788 = vpop.f32.mrf.mxu0
    %v789 = vadd.f32 0.0, %v788
    %790 = vdwg.mxu0
    %v791 = vadd.f32 %v738, %v765
    %v792 = vadd.f32 %v739, %v789
    %793 = vrot.lane.b32.xlu0 %v523, 123
    %v794 = vpop.permute.xlu0 %793
    %v796 = vsel %vm108, %v510, 0
    %v798 = vsel %vm112, %v794, 0
    %800 = vmatpush.msra.mxu0 0.0
    %801 = vmatpush.msra.mxu0 0.0
    %802 = vmatpush.msra.mxu0 0.0
    %803 = vmatpush.msra.mxu0 0.0
    %804 = vmatpush.msra.mxu0 0.0
    %805 = vmatpush.msra.mxu0 0.0
    %806 = vmatpush.msra.mxu0 0.0
    %807 = vmatpush.msra.mxu0 0.0
    %808 = vmatpush.msra.mxu0 0.0
    %809 = vmatpush.msra.mxu0 0.0
    %810 = vmatpush.msra.mxu0 0.0
    %811 = vmatpush.msra.mxu0 0.0
    %812 = vmatpush.msra.mxu0 0.0
    %813 = vmatpush.msra.mxu0 0.0
    %814 = vmatpush.msra.mxu0 0.0
    %815 = vmatpush.msra.mxu0 %v798
    %816 = vmatmul.f32.gmra.mxu0 %v796
    %v817 = vpop.f32.mrf.mxu0
    %v818 = vadd.f32 0.0, %v817
    %819 = vdwg.mxu0
    %820 = vrot.lane.b32.xlu0 %v524, 123
    %v821 = vpop.permute.xlu0 %820
    %v822 = vsel %vm112, %v821, 0
    %824 = vmatpush.msra.mxu0 0.0
    %825 = vmatpush.msra.mxu0 0.0
    %826 = vmatpush.msra.mxu0 0.0
    %827 = vmatpush.msra.mxu0 0.0
    %828 = vmatpush.msra.mxu0 0.0
    %829 = vmatpush.msra.mxu0 0.0
    %830 = vmatpush.msra.mxu0 0.0
    %831 = vmatpush.msra.mxu0 0.0
    %832 = vmatpush.msra.mxu0 0.0
    %833 = vmatpush.msra.mxu0 0.0
    %834 = vmatpush.msra.mxu0 0.0
    %835 = vmatpush.msra.mxu0 0.0
    %836 = vmatpush.msra.mxu0 0.0
    %837 = vmatpush.msra.mxu0 0.0
    %838 = vmatpush.msra.mxu0 0.0
    %839 = vmatpush.msra.mxu0 %v822
    %840 = vmatmul.f32.gmra.mxu0 %v796
    %v841 = vpop.f32.mrf.mxu0
    %v842 = vadd.f32 0.0, %v841
    %843 = vdwg.mxu0
    %v844 = vadd.f32 %v791, %v818
    %v845 = vadd.f32 %v792, %v842
    %846 = vrot.lane.b32.xlu0 %v523, 122
    %v847 = vpop.permute.xlu0 %846
    %v849 = vsel %vm108, %v511, 0
    %v851 = vsel %vm112, %v847, 0
    %853 = vmatpush.msra.mxu0 0.0
    %854 = vmatpush.msra.mxu0 0.0
    %855 = vmatpush.msra.mxu0 0.0
    %856 = vmatpush.msra.mxu0 0.0
    %857 = vmatpush.msra.mxu0 0.0
    %858 = vmatpush.msra.mxu0 0.0
    %859 = vmatpush.msra.mxu0 0.0
    %860 = vmatpush.msra.mxu0 0.0
    %861 = vmatpush.msra.mxu0 0.0
    %862 = vmatpush.msra.mxu0 0.0
    %863 = vmatpush.msra.mxu0 0.0
    %864 = vmatpush.msra.mxu0 0.0
    %865 = vmatpush.msra.mxu0 0.0
    %866 = vmatpush.msra.mxu0 0.0
    %867 = vmatpush.msra.mxu0 0.0
    %868 = vmatpush.msra.mxu0 %v851
    %869 = vmatmul.f32.gmra.mxu0 %v849
    %v870 = vpop.f32.mrf.mxu0
    %v871 = vadd.f32 0.0, %v870
    %872 = vdwg.mxu0
    %873 = vrot.lane.b32.xlu0 %v524, 122
    %v874 = vpop.permute.xlu0 %873
    %v875 = vsel %vm112, %v874, 0
    %877 = vmatpush.msra.mxu0 0.0
    %878 = vmatpush.msra.mxu0 0.0
    %879 = vmatpush.msra.mxu0 0.0
    %880 = vmatpush.msra.mxu0 0.0
    %881 = vmatpush.msra.mxu0 0.0
    %882 = vmatpush.msra.mxu0 0.0
    %883 = vmatpush.msra.mxu0 0.0
    %884 = vmatpush.msra.mxu0 0.0
    %885 = vmatpush.msra.mxu0 0.0
    %886 = vmatpush.msra.mxu0 0.0
    %887 = vmatpush.msra.mxu0 0.0
    %888 = vmatpush.msra.mxu0 0.0
    %889 = vmatpush.msra.mxu0 0.0
    %890 = vmatpush.msra.mxu0 0.0
    %891 = vmatpush.msra.mxu0 0.0
    %892 = vmatpush.msra.mxu0 %v875
    %893 = vmatmul.f32.gmra.mxu0 %v849
    %v894 = vpop.f32.mrf.mxu0
    %v895 = vadd.f32 0.0, %v894
    %896 = vdwg.mxu0
    %v897 = vadd.f32 %v844, %v871
    %v898 = vadd.f32 %v845, %v895
    %v899 = vld [vmem:[%s7] sm:$0xff]
    %v900 = vld [vmem:[%s7 + $0x8] sm:$0xff]
    %v901 = vld [vmem:[%s7 + $0x10] sm:$0xff]
    %v902 = vld [vmem:[%s7 + $0x18] sm:$0x3]
    %905 = vrot.lane.b32.xlu0 %v339, 127
    %v906 = vpop.permute.xlu0 %905
    %907 = vrot.lane.b32.xlu0 %v340, 127
    %v908 = vpop.permute.xlu0 %907
    %v911 = vmax.f32 %v339, %v906
    %v912 = vmax.f32 %v340, %v908
    %915 = vrot.lane.b32.xlu0 %v503, 127
    %v916 = vpop.permute.xlu0 %915
    %917 = vrot.lane.b32.xlu0 %v504, 127
    %v918 = vpop.permute.xlu0 %917
    %v921 = vmax.f32 %v503, %v916
    %v922 = vmax.f32 %v504, %v918
    %v924 = vrot.slane %v900, 2
    %vm925 = vcmask 31744
    %v927 = vsel %vm925, %v921, 0
    %vm929 = vcmask 1043456
    %v930 = vsel %vm929, %v924, 0
    %932 = vmatpush.msra.mxu0 0.0
    %933 = vmatpush.msra.mxu0 0.0
    %934 = vmatpush.msra.mxu0 0.0
    %935 = vmatpush.msra.mxu0 0.0
    %936 = vmatpush.msra.mxu0 0.0
    %937 = vmatpush.msra.mxu0 0.0
    %938 = vmatpush.msra.mxu0 0.0
    %939 = vmatpush.msra.mxu0 0.0
    %940 = vmatpush.msra.mxu0 0.0
    %941 = vmatpush.msra.mxu0 0.0
    %942 = vmatpush.msra.mxu0 0.0
    %943 = vmatpush.msra.mxu0 0.0
    %944 = vmatpush.msra.mxu0 0.0
    %945 = vmatpush.msra.mxu0 0.0
    %946 = vmatpush.msra.mxu0 0.0
    %947 = vmatpush.msra.mxu0 %v930
    %948 = vmatmul.f32.gmra.mxu0 %v927
    %v949 = vpop.f32.mrf.mxu0
    %v950 = vadd.f32 0.0, %v949
    %951 = vdwg.mxu0
    %v953 = vsel %vm925, %v922, 0
    %955 = vmatpush.msra.mxu0 0.0
    %956 = vmatpush.msra.mxu0 0.0
    %957 = vmatpush.msra.mxu0 0.0
    %958 = vmatpush.msra.mxu0 0.0
    %959 = vmatpush.msra.mxu0 0.0
    %960 = vmatpush.msra.mxu0 0.0
    %961 = vmatpush.msra.mxu0 0.0
    %962 = vmatpush.msra.mxu0 0.0
    %963 = vmatpush.msra.mxu0 0.0
    %964 = vmatpush.msra.mxu0 0.0
    %965 = vmatpush.msra.mxu0 0.0
    %966 = vmatpush.msra.mxu0 0.0
    %967 = vmatpush.msra.mxu0 0.0
    %968 = vmatpush.msra.mxu0 0.0
    %969 = vmatpush.msra.mxu0 0.0
    %970 = vmatpush.msra.mxu0 %v930
    %971 = vmatmul.f32.gmra.mxu0 %v953
    %v972 = vpop.f32.mrf.mxu0
    %v973 = vadd.f32 0.0, %v972
    %974 = vdwg.mxu0
    %vm975 = vcmask 80896
    %v977 = vsel %vm975, %v911, 0
    %vm979 = vcmask 1041408
    %v980 = vsel %vm979, %v900, 0
    %982 = vmatpush.msra.mxu0 0.0
    %983 = vmatpush.msra.mxu0 0.0
    %984 = vmatpush.msra.mxu0 0.0
    %985 = vmatpush.msra.mxu0 0.0
    %986 = vmatpush.msra.mxu0 0.0
    %987 = vmatpush.msra.mxu0 0.0
    %988 = vmatpush.msra.mxu0 0.0
    %989 = vmatpush.msra.mxu0 0.0
    %990 = vmatpush.msra.mxu0 0.0
    %991 = vmatpush.msra.mxu0 0.0
    %992 = vmatpush.msra.mxu0 0.0
    %993 = vmatpush.msra.mxu0 0.0
    %994 = vmatpush.msra.mxu0 0.0
    %995 = vmatpush.msra.mxu0 0.0
    %996 = vmatpush.msra.mxu0 %v980
    %997 = vmatpush.msra.mxu0 %v899
    %998 = vmatmul.f32.gmra.mxu0 %v977
    %v999 = vpop.f32.mrf.mxu0
    %v1000 = vadd.f32 %v950, %v999
    %1001 = vdwg.mxu0
    %v1003 = vsel %vm975, %v912, 0
    %1005 = vmatpush.msra.mxu0 0.0
    %1006 = vmatpush.msra.mxu0 0.0
    %1007 = vmatpush.msra.mxu0 0.0
    %1008 = vmatpush.msra.mxu0 0.0
    %1009 = vmatpush.msra.mxu0 0.0
    %1010 = vmatpush.msra.mxu0 0.0
    %1011 = vmatpush.msra.mxu0 0.0
    %1012 = vmatpush.msra.mxu0 0.0
    %1013 = vmatpush.msra.mxu0 0.0
    %1014 = vmatpush.msra.mxu0 0.0
    %1015 = vmatpush.msra.mxu0 0.0
    %1016 = vmatpush.msra.mxu0 0.0
    %1017 = vmatpush.msra.mxu0 0.0
    %1018 = vmatpush.msra.mxu0 0.0
    %1019 = vmatpush.msra.mxu0 %v980
    %1020 = vmatpush.msra.mxu0 %v899
    %1021 = vmatmul.f32.gmra.mxu0 %v1003
    %v1022 = vpop.f32.mrf.mxu0
    %v1023 = vadd.f32 %v973, %v1022
    %1024 = vdwg.mxu0
    %1027 = vrot.lane.b32.xlu0 %v897, 127
    %v1028 = vpop.permute.xlu0 %1027
    %1029 = vrot.lane.b32.xlu0 %v898, 127
    %v1030 = vpop.permute.xlu0 %1029
    %v1033 = vmax.f32 %v897, %v1028
    %v1034 = vmax.f32 %v898, %v1030
    %v1037 = vrot.slane %v900, 6
    %v1038 = vrot.slane %v901, 6
    %v1039 = vsel %vm979, %v1037, %v1038
    %v1040 = vrot.slane %v902, 6
    %v1041 = vsel %vm979, %v1038, %v1040
    %vm1043 = vcmask 97280
    %v1045 = vsel %vm1043, %v1033, 0
    %v1047 = vsel %vm929, %v1041, 0
    %1049 = vmatpush.msra.mxu0 0.0
    %1050 = vmatpush.msra.mxu0 0.0
    %1051 = vmatpush.msra.mxu0 0.0
    %1052 = vmatpush.msra.mxu0 0.0
    %1053 = vmatpush.msra.mxu0 0.0
    %1054 = vmatpush.msra.mxu0 0.0
    %1055 = vmatpush.msra.mxu0 0.0
    %1056 = vmatpush.msra.mxu0 0.0
    %1057 = vmatpush.msra.mxu0 0.0
    %1058 = vmatpush.msra.mxu0 0.0
    %1059 = vmatpush.msra.mxu0 0.0
    %1060 = vmatpush.msra.mxu0 0.0
    %1061 = vmatpush.msra.mxu0 0.0
    %1062 = vmatpush.msra.mxu0 0.0
    %1063 = vmatpush.msra.mxu0 %v1047
    %1064 = vmatpush.msra.mxu0 %v1039
    %1065 = vmatmul.f32.gmra.mxu0 %v1045
    %v1066 = vpop.f32.mrf.mxu0
    %v1067 = vadd.f32 0.0, %v1066
    %1068 = vdwg.mxu0
    %v1070 = vsel %vm1043, %v1034, 0
    %1072 = vmatpush.msra.mxu0 0.0
    %1073 = vmatpush.msra.mxu0 0.0
    %1074 = vmatpush.msra.mxu0 0.0
    %1075 = vmatpush.msra.mxu0 0.0
    %1076 = vmatpush.msra.mxu0 0.0
    %1077 = vmatpush.msra.mxu0 0.0
    %1078 = vmatpush.msra.mxu0 0.0
    %1079 = vmatpush.msra.mxu0 0.0
    %1080 = vmatpush.msra.mxu0 0.0
    %1081 = vmatpush.msra.mxu0 0.0
    %1082 = vmatpush.msra.mxu0 0.0
    %1083 = vmatpush.msra.mxu0 0.0
    %1084 = vmatpush.msra.mxu0 0.0
    %1085 = vmatpush.msra.mxu0 0.0
    %1086 = vmatpush.msra.mxu0 %v1047
    %1087 = vmatpush.msra.mxu0 %v1039
    %1088 = vmatmul.f32.gmra.mxu0 %v1070
    %v1089 = vpop.f32.mrf.mxu0
    %v1090 = vadd.f32 0.0, %v1089
    %1091 = vdwg.mxu0
    %v1092 = vadd.f32 %v1000, %v1067
    %v1093 = vadd.f32 %v1023, %v1090
    %v1094 = vld [vmem:[%s8] sm:$0x1]
    %v1096 = vperm.slane %v1094, 0
    %v1098 = vadd.f32 %v1092, %v1096
    %v1099 = vadd.f32 %v1093, %v1096
    %v1100 = vmax.f32 %v1098, 0.0
    %v1101 = vmax.f32 %v1099, 0.0
    %v1102 = vld [vmem:[%s9] sm:$0xff]
    %v1103 = vld [vmem:[%s9 + $0x8] sm:$0x3]
    %v1104 = vld [vmem:[#allocation5] sm:$0xff]
    %v1105 = vld [vmem:[#allocation5 + $0x8] sm:$0xff]
    %v1106 = vld [vmem:[#allocation5 + $0x10] sm:$0xff]
    %v1107 = vld [vmem:[#allocation5 + $0x18] sm:$0xff]
    %v1108 = vld [vmem:[#allocation5 + $0x20] sm:$0xff]
    %v1109 = vld [vmem:[#allocation5 + $0x28] sm:$0xff]
    %v1110 = vld [vmem:[#allocation5 + $0x30] sm:$0xff]
    %v1111 = vld [vmem:[#allocation5 + $0x38] sm:$0xff]
    %v1112 = vld [vmem:[#allocation5 + $0x40] sm:$0xff]
    %v1113 = vld [vmem:[#allocation5 + $0x48] sm:$0xff]
    %v1114 = vld [vmem:[#allocation5 + $0x50] sm:$0xff]
    %v1115 = vld [vmem:[#allocation5 + $0x58] sm:$0xff]
    %v1116 = vld [vmem:[#allocation5 + $0x60] sm:$0xff]
    %v1117 = vld [vmem:[#allocation5 + $0x68] sm:$0xff]
    %v1118 = vld [vmem:[#allocation5 + $0x70] sm:$0xff]
    %v1119 = vld [vmem:[#allocation5 + $0x78] sm:$0xff]
    %v1120 = vld [vmem:[#allocation5 + $0x80] sm:$0xff]
    %v1121 = vld [vmem:[#allocation5 + $0x88] sm:$0xff]
    %v1122 = vld [vmem:[#allocation5 + $0x90] sm:$0xff]
    %v1123 = vld [vmem:[#allocation5 + $0x98] sm:$0xff]
    %v1124 = vld [vmem:[#allocation5 + $0xa0] sm:$0xff]
    %v1125 = vld [vmem:[#allocation5 + $0xa8] sm:$0xff]
    %v1126 = vld [vmem:[#allocation5 + $0xb0] sm:$0xff]
    %v1127 = vld [vmem:[#allocation5 + $0xb8] sm:$0xff]
    %v1128 = vld [vmem:[#allocation5 + $0xc0] sm:$0xff]
    %v1129 = vld [vmem:[#allocation5 + $0xc8] sm:$0xff]
    %v1130 = vld [vmem:[#allocation5 + $0xd0] sm:$0xff]
    %v1131 = vld [vmem:[#allocation5 + $0xd8] sm:$0xff]
    %v1132 = vld [vmem:[#allocation5 + $0xe0] sm:$0xff]
    %v1133 = vld [vmem:[#allocation5 + $0xe8] sm:$0xff]
    %v1134 = vld [vmem:[#allocation5 + $0xf0] sm:$0xff]
    %v1135 = vld [vmem:[#allocation5 + $0xf8] sm:$0xff]
    %v1136 = vld [vmem:[#allocation5 + $0x100] sm:$0xff]
    %v1137 = vld [vmem:[#allocation5 + $0x108] sm:$0xff]
    %v1138 = vld [vmem:[#allocation5 + $0x110] sm:$0xff]
    %v1139 = vld [vmem:[#allocation5 + $0x118] sm:$0xff]
    %v1140 = vld [vmem:[#allocation5 + $0x120] sm:$0xff]
    %v1141 = vld [vmem:[#allocation5 + $0x128] sm:$0xff]
    %v1142 = vld [vmem:[#allocation5 + $0x130] sm:$0xff]
    %v1143 = vld [vmem:[#allocation5 + $0x138] sm:$0xff]
    %v1144 = vld [vmem:[#allocation5 + $0x140] sm:$0xff]
    %v1145 = vld [vmem:[#allocation5 + $0x148] sm:$0xff]
    %v1146 = vld [vmem:[#allocation5 + $0x150] sm:$0xff]
    %v1147 = vld [vmem:[#allocation5 + $0x158] sm:$0xff]
    %v1148 = vld [vmem:[#allocation5 + $0x160] sm:$0xff]
    %v1149 = vld [vmem:[#allocation5 + $0x168] sm:$0xff]
    %v1150 = vld [vmem:[#allocation5 + $0x170] sm:$0xff]
    %v1151 = vld [vmem:[#allocation5 + $0x178] sm:$0xff]
    %v1152 = vld [vmem:[#allocation5 + $0x180] sm:$0xff]
    %v1153 = vld [vmem:[#allocation5 + $0x188] sm:$0xff]
    %v1154 = vld [vmem:[#allocation5 + $0x190] sm:$0xff]
    %v1155 = vld [vmem:[#allocation5 + $0x198] sm:$0xff]
    %v1156 = vld [vmem:[#allocation5 + $0x1a0] sm:$0xff]
    %v1157 = vld [vmem:[#allocation5 + $0x1a8] sm:$0xff]
    %v1158 = vld [vmem:[#allocation5 + $0x1b0] sm:$0xff]
    %v1159 = vld [vmem:[#allocation5 + $0x1b8] sm:$0xff]
    %v1160 = vld [vmem:[#allocation5 + $0x1c0] sm:$0xff]
    %v1161 = vld [vmem:[#allocation5 + $0x1c8] sm:$0xff]
    %v1162 = vld [vmem:[#allocation5 + $0x1d0] sm:$0xff]
    %v1163 = vld [vmem:[#allocation5 + $0x1d8] sm:$0xff]
    %v1164 = vld [vmem:[#allocation5 + $0x1e0] sm:$0xff]
    %v1165 = vld [vmem:[#allocation5 + $0x1e8] sm:$0xff]
    %v1166 = vld [vmem:[#allocation5 + $0x1f0] sm:$0xff]
    %v1167 = vld [vmem:[#allocation5 + $0x1f8] sm:$0xff]
    %v1168 = vld [vmem:[#allocation5 + $0x200] sm:$0xff]
    %v1169 = vld [vmem:[#allocation5 + $0x208] sm:$0xff]
    %v1170 = vld [vmem:[#allocation5 + $0x210] sm:$0xff]
    %v1171 = vld [vmem:[#allocation5 + $0x218] sm:$0xff]
    %v1172 = vld [vmem:[#allocation5 + $0x220] sm:$0xff]
    %v1173 = vld [vmem:[#allocation5 + $0x228] sm:$0xff]
    %v1174 = vld [vmem:[#allocation5 + $0x230] sm:$0xff]
    %v1175 = vld [vmem:[#allocation5 + $0x238] sm:$0xff]
    %v1176 = vld [vmem:[#allocation5 + $0x240] sm:$0xff]
    %v1177 = vld [vmem:[#allocation5 + $0x248] sm:$0xff]
    %v1178 = vld [vmem:[#allocation5 + $0x250] sm:$0xff]
    %v1179 = vld [vmem:[#allocation5 + $0x258] sm:$0xff]
    %v1180 = vld [vmem:[#allocation5 + $0x260] sm:$0xff]
    %v1181 = vld [vmem:[#allocation5 + $0x268] sm:$0xff]
    %v1182 = vld [vmem:[#allocation5 + $0x270] sm:$0xff]
    %v1183 = vld [vmem:[#allocation5 + $0x278] sm:$0xff]
    %v1184 = vld [vmem:[#allocation5 + $0x280] sm:$0xff]
    %v1185 = vld [vmem:[#allocation5 + $0x288] sm:$0xff]
    %v1186 = vld [vmem:[#allocation5 + $0x290] sm:$0xff]
    %v1187 = vld [vmem:[#allocation5 + $0x298] sm:$0xff]
    %v1188 = vld [vmem:[#allocation5 + $0x2a0] sm:$0xff]
    %v1189 = vld [vmem:[#allocation5 + $0x2a8] sm:$0xff]
    %v1190 = vld [vmem:[#allocation5 + $0x2b0] sm:$0xff]
    %v1191 = vld [vmem:[#allocation5 + $0x2b8] sm:$0xff]
    %v1192 = vld [vmem:[#allocation5 + $0x2c0] sm:$0xff]
    %v1193 = vld [vmem:[#allocation5 + $0x2c8] sm:$0xff]
    %v1194 = vld [vmem:[#allocation5 + $0x2d0] sm:$0xff]
    %v1195 = vld [vmem:[#allocation5 + $0x2d8] sm:$0xff]
    %v1196 = vld [vmem:[#allocation5 + $0x2e0] sm:$0xff]
    %v1197 = vld [vmem:[#allocation5 + $0x2e8] sm:$0xff]
    %v1198 = vld [vmem:[#allocation5 + $0x2f0] sm:$0xff]
    %v1199 = vld [vmem:[#allocation5 + $0x2f8] sm:$0xff]
    %v1200 = vld [vmem:[#allocation5 + $0x300] sm:$0xff]
    %v1201 = vld [vmem:[#allocation5 + $0x308] sm:$0xff]
    %v1202 = vld [vmem:[#allocation5 + $0x310] sm:$0xff]
    %v1203 = vld [vmem:[#allocation5 + $0x318] sm:$0xff]
    %v1204 = vld [vmem:[#allocation3] sm:$0xff]
    %v1205 = vld [vmem:[#allocation3 + $0x8] sm:$0xff]
    %v1206 = vld [vmem:[#allocation3 + $0x10] sm:$0xff]
    %v1207 = vld [vmem:[#allocation3 + $0x18] sm:$0xff]
    %v1208 = vld [vmem:[#allocation3 + $0x20] sm:$0xff]
    %v1209 = vld [vmem:[#allocation3 + $0x28] sm:$0xff]
    %v1210 = vld [vmem:[#allocation3 + $0x30] sm:$0xff]
    %v1211 = vld [vmem:[#allocation3 + $0x38] sm:$0xff]
    %v1212 = vld [vmem:[#allocation3 + $0x40] sm:$0xff]
    %v1213 = vld [vmem:[#allocation3 + $0x48] sm:$0xff]
    %v1214 = vld [vmem:[#allocation3 + $0x50] sm:$0xff]
    %v1215 = vld [vmem:[#allocation3 + $0x58] sm:$0xff]
    %v1216 = vld [vmem:[#allocation3 + $0x60] sm:$0xff]
    %v1217 = vld [vmem:[#allocation3 + $0x68] sm:$0xff]
    %v1218 = vld [vmem:[#allocation3 + $0x70] sm:$0xff]
    %v1219 = vld [vmem:[#allocation3 + $0x78] sm:$0xff]
    %v1220 = vld [vmem:[#allocation3 + $0x80] sm:$0xff]
    %v1221 = vld [vmem:[#allocation3 + $0x88] sm:$0xff]
    %v1222 = vld [vmem:[#allocation3 + $0x90] sm:$0xff]
    %v1223 = vld [vmem:[#allocation3 + $0x98] sm:$0xff]
    %v1224 = vld [vmem:[#allocation3 + $0xa0] sm:$0xff]
    %v1225 = vld [vmem:[#allocation3 + $0xa8] sm:$0xff]
    %v1226 = vld [vmem:[#allocation3 + $0xb0] sm:$0xff]
    %v1227 = vld [vmem:[#allocation3 + $0xb8] sm:$0xff]
    %v1228 = vld [vmem:[#allocation3 + $0xc0] sm:$0xff]
    %v1229 = vld [vmem:[#allocation3 + $0xc8] sm:$0xff]
    %v1230 = vld [vmem:[#allocation3 + $0xd0] sm:$0xff]
    %v1231 = vld [vmem:[#allocation3 + $0xd8] sm:$0xff]
    %v1232 = vld [vmem:[#allocation3 + $0xe0] sm:$0xff]
    %v1233 = vld [vmem:[#allocation3 + $0xe8] sm:$0xff]
    %v1234 = vld [vmem:[#allocation3 + $0xf0] sm:$0xff]
    %v1235 = vld [vmem:[#allocation3 + $0xf8] sm:$0xff]
    %v1236 = vld [vmem:[#allocation3 + $0x100] sm:$0xff]
    %v1237 = vld [vmem:[#allocation3 + $0x108] sm:$0xff]
    %v1238 = vld [vmem:[#allocation3 + $0x110] sm:$0xff]
    %v1239 = vld [vmem:[#allocation3 + $0x118] sm:$0xff]
    %v1240 = vld [vmem:[#allocation3 + $0x120] sm:$0xff]
    %v1241 = vld [vmem:[#allocation3 + $0x128] sm:$0xff]
    %v1242 = vld [vmem:[#allocation3 + $0x130] sm:$0xff]
    %v1243 = vld [vmem:[#allocation3 + $0x138] sm:$0xff]
    %v1244 = vld [vmem:[#allocation3 + $0x140] sm:$0xff]
    %v1245 = vld [vmem:[#allocation3 + $0x148] sm:$0xff]
    %v1246 = vld [vmem:[#allocation3 + $0x150] sm:$0xff]
    %v1247 = vld [vmem:[#allocation3 + $0x158] sm:$0xff]
    %v1248 = vld [vmem:[#allocation3 + $0x160] sm:$0xff]
    %v1249 = vld [vmem:[#allocation3 + $0x168] sm:$0xff]
    %v1250 = vld [vmem:[#allocation3 + $0x170] sm:$0xff]
    %v1251 = vld [vmem:[#allocation3 + $0x178] sm:$0xff]
    %v1252 = vld [vmem:[#allocation3 + $0x180] sm:$0xff]
    %v1253 = vld [vmem:[#allocation3 + $0x188] sm:$0xff]
    %v1254 = vld [vmem:[#allocation3 + $0x190] sm:$0xff]
    %v1255 = vld [vmem:[#allocation3 + $0x198] sm:$0xff]
    %v1256 = vld [vmem:[#allocation3 + $0x1a0] sm:$0xff]
    %v1257 = vld [vmem:[#allocation3 + $0x1a8] sm:$0xff]
    %v1258 = vld [vmem:[#allocation3 + $0x1b0] sm:$0xff]
    %v1259 = vld [vmem:[#allocation3 + $0x1b8] sm:$0xff]
    %v1260 = vld [vmem:[#allocation3 + $0x1c0] sm:$0xff]
    %v1261 = vld [vmem:[#allocation3 + $0x1c8] sm:$0xff]
    %v1262 = vld [vmem:[#allocation3 + $0x1d0] sm:$0xff]
    %v1263 = vld [vmem:[#allocation3 + $0x1d8] sm:$0xff]
    %v1264 = vld [vmem:[#allocation3 + $0x1e0] sm:$0xff]
    %v1265 = vld [vmem:[#allocation3 + $0x1e8] sm:$0xff]
    %v1266 = vld [vmem:[#allocation3 + $0x1f0] sm:$0xff]
    %v1267 = vld [vmem:[#allocation3 + $0x1f8] sm:$0xff]
    %v1268 = vld [vmem:[#allocation3 + $0x200] sm:$0xff]
    %v1269 = vld [vmem:[#allocation3 + $0x208] sm:$0xff]
    %v1270 = vld [vmem:[#allocation3 + $0x210] sm:$0xff]
    %v1271 = vld [vmem:[#allocation3 + $0x218] sm:$0xff]
    %v1272 = vld [vmem:[#allocation3 + $0x220] sm:$0xff]
    %v1273 = vld [vmem:[#allocation3 + $0x228] sm:$0xff]
    %v1274 = vld [vmem:[#allocation3 + $0x230] sm:$0xff]
    %v1275 = vld [vmem:[#allocation3 + $0x238] sm:$0xff]
    %v1276 = vld [vmem:[#allocation3 + $0x240] sm:$0xff]
    %v1277 = vld [vmem:[#allocation3 + $0x248] sm:$0xff]
    %v1278 = vld [vmem:[#allocation3 + $0x250] sm:$0xff]
    %v1279 = vld [vmem:[#allocation3 + $0x258] sm:$0xff]
    %v1280 = vld [vmem:[#allocation3 + $0x260] sm:$0xff]
    %v1281 = vld [vmem:[#allocation3 + $0x268] sm:$0xff]
    %v1282 = vld [vmem:[#allocation3 + $0x270] sm:$0xff]
    %v1283 = vld [vmem:[#allocation3 + $0x278] sm:$0xff]
    %v1284 = vld [vmem:[#allocation3 + $0x280] sm:$0xff]
    %v1285 = vld [vmem:[#allocation3 + $0x288] sm:$0xff]
    %v1286 = vld [vmem:[#allocation3 + $0x290] sm:$0xff]
    %v1287 = vld [vmem:[#allocation3 + $0x298] sm:$0xff]
    %v1288 = vld [vmem:[#allocation3 + $0x2a0] sm:$0xff]
    %v1289 = vld [vmem:[#allocation3 + $0x2a8] sm:$0xff]
    %v1290 = vld [vmem:[#allocation3 + $0x2b0] sm:$0xff]
    %v1291 = vld [vmem:[#allocation3 + $0x2b8] sm:$0xff]
    %v1292 = vld [vmem:[#allocation3 + $0x2c0] sm:$0xff]
    %v1293 = vld [vmem:[#allocation3 + $0x2c8] sm:$0xff]
    %v1294 = vld [vmem:[#allocation3 + $0x2d0] sm:$0xff]
    %v1295 = vld [vmem:[#allocation3 + $0x2d8] sm:$0xff]
    %v1296 = vld [vmem:[#allocation3 + $0x2e0] sm:$0xff]
    %v1297 = vld [vmem:[#allocation3 + $0x2e8] sm:$0xff]
    %v1298 = vld [vmem:[#allocation3 + $0x2f0] sm:$0xff]
    %v1299 = vld [vmem:[#allocation3 + $0x2f8] sm:$0xff]
    %v1300 = vld [vmem:[#allocation3 + $0x300] sm:$0xff]
    %v1301 = vld [vmem:[#allocation3 + $0x308] sm:$0xff]
    %v1302 = vld [vmem:[#allocation3 + $0x310] sm:$0xff]
    %v1303 = vld [vmem:[#allocation3 + $0x318] sm:$0xff]
    %s1304 = scalar_lea.vmem [#allocation3], 800
    %v1305 = vld [vmem:[%s1304] sm:$0xff]
    %v1306 = vld [vmem:[%s1304 + $0x8] sm:$0xff]
    %v1307 = vld [vmem:[%s1304 + $0x10] sm:$0xff]
    %v1308 = vld [vmem:[%s1304 + $0x18] sm:$0xff]
    %v1309 = vld [vmem:[%s1304 + $0x20] sm:$0xff]
    %v1310 = vld [vmem:[%s1304 + $0x28] sm:$0xff]
    %v1311 = vld [vmem:[%s1304 + $0x30] sm:$0xff]
    %v1312 = vld [vmem:[%s1304 + $0x38] sm:$0xff]
    %v1313 = vld [vmem:[%s1304 + $0x40] sm:$0xff]
    %v1314 = vld [vmem:[%s1304 + $0x48] sm:$0xff]
    %v1315 = vld [vmem:[%s1304 + $0x50] sm:$0xff]
    %v1316 = vld [vmem:[%s1304 + $0x58] sm:$0xff]
    %v1317 = vld [vmem:[%s1304 + $0x60] sm:$0xff]
    %v1318 = vld [vmem:[%s1304 + $0x68] sm:$0xff]
    %v1319 = vld [vmem:[%s1304 + $0x70] sm:$0xff]
    %v1320 = vld [vmem:[%s1304 + $0x78] sm:$0xff]
    %v1321 = vld [vmem:[%s1304 + $0x80] sm:$0xff]
    %v1322 = vld [vmem:[%s1304 + $0x88] sm:$0xff]
    %v1323 = vld [vmem:[%s1304 + $0x90] sm:$0xff]
    %v1324 = vld [vmem:[%s1304 + $0x98] sm:$0xff]
    %v1325 = vld [vmem:[%s1304 + $0xa0] sm:$0xff]
    %v1326 = vld [vmem:[%s1304 + $0xa8] sm:$0xff]
    %v1327 = vld [vmem:[%s1304 + $0xb0] sm:$0xff]
    %v1328 = vld [vmem:[%s1304 + $0xb8] sm:$0xff]
    %v1329 = vld [vmem:[%s1304 + $0xc0] sm:$0xff]
    %v1330 = vld [vmem:[%s1304 + $0xc8] sm:$0xff]
    %v1331 = vld [vmem:[%s1304 + $0xd0] sm:$0xff]
    %v1332 = vld [vmem:[%s1304 + $0xd8] sm:$0xff]
    %v1333 = vld [vmem:[%s1304 + $0xe0] sm:$0xff]
    %v1334 = vld [vmem:[%s1304 + $0xe8] sm:$0xff]
    %v1335 = vld [vmem:[%s1304 + $0xf0] sm:$0xff]
    %v1336 = vld [vmem:[%s1304 + $0xf8] sm:$0xff]
    %v1337 = vld [vmem:[%s1304 + $0x100] sm:$0xff]
    %v1338 = vld [vmem:[%s1304 + $0x108] sm:$0xff]
    %v1339 = vld [vmem:[%s1304 + $0x110] sm:$0xff]
    %v1340 = vld [vmem:[%s1304 + $0x118] sm:$0xff]
    %v1341 = vld [vmem:[%s1304 + $0x120] sm:$0xff]
    %v1342 = vld [vmem:[%s1304 + $0x128] sm:$0xff]
    %v1343 = vld [vmem:[%s1304 + $0x130] sm:$0xff]
    %v1344 = vld [vmem:[%s1304 + $0x138] sm:$0xff]
    %v1345 = vld [vmem:[%s1304 + $0x140] sm:$0xff]
    %v1346 = vld [vmem:[%s1304 + $0x148] sm:$0xff]
    %v1347 = vld [vmem:[%s1304 + $0x150] sm:$0xff]
    %v1348 = vld [vmem:[%s1304 + $0x158] sm:$0xff]
    %v1349 = vld [vmem:[%s1304 + $0x160] sm:$0xff]
    %v1350 = vld [vmem:[%s1304 + $0x168] sm:$0xff]
    %v1351 = vld [vmem:[%s1304 + $0x170] sm:$0xff]
    %v1352 = vld [vmem:[%s1304 + $0x178] sm:$0xff]
    %v1353 = vld [vmem:[%s1304 + $0x180] sm:$0xff]
    %v1354 = vld [vmem:[%s1304 + $0x188] sm:$0xff]
    %v1355 = vld [vmem:[%s1304 + $0x190] sm:$0xff]
    %v1356 = vld [vmem:[%s1304 + $0x198] sm:$0xff]
    %v1357 = vld [vmem:[%s1304 + $0x1a0] sm:$0xff]
    %v1358 = vld [vmem:[%s1304 + $0x1a8] sm:$0xff]
    %v1359 = vld [vmem:[%s1304 + $0x1b0] sm:$0xff]
    %v1360 = vld [vmem:[%s1304 + $0x1b8] sm:$0xff]
    %v1361 = vld [vmem:[%s1304 + $0x1c0] sm:$0xff]
    %v1362 = vld [vmem:[%s1304 + $0x1c8] sm:$0xff]
    %v1363 = vld [vmem:[%s1304 + $0x1d0] sm:$0xff]
    %v1364 = vld [vmem:[%s1304 + $0x1d8] sm:$0xff]
    %v1365 = vld [vmem:[%s1304 + $0x1e0] sm:$0xff]
    %v1366 = vld [vmem:[%s1304 + $0x1e8] sm:$0xff]
    %v1367 = vld [vmem:[%s1304 + $0x1f0] sm:$0xff]
    %v1368 = vld [vmem:[%s1304 + $0x1f8] sm:$0xff]
    %v1369 = vld [vmem:[%s1304 + $0x200] sm:$0xff]
    %v1370 = vld [vmem:[%s1304 + $0x208] sm:$0xff]
    %v1371 = vld [vmem:[%s1304 + $0x210] sm:$0xff]
    %v1372 = vld [vmem:[%s1304 + $0x218] sm:$0xff]
    %v1373 = vld [vmem:[%s1304 + $0x220] sm:$0xff]
    %v1374 = vld [vmem:[%s1304 + $0x228] sm:$0xff]
    %v1375 = vld [vmem:[%s1304 + $0x230] sm:$0xff]
    %v1376 = vld [vmem:[%s1304 + $0x238] sm:$0xff]
    %v1377 = vld [vmem:[%s1304 + $0x240] sm:$0xff]
    %v1378 = vld [vmem:[%s1304 + $0x248] sm:$0xff]
    %v1379 = vld [vmem:[%s1304 + $0x250] sm:$0xff]
    %v1380 = vld [vmem:[%s1304 + $0x258] sm:$0xff]
    %v1381 = vld [vmem:[%s1304 + $0x260] sm:$0xff]
    %v1382 = vld [vmem:[%s1304 + $0x268] sm:$0xff]
    %v1383 = vld [vmem:[%s1304 + $0x270] sm:$0xff]
    %v1384 = vld [vmem:[%s1304 + $0x278] sm:$0xff]
    %v1385 = vld [vmem:[%s1304 + $0x280] sm:$0xff]
    %v1386 = vld [vmem:[%s1304 + $0x288] sm:$0xff]
    %v1387 = vld [vmem:[%s1304 + $0x290] sm:$0xff]
    %v1388 = vld [vmem:[%s1304 + $0x298] sm:$0xff]
    %v1389 = vld [vmem:[%s1304 + $0x2a0] sm:$0xff]
    %v1390 = vld [vmem:[%s1304 + $0x2a8] sm:$0xff]
    %v1391 = vld [vmem:[%s1304 + $0x2b0] sm:$0xff]
    %v1392 = vld [vmem:[%s1304 + $0x2b8] sm:$0xff]
    %v1393 = vld [vmem:[%s1304 + $0x2c0] sm:$0xff]
    %v1394 = vld [vmem:[%s1304 + $0x2c8] sm:$0xff]
    %v1395 = vld [vmem:[%s1304 + $0x2d0] sm:$0xff]
    %v1396 = vld [vmem:[%s1304 + $0x2d8] sm:$0xff]
    %v1397 = vld [vmem:[%s1304 + $0x2e0] sm:$0xff]
    %v1398 = vld [vmem:[%s1304 + $0x2e8] sm:$0xff]
    %v1399 = vld [vmem:[%s1304 + $0x2f0] sm:$0xff]
    %v1400 = vld [vmem:[%s1304 + $0x2f8] sm:$0xff]
    %v1401 = vld [vmem:[%s1304 + $0x300] sm:$0xff]
    %v1402 = vld [vmem:[%s1304 + $0x308] sm:$0xff]
    %v1403 = vld [vmem:[%s1304 + $0x310] sm:$0xff]
    %v1404 = vld [vmem:[%s1304 + $0x318] sm:$0xff]
    %v1405 = vld [vmem:[%s12] ss:$2 sm:$0x1f]
    %s1406 = scalar_lea.vmem %s12, 1
    %v1407 = vld [vmem:[%s1406] ss:$2 sm:$0x1f]
    %v1409 = vperm.slane %v1405, 0
    %v1410 = vperm.slane %v1405, 1
    %v1411 = vperm.slane %v1405, 2
    %v1412 = vperm.slane %v1405, 3
    %v1413 = vperm.slane %v1405, 4
    %v1421 = vrot.slane %v1101, 7
    %vm1422 = vcmask 1041409
    %v1423 = vsel %vm1422, %v1421, %v1100
    %1426 = vst [vmem:[#allocation1] ss:$4 sm:$0xff] %v1102
    %s1427 = scalar_lea.vmem [#allocation1], 32
    %1428 = vst [vmem:[%s1427] ss:$4 sm:$0xff] %v1103
    %v1429 = vld.sshfl [vmem:[#allocation1] sm:$0xff pattern:$0x73625140]
    %v1430 = vld.sshfl [vmem:[#allocation1 + $0x8] sm:$0xff pattern:$0x73625140]
    %v1431 = vld.sshfl [vmem:[#allocation1 + $0x10] sm:$0xff pattern:$0x73625140]
    %v1432 = vld.sshfl [vmem:[#allocation1 + $0x18] sm:$0xff pattern:$0x73625140]
    %v1433 = vld.sshfl [vmem:[#allocation1 + $0x20] sm:$0xff pattern:$0x73625140]
    %v1434 = vsel %vm97, %v1423, 0
    %v1436 = vsel %vm979, %v1429, 0
    %v1438 = vsel %vm979, %v1430, 0
    %v1440 = vsel %vm979, %v1431, 0
    %v1442 = vsel %vm979, %v1432, 0
    %v1444 = vsel %vm979, %v1433, 0
    %1446 = vmatpush.msra.mxu0 0.0
    %1447 = vmatpush.msra.mxu0 0.0
    %1448 = vmatpush.msra.mxu0 0.0
    %1449 = vmatpush.msra.mxu0 0.0
    %1450 = vmatpush.msra.mxu0 0.0
    %1451 = vmatpush.msra.mxu0 0.0
    %1452 = vmatpush.msra.mxu0 0.0
    %1453 = vmatpush.msra.mxu0 0.0
    %1454 = vmatpush.msra.mxu0 0.0
    %1455 = vmatpush.msra.mxu0 0.0
    %1456 = vmatpush.msra.mxu0 0.0
    %1457 = vmatpush.msra.mxu0 0.0
    %1458 = vmatpush.msra.mxu0 0.0
    %1459 = vmatpush.msra.mxu0 0.0
    %1460 = vmatpush.msra.mxu0 0.0
    %1461 = vmatpush.msra.mxu0 %v1436
    %1462 = vmatmul.f32.gmra.mxu0 %v1434
    %v1463 = vpop.f32.mrf.mxu0
    %v1464 = vadd.f32 %v1409, %v1463
    %1465 = vdwg.mxu0
    %1466 = vmatpush.msra.mxu0 0.0
    %1467 = vmatpush.msra.mxu0 0.0
    %1468 = vmatpush.msra.mxu0 0.0
    %1469 = vmatpush.msra.mxu0 0.0
    %1470 = vmatpush.msra.mxu0 0.0
    %1471 = vmatpush.msra.mxu0 0.0
    %1472 = vmatpush.msra.mxu0 0.0
    %1473 = vmatpush.msra.mxu0 0.0
    %1474 = vmatpush.msra.mxu0 0.0
    %1475 = vmatpush.msra.mxu0 0.0
    %1476 = vmatpush.msra.mxu0 0.0
    %1477 = vmatpush.msra.mxu0 0.0
    %1478 = vmatpush.msra.mxu0 0.0
    %1479 = vmatpush.msra.mxu0 0.0
    %1480 = vmatpush.msra.mxu0 0.0
    %1481 = vmatpush.msra.mxu0 %v1438
    %1482 = vmatmul.f32.gmra.mxu0 %v1434
    %v1483 = vpop.f32.mrf.mxu0
    %v1484 = vadd.f32 %v1410, %v1483
    %1485 = vdwg.mxu0
    %1486 = vmatpush.msra.mxu0 0.0
    %1487 = vmatpush.msra.mxu0 0.0
    %1488 = vmatpush.msra.mxu0 0.0
    %1489 = vmatpush.msra.mxu0 0.0
    %1490 = vmatpush.msra.mxu0 0.0
    %1491 = vmatpush.msra.mxu0 0.0
    %1492 = vmatpush.msra.mxu0 0.0
    %1493 = vmatpush.msra.mxu0 0.0
    %1494 = vmatpush.msra.mxu0 0.0
    %1495 = vmatpush.msra.mxu0 0.0
    %1496 = vmatpush.msra.mxu0 0.0
    %1497 = vmatpush.msra.mxu0 0.0
    %1498 = vmatpush.msra.mxu0 0.0
    %1499 = vmatpush.msra.mxu0 0.0
    %1500 = vmatpush.msra.mxu0 0.0
    %1501 = vmatpush.msra.mxu0 %v1440
    %1502 = vmatmul.f32.gmra.mxu0 %v1434
    %v1503 = vpop.f32.mrf.mxu0
    %v1504 = vadd.f32 %v1411, %v1503
    %1505 = vdwg.mxu0
    %1506 = vmatpush.msra.mxu0 0.0
    %1507 = vmatpush.msra.mxu0 0.0
    %1508 = vmatpush.msra.mxu0 0.0
    %1509 = vmatpush.msra.mxu0 0.0
    %1510 = vmatpush.msra.mxu0 0.0
    %1511 = vmatpush.msra.mxu0 0.0
    %1512 = vmatpush.msra.mxu0 0.0
    %1513 = vmatpush.msra.mxu0 0.0
    %1514 = vmatpush.msra.mxu0 0.0
    %1515 = vmatpush.msra.mxu0 0.0
    %1516 = vmatpush.msra.mxu0 0.0
    %1517 = vmatpush.msra.mxu0 0.0
    %1518 = vmatpush.msra.mxu0 0.0
    %1519 = vmatpush.msra.mxu0 0.0
    %1520 = vmatpush.msra.mxu0 0.0
    %1521 = vmatpush.msra.mxu0 %v1442
    %1522 = vmatmul.f32.gmra.mxu0 %v1434
    %v1523 = vpop.f32.mrf.mxu0
    %v1524 = vadd.f32 %v1412, %v1523
    %1525 = vdwg.mxu0
    %1526 = vmatpush.msra.mxu0 0.0
    %1527 = vmatpush.msra.mxu0 0.0
    %1528 = vmatpush.msra.mxu0 0.0
    %1529 = vmatpush.msra.mxu0 0.0
    %1530 = vmatpush.msra.mxu0 0.0
    %1531 = vmatpush.msra.mxu0 0.0
    %1532 = vmatpush.msra.mxu0 0.0
    %1533 = vmatpush.msra.mxu0 0.0
    %1534 = vmatpush.msra.mxu0 0.0
    %1535 = vmatpush.msra.mxu0 0.0
    %1536 = vmatpush.msra.mxu0 0.0
    %1537 = vmatpush.msra.mxu0 0.0
    %1538 = vmatpush.msra.mxu0 0.0
    %1539 = vmatpush.msra.mxu0 0.0
    %1540 = vmatpush.msra.mxu0 0.0
    %1541 = vmatpush.msra.mxu0 %v1444
    %1542 = vmatmul.f32.gmra.mxu0 %v1434
    %v1543 = vpop.f32.mrf.mxu0
    %v1544 = vadd.f32 %v1413, %v1543
    %1545 = vdwg.mxu0
    %v1546 = vrot.slane %v1100, 1
    %v1547 = vsel %vm1422, %v1101, %v1546
    %1548 = vst [vmem:[#allocation1] ss:$4 sm:$0xff] %v1102
    %s1549 = scalar_lea.vmem [#allocation1], 32
    %1550 = vst [vmem:[%s1549] ss:$4 sm:$0xff] %v1103
    %v1551 = vld.sshfl [vmem:[#allocation1] sm:$0xff pattern:$0x73625140]
    %v1552 = vld.sshfl [vmem:[#allocation1 + $0x8] sm:$0xff pattern:$0x73625140]
    %v1553 = vld.sshfl [vmem:[#allocation1 + $0x10] sm:$0xff pattern:$0x73625140]
    %v1554 = vld.sshfl [vmem:[#allocation1 + $0x18] sm:$0xff pattern:$0x73625140]
    %v1555 = vld.sshfl [vmem:[#allocation1 + $0x20] sm:$0xff pattern:$0x73625140]
    %v1556 = vsel %vm97, %v1547, 0
    %v1558 = vsel %vm979, %v1551, 0
    %v1560 = vsel %vm979, %v1552, 0
    %v1562 = vsel %vm979, %v1553, 0
    %v1564 = vsel %vm979, %v1554, 0
    %v1566 = vsel %vm979, %v1555, 0
    %1568 = vmatpush.msra.mxu0 0.0
    %1569 = vmatpush.msra.mxu0 0.0
    %1570 = vmatpush.msra.mxu0 0.0
    %1571 = vmatpush.msra.mxu0 0.0
    %1572 = vmatpush.msra.mxu0 0.0
    %1573 = vmatpush.msra.mxu0 0.0
    %1574 = vmatpush.msra.mxu0 0.0
    %1575 = vmatpush.msra.mxu0 0.0
    %1576 = vmatpush.msra.mxu0 0.0
    %1577 = vmatpush.msra.mxu0 0.0
    %1578 = vmatpush.msra.mxu0 0.0
    %1579 = vmatpush.msra.mxu0 0.0
    %1580 = vmatpush.msra.mxu0 0.0
    %1581 = vmatpush.msra.mxu0 0.0
    %1582 = vmatpush.msra.mxu0 0.0
    %1583 = vmatpush.msra.mxu0 %v1558
    %1584 = vmatmul.f32.gmra.mxu0 %v1556
    %v1585 = vpop.f32.mrf.mxu0
    %v1586 = vadd.f32 %v1409, %v1585
    %1587 = vdwg.mxu0
    %1588 = vmatpush.msra.mxu0 0.0
    %1589 = vmatpush.msra.mxu0 0.0
    %1590 = vmatpush.msra.mxu0 0.0
    %1591 = vmatpush.msra.mxu0 0.0
    %1592 = vmatpush.msra.mxu0 0.0
    %1593 = vmatpush.msra.mxu0 0.0
    %1594 = vmatpush.msra.mxu0 0.0
    %1595 = vmatpush.msra.mxu0 0.0
    %1596 = vmatpush.msra.mxu0 0.0
    %1597 = vmatpush.msra.mxu0 0.0
    %1598 = vmatpush.msra.mxu0 0.0
    %1599 = vmatpush.msra.mxu0 0.0
    %1600 = vmatpush.msra.mxu0 0.0
    %1601 = vmatpush.msra.mxu0 0.0
    %1602 = vmatpush.msra.mxu0 0.0
    %1603 = vmatpush.msra.mxu0 %v1560
    %1604 = vmatmul.f32.gmra.mxu0 %v1556
    %v1605 = vpop.f32.mrf.mxu0
    %v1606 = vadd.f32 %v1410, %v1605
    %1607 = vdwg.mxu0
    %1608 = vmatpush.msra.mxu0 0.0
    %1609 = vmatpush.msra.mxu0 0.0
    %1610 = vmatpush.msra.mxu0 0.0
    %1611 = vmatpush.msra.mxu0 0.0
    %1612 = vmatpush.msra.mxu0 0.0
    %1613 = vmatpush.msra.mxu0 0.0
    %1614 = vmatpush.msra.mxu0 0.0
    %1615 = vmatpush.msra.mxu0 0.0
    %1616 = vmatpush.msra.mxu0 0.0
    %1617 = vmatpush.msra.mxu0 0.0
    %1618 = vmatpush.msra.mxu0 0.0
    %1619 = vmatpush.msra.mxu0 0.0
    %1620 = vmatpush.msra.mxu0 0.0
    %1621 = vmatpush.msra.mxu0 0.0
    %1622 = vmatpush.msra.mxu0 0.0
    %1623 = vmatpush.msra.mxu0 %v1562
    %1624 = vmatmul.f32.gmra.mxu0 %v1556
    %v1625 = vpop.f32.mrf.mxu0
    %v1626 = vadd.f32 %v1411, %v1625
    %1627 = vdwg.mxu0
    %1628 = vmatpush.msra.mxu0 0.0
    %1629 = vmatpush.msra.mxu0 0.0
    %1630 = vmatpush.msra.mxu0 0.0
    %1631 = vmatpush.msra.mxu0 0.0
    %1632 = vmatpush.msra.mxu0 0.0
    %1633 = vmatpush.msra.mxu0 0.0
    %1634 = vmatpush.msra.mxu0 0.0
    %1635 = vmatpush.msra.mxu0 0.0
    %1636 = vmatpush.msra.mxu0 0.0
    %1637 = vmatpush.msra.mxu0 0.0
    %1638 = vmatpush.msra.mxu0 0.0
    %1639 = vmatpush.msra.mxu0 0.0
    %1640 = vmatpush.msra.mxu0 0.0
    %1641 = vmatpush.msra.mxu0 0.0
    %1642 = vmatpush.msra.mxu0 0.0
    %1643 = vmatpush.msra.mxu0 %v1564
    %1644 = vmatmul.f32.gmra.mxu0 %v1556
    %v1645 = vpop.f32.mrf.mxu0
    %v1646 = vadd.f32 %v1412, %v1645
    %1647 = vdwg.mxu0
    %1648 = vmatpush.msra.mxu0 0.0
    %1649 = vmatpush.msra.mxu0 0.0
    %1650 = vmatpush.msra.mxu0 0.0
    %1651 = vmatpush.msra.mxu0 0.0
    %1652 = vmatpush.msra.mxu0 0.0
    %1653 = vmatpush.msra.mxu0 0.0
    %1654 = vmatpush.msra.mxu0 0.0
    %1655 = vmatpush.msra.mxu0 0.0
    %1656 = vmatpush.msra.mxu0 0.0
    %1657 = vmatpush.msra.mxu0 0.0
    %1658 = vmatpush.msra.mxu0 0.0
    %1659 = vmatpush.msra.mxu0 0.0
    %1660 = vmatpush.msra.mxu0 0.0
    %1661 = vmatpush.msra.mxu0 0.0
    %1662 = vmatpush.msra.mxu0 0.0
    %1663 = vmatpush.msra.mxu0 %v1566
    %1664 = vmatmul.f32.gmra.mxu0 %v1556
    %v1665 = vpop.f32.mrf.mxu0
    %v1666 = vadd.f32 %v1413, %v1665
    %1667 = vdwg.mxu0
    %v1668 = vrot.slane %v1100, 2
    %v1669 = vrot.slane %v1101, 1
    %v1670 = vsel %vm1422, %v1669, %v1668
    %1671 = vst [vmem:[#allocation1] ss:$4 sm:$0xff] %v1102
    %s1672 = scalar_lea.vmem [#allocation1], 32
    %1673 = vst [vmem:[%s1672] ss:$4 sm:$0xff] %v1103
    %v1674 = vld.sshfl [vmem:[#allocation1] sm:$0xff pattern:$0x73625140]
    %v1675 = vld.sshfl [vmem:[#allocation1 + $0x8] sm:$0xff pattern:$0x73625140]
    %v1676 = vld.sshfl [vmem:[#allocation1 + $0x10] sm:$0xff pattern:$0x73625140]
    %v1677 = vld.sshfl [vmem:[#allocation1 + $0x18] sm:$0xff pattern:$0x73625140]
    %v1678 = vld.sshfl [vmem:[#allocation1 + $0x20] sm:$0xff pattern:$0x73625140]
    %v1679 = vsel %vm97, %v1670, 0
    %v1681 = vsel %vm979, %v1674, 0
    %v1683 = vsel %vm979, %v1675, 0
    %v1685 = vsel %vm979, %v1676, 0
    %v1687 = vsel %vm979, %v1677, 0
    %v1689 = vsel %vm979, %v1678, 0
    %1691 = vmatpush.msra.mxu0 0.0
    %1692 = vmatpush.msra.mxu0 0.0
    %1693 = vmatpush.msra.mxu0 0.0
    %1694 = vmatpush.msra.mxu0 0.0
    %1695 = vmatpush.msra.mxu0 0.0
    %1696 = vmatpush.msra.mxu0 0.0
    %1697 = vmatpush.msra.mxu0 0.0
    %1698 = vmatpush.msra.mxu0 0.0
    %1699 = vmatpush.msra.mxu0 0.0
    %1700 = vmatpush.msra.mxu0 0.0
    %1701 = vmatpush.msra.mxu0 0.0
    %1702 = vmatpush.msra.mxu0 0.0
    %1703 = vmatpush.msra.mxu0 0.0
    %1704 = vmatpush.msra.mxu0 0.0
    %1705 = vmatpush.msra.mxu0 0.0
    %1706 = vmatpush.msra.mxu0 %v1681
    %1707 = vmatmul.f32.gmra.mxu0 %v1679
    %v1708 = vpop.f32.mrf.mxu0
    %v1709 = vadd.f32 %v1409, %v1708
    %1710 = vdwg.mxu0
    %1711 = vmatpush.msra.mxu0 0.0
    %1712 = vmatpush.msra.mxu0 0.0
    %1713 = vmatpush.msra.mxu0 0.0
    %1714 = vmatpush.msra.mxu0 0.0
    %1715 = vmatpush.msra.mxu0 0.0
    %1716 = vmatpush.msra.mxu0 0.0
    %1717 = vmatpush.msra.mxu0 0.0
    %1718 = vmatpush.msra.mxu0 0.0
    %1719 = vmatpush.msra.mxu0 0.0
    %1720 = vmatpush.msra.mxu0 0.0
    %1721 = vmatpush.msra.mxu0 0.0
    %1722 = vmatpush.msra.mxu0 0.0
    %1723 = vmatpush.msra.mxu0 0.0
    %1724 = vmatpush.msra.mxu0 0.0
    %1725 = vmatpush.msra.mxu0 0.0
    %1726 = vmatpush.msra.mxu0 %v1683
    %1727 = vmatmul.f32.gmra.mxu0 %v1679
    %v1728 = vpop.f32.mrf.mxu0
    %v1729 = vadd.f32 %v1410, %v1728
    %1730 = vdwg.mxu0
    %1731 = vmatpush.msra.mxu0 0.0
    %1732 = vmatpush.msra.mxu0 0.0
    %1733 = vmatpush.msra.mxu0 0.0
    %1734 = vmatpush.msra.mxu0 0.0
    %1735 = vmatpush.msra.mxu0 0.0
    %1736 = vmatpush.msra.mxu0 0.0
    %1737 = vmatpush.msra.mxu0 0.0
    %1738 = vmatpush.msra.mxu0 0.0
    %1739 = vmatpush.msra.mxu0 0.0
    %1740 = vmatpush.msra.mxu0 0.0
    %1741 = vmatpush.msra.mxu0 0.0
    %1742 = vmatpush.msra.mxu0 0.0
    %1743 = vmatpush.msra.mxu0 0.0
    %1744 = vmatpush.msra.mxu0 0.0
    %1745 = vmatpush.msra.mxu0 0.0
    %1746 = vmatpush.msra.mxu0 %v1685
    %1747 = vmatmul.f32.gmra.mxu0 %v1679
    %v1748 = vpop.f32.mrf.mxu0
    %v1749 = vadd.f32 %v1411, %v1748
    %1750 = vdwg.mxu0
    %1751 = vmatpush.msra.mxu0 0.0
    %1752 = vmatpush.msra.mxu0 0.0
    %1753 = vmatpush.msra.mxu0 0.0
    %1754 = vmatpush.msra.mxu0 0.0
    %1755 = vmatpush.msra.mxu0 0.0
    %1756 = vmatpush.msra.mxu0 0.0
    %1757 = vmatpush.msra.mxu0 0.0
    %1758 = vmatpush.msra.mxu0 0.0
    %1759 = vmatpush.msra.mxu0 0.0
    %1760 = vmatpush.msra.mxu0 0.0
    %1761 = vmatpush.msra.mxu0 0.0
    %1762 = vmatpush.msra.mxu0 0.0
    %1763 = vmatpush.msra.mxu0 0.0
    %1764 = vmatpush.msra.mxu0 0.0
    %1765 = vmatpush.msra.mxu0 0.0
    %1766 = vmatpush.msra.mxu0 %v1687
    %1767 = vmatmul.f32.gmra.mxu0 %v1679
    %v1768 = vpop.f32.mrf.mxu0
    %v1769 = vadd.f32 %v1412, %v1768
    %1770 = vdwg.mxu0
    %1771 = vmatpush.msra.mxu0 0.0
    %1772 = vmatpush.msra.mxu0 0.0
    %1773 = vmatpush.msra.mxu0 0.0
    %1774 = vmatpush.msra.mxu0 0.0
    %1775 = vmatpush.msra.mxu0 0.0
    %1776 = vmatpush.msra.mxu0 0.0
    %1777 = vmatpush.msra.mxu0 0.0
    %1778 = vmatpush.msra.mxu0 0.0
    %1779 = vmatpush.msra.mxu0 0.0
    %1780 = vmatpush.msra.mxu0 0.0
    %1781 = vmatpush.msra.mxu0 0.0
    %1782 = vmatpush.msra.mxu0 0.0
    %1783 = vmatpush.msra.mxu0 0.0
    %1784 = vmatpush.msra.mxu0 0.0
    %1785 = vmatpush.msra.mxu0 0.0
    %1786 = vmatpush.msra.mxu0 %v1689
    %1787 = vmatmul.f32.gmra.mxu0 %v1679
    %v1788 = vpop.f32.mrf.mxu0
    %v1789 = vadd.f32 %v1413, %v1788
    %1790 = vdwg.mxu0
    %v1791 = vxor.u32 %v1464, 2147483648
    %v1792 = vxor.u32 %v1484, 2147483648
    %v1793 = vmul.f32 %v1791, 1.442695
    %v1794 = vpow.pop %v1793
    %v1795 = vmul.f32 %v1792, 1.442695
    %v1796 = vpow.pop %v1795
    %v1797 = vadd.f32 %v1794, 1.0
    %v1798 = vadd.f32 %v1796, 1.0
    %v1799 = vrcp.pop %v1797
    %v1800 = vmul.f32 %v1797, %v1799
    %v1801 = vsub.f32 1.0, %v1800
    %v1802 = vmul.f32 %v1799, %v1801
    %v1803 = vadd.f32 %v1799, %v1802
    %vm1804 = vweird.f32 %v1797
    %vm1805 = vweird.f32 %v1799
    %vm1806 = vmor %vm1804, %vm1805
    %v1807 = vsel %vm1806, %v1799, %v1803
    %v1808 = vand.u32 2147483647, %v1797
    %vm1809 = vcmp.eq.f32.partialorder %v1808, 8.507059e+37
    %v1810 = vand.u32 %v1797, 2147483648
    %v1811 = vor.u32 1.1754944e-38, %v1810
    %v1812 = vsel %vm1809, %v1811, %v1807
    %v1813 = vmul.f32 1.0, %v1812
    %v1814 = vrcp.pop %v1798
    %v1815 = vmul.f32 %v1798, %v1814
    %v1816 = vsub.f32 1.0, %v1815
    %v1817 = vmul.f32 %v1814, %v1816
    %v1818 = vadd.f32 %v1814, %v1817
    %vm1819 = vweird.f32 %v1798
    %vm1820 = vweird.f32 %v1814
    %vm1821 = vmor %vm1819, %vm1820
    %v1822 = vsel %vm1821, %v1814, %v1818
    %v1823 = vand.u32 2147483647, %v1798
    %vm1824 = vcmp.eq.f32.partialorder %v1823, 8.507059e+37
    %v1825 = vand.u32 %v1798, 2147483648
    %v1826 = vor.u32 1.1754944e-38, %v1825
    %v1827 = vsel %vm1824, %v1826, %v1822
    %v1828 = vmul.f32 1.0, %v1827
    %v1829 = vxor.u32 %v1504, 2147483648
    %v1830 = vmul.f32 %v1829, 1.442695
    %v1831 = vpow.pop %v1830
    %v1832 = vadd.f32 %v1831, 1.0
    %v1833 = vrcp.pop %v1832
    %v1834 = vmul.f32 %v1832, %v1833
    %v1835 = vsub.f32 1.0, %v1834
    %v1836 = vmul.f32 %v1833, %v1835
    %v1837 = vadd.f32 %v1833, %v1836
    %vm1838 = vweird.f32 %v1832
    %vm1839 = vweird.f32 %v1833
    %vm1840 = vmor %vm1838, %vm1839
    %v1841 = vsel %vm1840, %v1833, %v1837
    %v1842 = vand.u32 2147483647, %v1832
    %vm1843 = vcmp.eq.f32.partialorder %v1842, 8.507059e+37
    %v1844 = vand.u32 %v1832, 2147483648
    %v1845 = vor.u32 1.1754944e-38, %v1844
    %v1846 = vsel %vm1843, %v1845, %v1841
    %v1847 = vmul.f32 1.0, %v1846
    %v1848 = vtanh.pop %v1504
    %v1849 = vtanh.pop %v1524
    %v1850 = vxor.u32 %v1524, 2147483648
    %v1851 = vxor.u32 %v1544, 2147483648
    %v1852 = vmul.f32 %v1850, 1.442695
    %v1853 = vpow.pop %v1852
    %v1854 = vmul.f32 %v1851, 1.442695
    %v1855 = vpow.pop %v1854
    %v1856 = vadd.f32 %v1853, 1.0
    %v1857 = vadd.f32 %v1855, 1.0
    %v1858 = vrcp.pop %v1856
    %v1859 = vmul.f32 %v1856, %v1858
    %v1860 = vsub.f32 1.0, %v1859
    %v1861 = vmul.f32 %v1858, %v1860
    %v1862 = vadd.f32 %v1858, %v1861
    %vm1863 = vweird.f32 %v1856
    %vm1864 = vweird.f32 %v1858
    %vm1865 = vmor %vm1863, %vm1864
    %v1866 = vsel %vm1865, %v1858, %v1862
    %v1867 = vand.u32 2147483647, %v1856
    %vm1868 = vcmp.eq.f32.partialorder %v1867, 8.507059e+37
    %v1869 = vand.u32 %v1856, 2147483648
    %v1870 = vor.u32 1.1754944e-38, %v1869
    %v1871 = vsel %vm1868, %v1870, %v1866
    %v1872 = vmul.f32 1.0, %v1871
    %v1873 = vrcp.pop %v1857
    %v1874 = vmul.f32 %v1857, %v1873
    %v1875 = vsub.f32 1.0, %v1874
    %v1876 = vmul.f32 %v1873, %v1875
    %v1877 = vadd.f32 %v1873, %v1876
    %vm1878 = vweird.f32 %v1857
    %vm1879 = vweird.f32 %v1873
    %vm1880 = vmor %vm1878, %vm1879
    %v1881 = vsel %vm1880, %v1873, %v1877
    %v1882 = vand.u32 2147483647, %v1857
    %vm1883 = vcmp.eq.f32.partialorder %v1882, 8.507059e+37
    %v1884 = vand.u32 %v1857, 2147483648
    %v1885 = vor.u32 1.1754944e-38, %v1884
    %v1886 = vsel %vm1883, %v1885, %v1881
    %v1887 = vmul.f32 1.0, %v1886
    %v1888 = vmul.f32 %v1828, 0.0
    %v1889 = vmul.f32 %v1847, 0.0
    %1892 = vrot.lane.b32.xlu0 %v1848, 64
    %v1893 = vpop.permute.xlu0 %1892
    %1894 = vrot.lane.b32.xlu0 %v1849, 64
    %v1895 = vpop.permute.xlu0 %1894
    %vm1896 = vcmask 523264
    %v1897 = vsel %vm1896, %v1893, %v1895
    %v1900 = vmul.f32 %v1813, %v1897
    %v1901 = vmul.f32 %v1828, %v1895
    %1904 = vrot.lane.b32.xlu0 %v1900, 32
    %v1905 = vpop.permute.xlu0 %1904
    %1906 = vrot.lane.b32.xlu0 %v1901, 32
    %v1907 = vpop.permute.xlu0 %1906
    %vm1908 = vcmask 261120
    %v1909 = vsel %vm1908, %v1905, %v1907
    %v1912 = vadd.f32 %v1888, %v1905
    %v1913 = vadd.f32 %v1889, %v1909
    %v1914 = vtanh.pop %v1912
    %v1915 = vtanh.pop %v1913
    %1918 = vrot.lane.b32.xlu0 %v1914, 64
    %v1919 = vpop.permute.xlu0 %1918
    %1920 = vrot.lane.b32.xlu0 %v1915, 64
    %v1921 = vpop.permute.xlu0 %1920
    %v1922 = vsel %vm1896, %v1919, %v1921
    %v1925 = vmul.f32 %v1872, %v1919
    %v1926 = vmul.f32 %v1887, %v1922
    %1929 = vrot.lane.b32.xlu0 %v1925, 32
    %v1930 = vpop.permute.xlu0 %1929
    %1931 = vrot.lane.b32.xlu0 %v1926, 32
    %v1932 = vpop.permute.xlu0 %1931
    %v1933 = vsel %vm1908, %v1930, %v1932
    %v1935 = vsel %vm1908, %v1932, 0
    %1937 = vmatpush.msra.mxu0 %v1279
    %1938 = vmatpush.msra.mxu0 %v1274
    %1939 = vmatpush.msra.mxu0 %v1269
    %1940 = vmatpush.msra.mxu0 %v1264
    %1941 = vmatpush.msra.mxu0 %v1259
    %1942 = vmatpush.msra.mxu0 %v1254
    %1943 = vmatpush.msra.mxu0 %v1249
    %1944 = vmatpush.msra.mxu0 %v1244
    %1945 = vmatpush.msra.mxu0 %v1239
    %1946 = vmatpush.msra.mxu0 %v1234
    %1947 = vmatpush.msra.mxu0 %v1229
    %1948 = vmatpush.msra.mxu0 %v1224
    %1949 = vmatpush.msra.mxu0 %v1219
    %1950 = vmatpush.msra.mxu0 %v1214
    %1951 = vmatpush.msra.mxu0 %v1209
    %1952 = vmatpush.msra.mxu0 %v1204
    %1953 = vmatmul.f32.gmra.mxu0 %v1933
    %v1954 = vpop.f32.mrf.mxu0
    %v1955 = vadd.f32 0.0, %v1954
    %1956 = vdwg.mxu0
    %1957 = vmatpush.msra.mxu0 0.0
    %1958 = vmatpush.msra.mxu0 0.0
    %1959 = vmatpush.msra.mxu0 0.0
    %1960 = vmatpush.msra.mxu0 0.0
    %1961 = vmatpush.msra.mxu0 0.0
    %1962 = vmatpush.msra.mxu0 0.0
    %1963 = vmatpush.msra.mxu0 0.0
    %1964 = vmatpush.msra.mxu0 0.0
    %1965 = vmatpush.msra.mxu0 0.0
    %1966 = vmatpush.msra.mxu0 0.0
    %1967 = vmatpush.msra.mxu0 0.0
    %1968 = vmatpush.msra.mxu0 0.0
    %1969 = vmatpush.msra.mxu0 %v1299
    %1970 = vmatpush.msra.mxu0 %v1294
    %1971 = vmatpush.msra.mxu0 %v1289
    %1972 = vmatpush.msra.mxu0 %v1284
    %1973 = vmatmul.f32.gmra.mxu0 %v1935
    %v1974 = vpop.f32.mrf.mxu0
    %v1975 = vadd.f32 %v1955, %v1974
    %1976 = vdwg.mxu0
    %1977 = vmatpush.msra.mxu0 %v1280
    %1978 = vmatpush.msra.mxu0 %v1275
    %1979 = vmatpush.msra.mxu0 %v1270
    %1980 = vmatpush.msra.mxu0 %v1265
    %1981 = vmatpush.msra.mxu0 %v1260
    %1982 = vmatpush.msra.mxu0 %v1255
    %1983 = vmatpush.msra.mxu0 %v1250
    %1984 = vmatpush.msra.mxu0 %v1245
    %1985 = vmatpush.msra.mxu0 %v1240
    %1986 = vmatpush.msra.mxu0 %v1235
    %1987 = vmatpush.msra.mxu0 %v1230
    %1988 = vmatpush.msra.mxu0 %v1225
    %1989 = vmatpush.msra.mxu0 %v1220
    %1990 = vmatpush.msra.mxu0 %v1215
    %1991 = vmatpush.msra.mxu0 %v1210
    %1992 = vmatpush.msra.mxu0 %v1205
    %1993 = vmatmul.f32.gmra.mxu0 %v1933
    %v1994 = vpop.f32.mrf.mxu0
    %v1995 = vadd.f32 0.0, %v1994
    %1996 = vdwg.mxu0
    %1997 = vmatpush.msra.mxu0 0.0
    %1998 = vmatpush.msra.mxu0 0.0
    %1999 = vmatpush.msra.mxu0 0.0
    %2000 = vmatpush.msra.mxu0 0.0
    %2001 = vmatpush.msra.mxu0 0.0
    %2002 = vmatpush.msra.mxu0 0.0
    %2003 = vmatpush.msra.mxu0 0.0
    %2004 = vmatpush.msra.mxu0 0.0
    %2005 = vmatpush.msra.mxu0 0.0
    %2006 = vmatpush.msra.mxu0 0.0
    %2007 = vmatpush.msra.mxu0 0.0
    %2008 = vmatpush.msra.mxu0 0.0
    %2009 = vmatpush.msra.mxu0 %v1300
    %2010 = vmatpush.msra.mxu0 %v1295
    %2011 = vmatpush.msra.mxu0 %v1290
    %2012 = vmatpush.msra.mxu0 %v1285
    %2013 = vmatmul.f32.gmra.mxu0 %v1935
    %v2014 = vpop.f32.mrf.mxu0
    %v2015 = vadd.f32 %v1995, %v2014
    %2016 = vdwg.mxu0
    %2017 = vmatpush.msra.mxu0 %v1281
    %2018 = vmatpush.msra.mxu0 %v1276
    %2019 = vmatpush.msra.mxu0 %v1271
    %2020 = vmatpush.msra.mxu0 %v1266
    %2021 = vmatpush.msra.mxu0 %v1261
    %2022 = vmatpush.msra.mxu0 %v1256
    %2023 = vmatpush.msra.mxu0 %v1251
    %2024 = vmatpush.msra.mxu0 %v1246
    %2025 = vmatpush.msra.mxu0 %v1241
    %2026 = vmatpush.msra.mxu0 %v1236
    %2027 = vmatpush.msra.mxu0 %v1231
    %2028 = vmatpush.msra.mxu0 %v1226
    %2029 = vmatpush.msra.mxu0 %v1221
    %2030 = vmatpush.msra.mxu0 %v1216
    %2031 = vmatpush.msra.mxu0 %v1211
    %2032 = vmatpush.msra.mxu0 %v1206
    %2033 = vmatmul.f32.gmra.mxu0 %v1933
    %v2034 = vpop.f32.mrf.mxu0
    %v2035 = vadd.f32 0.0, %v2034
    %2036 = vdwg.mxu0
    %2037 = vmatpush.msra.mxu0 0.0
    %2038 = vmatpush.msra.mxu0 0.0
    %2039 = vmatpush.msra.mxu0 0.0
    %2040 = vmatpush.msra.mxu0 0.0
    %2041 = vmatpush.msra.mxu0 0.0
    %2042 = vmatpush.msra.mxu0 0.0
    %2043 = vmatpush.msra.mxu0 0.0
    %2044 = vmatpush.msra.mxu0 0.0
    %2045 = vmatpush.msra.mxu0 0.0
    %2046 = vmatpush.msra.mxu0 0.0
    %2047 = vmatpush.msra.mxu0 0.0
    %2048 = vmatpush.msra.mxu0 0.0
    %2049 = vmatpush.msra.mxu0 %v1301
    %2050 = vmatpush.msra.mxu0 %v1296
    %2051 = vmatpush.msra.mxu0 %v1291
    %2052 = vmatpush.msra.mxu0 %v1286
    %2053 = vmatmul.f32.gmra.mxu0 %v1935
    %v2054 = vpop.f32.mrf.mxu0
    %v2055 = vadd.f32 %v2035, %v2054
    %2056 = vdwg.mxu0
    %2057 = vmatpush.msra.mxu0 %v1282
    %2058 = vmatpush.msra.mxu0 %v1277
    %2059 = vmatpush.msra.mxu0 %v1272
    %2060 = vmatpush.msra.mxu0 %v1267
    %2061 = vmatpush.msra.mxu0 %v1262
    %2062 = vmatpush.msra.mxu0 %v1257
    %2063 = vmatpush.msra.mxu0 %v1252
    %2064 = vmatpush.msra.mxu0 %v1247
    %2065 = vmatpush.msra.mxu0 %v1242
    %2066 = vmatpush.msra.mxu0 %v1237
    %2067 = vmatpush.msra.mxu0 %v1232
    %2068 = vmatpush.msra.mxu0 %v1227
    %2069 = vmatpush.msra.mxu0 %v1222
    %2070 = vmatpush.msra.mxu0 %v1217
    %2071 = vmatpush.msra.mxu0 %v1212
    %2072 = vmatpush.msra.mxu0 %v1207
    %2073 = vmatmul.f32.gmra.mxu0 %v1933
    %v2074 = vpop.f32.mrf.mxu0
    %v2075 = vadd.f32 0.0, %v2074
    %2076 = vdwg.mxu0
    %2077 = vmatpush.msra.mxu0 0.0
    %2078 = vmatpush.msra.mxu0 0.0
    %2079 = vmatpush.msra.mxu0 0.0
    %2080 = vmatpush.msra.mxu0 0.0
    %2081 = vmatpush.msra.mxu0 0.0
    %2082 = vmatpush.msra.mxu0 0.0
    %2083 = vmatpush.msra.mxu0 0.0
    %2084 = vmatpush.msra.mxu0 0.0
    %2085 = vmatpush.msra.mxu0 0.0
    %2086 = vmatpush.msra.mxu0 0.0
    %2087 = vmatpush.msra.mxu0 0.0
    %2088 = vmatpush.msra.mxu0 0.0
    %2089 = vmatpush.msra.mxu0 %v1302
    %2090 = vmatpush.msra.mxu0 %v1297
    %2091 = vmatpush.msra.mxu0 %v1292
    %2092 = vmatpush.msra.mxu0 %v1287
    %2093 = vmatmul.f32.gmra.mxu0 %v1935
    %v2094 = vpop.f32.mrf.mxu0
    %v2095 = vadd.f32 %v2075, %v2094
    %2096 = vdwg.mxu0
    %2097 = vmatpush.msra.mxu0 %v1283
    %2098 = vmatpush.msra.mxu0 %v1278
    %2099 = vmatpush.msra.mxu0 %v1273
    %2100 = vmatpush.msra.mxu0 %v1268
    %2101 = vmatpush.msra.mxu0 %v1263
    %2102 = vmatpush.msra.mxu0 %v1258
    %2103 = vmatpush.msra.mxu0 %v1253
    %2104 = vmatpush.msra.mxu0 %v1248
    %2105 = vmatpush.msra.mxu0 %v1243
    %2106 = vmatpush.msra.mxu0 %v1238
    %2107 = vmatpush.msra.mxu0 %v1233
    %2108 = vmatpush.msra.mxu0 %v1228
    %2109 = vmatpush.msra.mxu0 %v1223
    %2110 = vmatpush.msra.mxu0 %v1218
    %2111 = vmatpush.msra.mxu0 %v1213
    %2112 = vmatpush.msra.mxu0 %v1208
    %2113 = vmatmul.f32.gmra.mxu0 %v1933
    %v2114 = vpop.f32.mrf.mxu0
    %v2115 = vadd.f32 0.0, %v2114
    %2116 = vdwg.mxu0
    %2117 = vmatpush.msra.mxu0 0.0
    %2118 = vmatpush.msra.mxu0 0.0
    %2119 = vmatpush.msra.mxu0 0.0
    %2120 = vmatpush.msra.mxu0 0.0
    %2121 = vmatpush.msra.mxu0 0.0
    %2122 = vmatpush.msra.mxu0 0.0
    %2123 = vmatpush.msra.mxu0 0.0
    %2124 = vmatpush.msra.mxu0 0.0
    %2125 = vmatpush.msra.mxu0 0.0
    %2126 = vmatpush.msra.mxu0 0.0
    %2127 = vmatpush.msra.mxu0 0.0
    %2128 = vmatpush.msra.mxu0 0.0
    %2129 = vmatpush.msra.mxu0 %v1303
    %2130 = vmatpush.msra.mxu0 %v1298
    %2131 = vmatpush.msra.mxu0 %v1293
    %2132 = vmatpush.msra.mxu0 %v1288
    %2133 = vmatmul.f32.gmra.mxu0 %v1935
    %v2134 = vpop.f32.mrf.mxu0
    %v2135 = vadd.f32 %v2115, %v2134
    %2136 = vdwg.mxu0
    %v2137 = vadd.f32 %v1586, %v1975
    %v2138 = vadd.f32 %v1606, %v2015
    %v2139 = vadd.f32 %v1626, %v2055
    %v2140 = vadd.f32 %v1646, %v2095
    %v2141 = vadd.f32 %v1666, %v2135
    %v2142 = vxor.u32 %v2137, 2147483648
    %v2143 = vxor.u32 %v2138, 2147483648
    %v2144 = vmul.f32 %v2142, 1.442695
    %v2145 = vpow.pop %v2144
    %v2146 = vmul.f32 %v2143, 1.442695
    %v2147 = vpow.pop %v2146
    %v2148 = vadd.f32 %v2145, 1.0
    %v2149 = vadd.f32 %v2147, 1.0
    %v2150 = vrcp.pop %v2148
    %v2151 = vmul.f32 %v2148, %v2150
    %v2152 = vsub.f32 1.0, %v2151
    %v2153 = vmul.f32 %v2150, %v2152
    %v2154 = vadd.f32 %v2150, %v2153
    %vm2155 = vweird.f32 %v2148
    %vm2156 = vweird.f32 %v2150
    %vm2157 = vmor %vm2155, %vm2156
    %v2158 = vsel %vm2157, %v2150, %v2154
    %v2159 = vand.u32 2147483647, %v2148
    %vm2160 = vcmp.eq.f32.partialorder %v2159, 8.507059e+37
    %v2161 = vand.u32 %v2148, 2147483648
    %v2162 = vor.u32 1.1754944e-38, %v2161
    %v2163 = vsel %vm2160, %v2162, %v2158
    %v2164 = vmul.f32 1.0, %v2163
    %v2165 = vrcp.pop %v2149
    %v2166 = vmul.f32 %v2149, %v2165
    %v2167 = vsub.f32 1.0, %v2166
    %v2168 = vmul.f32 %v2165, %v2167
    %v2169 = vadd.f32 %v2165, %v2168
    %vm2170 = vweird.f32 %v2149
    %vm2171 = vweird.f32 %v2165
    %vm2172 = vmor %vm2170, %vm2171
    %v2173 = vsel %vm2172, %v2165, %v2169
    %v2174 = vand.u32 2147483647, %v2149
    %vm2175 = vcmp.eq.f32.partialorder %v2174, 8.507059e+37
    %v2176 = vand.u32 %v2149, 2147483648
    %v2177 = vor.u32 1.1754944e-38, %v2176
    %v2178 = vsel %vm2175, %v2177, %v2173
    %v2179 = vmul.f32 1.0, %v2178
    %v2180 = vxor.u32 %v2139, 2147483648
    %v2181 = vmul.f32 %v2180, 1.442695
    %v2182 = vpow.pop %v2181
    %v2183 = vadd.f32 %v2182, 1.0
    %v2184 = vrcp.pop %v2183
    %v2185 = vmul.f32 %v2183, %v2184
    %v2186 = vsub.f32 1.0, %v2185
    %v2187 = vmul.f32 %v2184, %v2186
    %v2188 = vadd.f32 %v2184, %v2187
    %vm2189 = vweird.f32 %v2183
    %vm2190 = vweird.f32 %v2184
    %vm2191 = vmor %vm2189, %vm2190
    %v2192 = vsel %vm2191, %v2184, %v2188
    %v2193 = vand.u32 2147483647, %v2183
    %vm2194 = vcmp.eq.f32.partialorder %v2193, 8.507059e+37
    %v2195 = vand.u32 %v2183, 2147483648
    %v2196 = vor.u32 1.1754944e-38, %v2195
    %v2197 = vsel %vm2194, %v2196, %v2192
    %v2198 = vmul.f32 1.0, %v2197
    %v2199 = vtanh.pop %v2139
    %v2200 = vtanh.pop %v2140
    %v2201 = vxor.u32 %v2140, 2147483648
    %v2202 = vxor.u32 %v2141, 2147483648
    %v2203 = vmul.f32 %v2201, 1.442695
    %v2204 = vpow.pop %v2203
    %v2205 = vmul.f32 %v2202, 1.442695
    %v2206 = vpow.pop %v2205
    %v2207 = vadd.f32 %v2204, 1.0
    %v2208 = vadd.f32 %v2206, 1.0
    %v2209 = vrcp.pop %v2207
    %v2210 = vmul.f32 %v2207, %v2209
    %v2211 = vsub.f32 1.0, %v2210
    %v2212 = vmul.f32 %v2209, %v2211
    %v2213 = vadd.f32 %v2209, %v2212
    %vm2214 = vweird.f32 %v2207
    %vm2215 = vweird.f32 %v2209
    %vm2216 = vmor %vm2214, %vm2215
    %v2217 = vsel %vm2216, %v2209, %v2213
    %v2218 = vand.u32 2147483647, %v2207
    %vm2219 = vcmp.eq.f32.partialorder %v2218, 8.507059e+37
    %v2220 = vand.u32 %v2207, 2147483648
    %v2221 = vor.u32 1.1754944e-38, %v2220
    %v2222 = vsel %vm2219, %v2221, %v2217
    %v2223 = vmul.f32 1.0, %v2222
    %v2224 = vrcp.pop %v2208
    %v2225 = vmul.f32 %v2208, %v2224
    %v2226 = vsub.f32 1.0, %v2225
    %v2227 = vmul.f32 %v2224, %v2226
    %v2228 = vadd.f32 %v2224, %v2227
    %vm2229 = vweird.f32 %v2208
    %vm2230 = vweird.f32 %v2224
    %vm2231 = vmor %vm2229, %vm2230
    %v2232 = vsel %vm2231, %v2224, %v2228
    %v2233 = vand.u32 2147483647, %v2208
    %vm2234 = vcmp.eq.f32.partialorder %v2233, 8.507059e+37
    %v2235 = vand.u32 %v2208, 2147483648
    %v2236 = vor.u32 1.1754944e-38, %v2235
    %v2237 = vsel %vm2234, %v2236, %v2232
    %v2238 = vmul.f32 1.0, %v2237
    %v2239 = vmul.f32 %v2179, %v1912
    %v2240 = vmul.f32 %v2198, %v1913
    %2243 = vrot.lane.b32.xlu0 %v2199, 64
    %v2244 = vpop.permute.xlu0 %2243
    %2245 = vrot.lane.b32.xlu0 %v2200, 64
    %v2246 = vpop.permute.xlu0 %2245
    %v2247 = vsel %vm1896, %v2244, %v2246
    %v2250 = vmul.f32 %v2164, %v2247
    %v2251 = vmul.f32 %v2179, %v2246
    %2254 = vrot.lane.b32.xlu0 %v2250, 32
    %v2255 = vpop.permute.xlu0 %2254
    %2256 = vrot.lane.b32.xlu0 %v2251, 32
    %v2257 = vpop.permute.xlu0 %2256
    %v2258 = vsel %vm1908, %v2255, %v2257
    %v2261 = vadd.f32 %v2239, %v2255
    %v2262 = vadd.f32 %v2240, %v2258
    %v2263 = vtanh.pop %v2261
    %v2264 = vtanh.pop %v2262
    %2267 = vrot.lane.b32.xlu0 %v2263, 64
    %v2268 = vpop.permute.xlu0 %2267
    %2269 = vrot.lane.b32.xlu0 %v2264, 64
    %v2270 = vpop.permute.xlu0 %2269
    %v2271 = vsel %vm1896, %v2268, %v2270
    %v2274 = vmul.f32 %v2223, %v2268
    %v2275 = vmul.f32 %v2238, %v2271
    %2278 = vrot.lane.b32.xlu0 %v2274, 32
    %v2279 = vpop.permute.xlu0 %2278
    %2280 = vrot.lane.b32.xlu0 %v2275, 32
    %v2281 = vpop.permute.xlu0 %2280
    %v2282 = vsel %vm1908, %v2279, %v2281
    %v2284 = vsel %vm1908, %v2281, 0
    %2286 = vmatpush.msra.mxu0 %v1279
    %2287 = vmatpush.msra.mxu0 %v1274
    %2288 = vmatpush.msra.mxu0 %v1269
    %2289 = vmatpush.msra.mxu0 %v1264
    %2290 = vmatpush.msra.mxu0 %v1259
    %2291 = vmatpush.msra.mxu0 %v1254
    %2292 = vmatpush.msra.mxu0 %v1249
    %2293 = vmatpush.msra.mxu0 %v1244
    %2294 = vmatpush.msra.mxu0 %v1239
    %2295 = vmatpush.msra.mxu0 %v1234
    %2296 = vmatpush.msra.mxu0 %v1229
    %2297 = vmatpush.msra.mxu0 %v1224
    %2298 = vmatpush.msra.mxu0 %v1219
    %2299 = vmatpush.msra.mxu0 %v1214
    %2300 = vmatpush.msra.mxu0 %v1209
    %2301 = vmatpush.msra.mxu0 %v1204
    %2302 = vmatmul.f32.gmra.mxu0 %v2282
    %v2303 = vpop.f32.mrf.mxu0
    %v2304 = vadd.f32 0.0, %v2303
    %2305 = vdwg.mxu0
    %2306 = vmatpush.msra.mxu0 0.0
    %2307 = vmatpush.msra.mxu0 0.0
    %2308 = vmatpush.msra.mxu0 0.0
    %2309 = vmatpush.msra.mxu0 0.0
    %2310 = vmatpush.msra.mxu0 0.0
    %2311 = vmatpush.msra.mxu0 0.0
    %2312 = vmatpush.msra.mxu0 0.0
    %2313 = vmatpush.msra.mxu0 0.0
    %2314 = vmatpush.msra.mxu0 0.0
    %2315 = vmatpush.msra.mxu0 0.0
    %2316 = vmatpush.msra.mxu0 0.0
    %2317 = vmatpush.msra.mxu0 0.0
    %2318 = vmatpush.msra.mxu0 %v1299
    %2319 = vmatpush.msra.mxu0 %v1294
    %2320 = vmatpush.msra.mxu0 %v1289
    %2321 = vmatpush.msra.mxu0 %v1284
    %2322 = vmatmul.f32.gmra.mxu0 %v2284
    %v2323 = vpop.f32.mrf.mxu0
    %v2324 = vadd.f32 %v2304, %v2323
    %2325 = vdwg.mxu0
    %2326 = vmatpush.msra.mxu0 %v1280
    %2327 = vmatpush.msra.mxu0 %v1275
    %2328 = vmatpush.msra.mxu0 %v1270
    %2329 = vmatpush.msra.mxu0 %v1265
    %2330 = vmatpush.msra.mxu0 %v1260
    %2331 = vmatpush.msra.mxu0 %v1255
    %2332 = vmatpush.msra.mxu0 %v1250
    %2333 = vmatpush.msra.mxu0 %v1245
    %2334 = vmatpush.msra.mxu0 %v1240
    %2335 = vmatpush.msra.mxu0 %v1235
    %2336 = vmatpush.msra.mxu0 %v1230
    %2337 = vmatpush.msra.mxu0 %v1225
    %2338 = vmatpush.msra.mxu0 %v1220
    %2339 = vmatpush.msra.mxu0 %v1215
    %2340 = vmatpush.msra.mxu0 %v1210
    %2341 = vmatpush.msra.mxu0 %v1205
    %2342 = vmatmul.f32.gmra.mxu0 %v2282
    %v2343 = vpop.f32.mrf.mxu0
    %v2344 = vadd.f32 0.0, %v2343
    %2345 = vdwg.mxu0
    %2346 = vmatpush.msra.mxu0 0.0
    %2347 = vmatpush.msra.mxu0 0.0
    %2348 = vmatpush.msra.mxu0 0.0
    %2349 = vmatpush.msra.mxu0 0.0
    %2350 = vmatpush.msra.mxu0 0.0
    %2351 = vmatpush.msra.mxu0 0.0
    %2352 = vmatpush.msra.mxu0 0.0
    %2353 = vmatpush.msra.mxu0 0.0
    %2354 = vmatpush.msra.mxu0 0.0
    %2355 = vmatpush.msra.mxu0 0.0
    %2356 = vmatpush.msra.mxu0 0.0
    %2357 = vmatpush.msra.mxu0 0.0
    %2358 = vmatpush.msra.mxu0 %v1300
    %2359 = vmatpush.msra.mxu0 %v1295
    %2360 = vmatpush.msra.mxu0 %v1290
    %2361 = vmatpush.msra.mxu0 %v1285
    %2362 = vmatmul.f32.gmra.mxu0 %v2284
    %v2363 = vpop.f32.mrf.mxu0
    %v2364 = vadd.f32 %v2344, %v2363
    %2365 = vdwg.mxu0
    %2366 = vmatpush.msra.mxu0 %v1281
    %2367 = vmatpush.msra.mxu0 %v1276
    %2368 = vmatpush.msra.mxu0 %v1271
    %2369 = vmatpush.msra.mxu0 %v1266
    %2370 = vmatpush.msra.mxu0 %v1261
    %2371 = vmatpush.msra.mxu0 %v1256
    %2372 = vmatpush.msra.mxu0 %v1251
    %2373 = vmatpush.msra.mxu0 %v1246
    %2374 = vmatpush.msra.mxu0 %v1241
    %2375 = vmatpush.msra.mxu0 %v1236
    %2376 = vmatpush.msra.mxu0 %v1231
    %2377 = vmatpush.msra.mxu0 %v1226
    %2378 = vmatpush.msra.mxu0 %v1221
    %2379 = vmatpush.msra.mxu0 %v1216
    %2380 = vmatpush.msra.mxu0 %v1211
    %2381 = vmatpush.msra.mxu0 %v1206
    %2382 = vmatmul.f32.gmra.mxu0 %v2282
    %v2383 = vpop.f32.mrf.mxu0
    %v2384 = vadd.f32 0.0, %v2383
    %2385 = vdwg.mxu0
    %2386 = vmatpush.msra.mxu0 0.0
    %2387 = vmatpush.msra.mxu0 0.0
    %2388 = vmatpush.msra.mxu0 0.0
    %2389 = vmatpush.msra.mxu0 0.0
    %2390 = vmatpush.msra.mxu0 0.0
    %2391 = vmatpush.msra.mxu0 0.0
    %2392 = vmatpush.msra.mxu0 0.0
    %2393 = vmatpush.msra.mxu0 0.0
    %2394 = vmatpush.msra.mxu0 0.0
    %2395 = vmatpush.msra.mxu0 0.0
    %2396 = vmatpush.msra.mxu0 0.0
    %2397 = vmatpush.msra.mxu0 0.0
    %2398 = vmatpush.msra.mxu0 %v1301
    %2399 = vmatpush.msra.mxu0 %v1296
    %2400 = vmatpush.msra.mxu0 %v1291
    %2401 = vmatpush.msra.mxu0 %v1286
    %2402 = vmatmul.f32.gmra.mxu0 %v2284
    %v2403 = vpop.f32.mrf.mxu0
    %v2404 = vadd.f32 %v2384, %v2403
    %2405 = vdwg.mxu0
    %2406 = vmatpush.msra.mxu0 %v1282
    %2407 = vmatpush.msra.mxu0 %v1277
    %2408 = vmatpush.msra.mxu0 %v1272
    %2409 = vmatpush.msra.mxu0 %v1267
    %2410 = vmatpush.msra.mxu0 %v1262
    %2411 = vmatpush.msra.mxu0 %v1257
    %2412 = vmatpush.msra.mxu0 %v1252
    %2413 = vmatpush.msra.mxu0 %v1247
    %2414 = vmatpush.msra.mxu0 %v1242
    %2415 = vmatpush.msra.mxu0 %v1237
    %2416 = vmatpush.msra.mxu0 %v1232
    %2417 = vmatpush.msra.mxu0 %v1227
    %2418 = vmatpush.msra.mxu0 %v1222
    %2419 = vmatpush.msra.mxu0 %v1217
    %2420 = vmatpush.msra.mxu0 %v1212
    %2421 = vmatpush.msra.mxu0 %v1207
    %2422 = vmatmul.f32.gmra.mxu0 %v2282
    %v2423 = vpop.f32.mrf.mxu0
    %v2424 = vadd.f32 0.0, %v2423
    %2425 = vdwg.mxu0
    %2426 = vmatpush.msra.mxu0 0.0
    %2427 = vmatpush.msra.mxu0 0.0
    %2428 = vmatpush.msra.mxu0 0.0
    %2429 = vmatpush.msra.mxu0 0.0
    %2430 = vmatpush.msra.mxu0 0.0
    %2431 = vmatpush.msra.mxu0 0.0
    %2432 = vmatpush.msra.mxu0 0.0
    %2433 = vmatpush.msra.mxu0 0.0
    %2434 = vmatpush.msra.mxu0 0.0
    %2435 = vmatpush.msra.mxu0 0.0
    %2436 = vmatpush.msra.mxu0 0.0
    %2437 = vmatpush.msra.mxu0 0.0
    %2438 = vmatpush.msra.mxu0 %v1302
    %2439 = vmatpush.msra.mxu0 %v1297
    %2440 = vmatpush.msra.mxu0 %v1292
    %2441 = vmatpush.msra.mxu0 %v1287
    %2442 = vmatmul.f32.gmra.mxu0 %v2284
    %v2443 = vpop.f32.mrf.mxu0
    %v2444 = vadd.f32 %v2424, %v2443
    %2445 = vdwg.mxu0
    %2446 = vmatpush.msra.mxu0 %v1283
    %2447 = vmatpush.msra.mxu0 %v1278
    %2448 = vmatpush.msra.mxu0 %v1273
    %2449 = vmatpush.msra.mxu0 %v1268
    %2450 = vmatpush.msra.mxu0 %v1263
    %2451 = vmatpush.msra.mxu0 %v1258
    %2452 = vmatpush.msra.mxu0 %v1253
    %2453 = vmatpush.msra.mxu0 %v1248
    %2454 = vmatpush.msra.mxu0 %v1243
    %2455 = vmatpush.msra.mxu0 %v1238
    %2456 = vmatpush.msra.mxu0 %v1233
    %2457 = vmatpush.msra.mxu0 %v1228
    %2458 = vmatpush.msra.mxu0 %v1223
    %2459 = vmatpush.msra.mxu0 %v1218
    %2460 = vmatpush.msra.mxu0 %v1213
    %2461 = vmatpush.msra.mxu0 %v1208
    %2462 = vmatmul.f32.gmra.mxu0 %v2282
    %v2463 = vpop.f32.mrf.mxu0
    %v2464 = vadd.f32 0.0, %v2463
    %2465 = vdwg.mxu0
    %2466 = vmatpush.msra.mxu0 0.0
    %2467 = vmatpush.msra.mxu0 0.0
    %2468 = vmatpush.msra.mxu0 0.0
    %2469 = vmatpush.msra.mxu0 0.0
    %2470 = vmatpush.msra.mxu0 0.0
    %2471 = vmatpush.msra.mxu0 0.0
    %2472 = vmatpush.msra.mxu0 0.0
    %2473 = vmatpush.msra.mxu0 0.0
    %2474 = vmatpush.msra.mxu0 0.0
    %2475 = vmatpush.msra.mxu0 0.0
    %2476 = vmatpush.msra.mxu0 0.0
    %2477 = vmatpush.msra.mxu0 0.0
    %2478 = vmatpush.msra.mxu0 %v1303
    %2479 = vmatpush.msra.mxu0 %v1298
    %2480 = vmatpush.msra.mxu0 %v1293
    %2481 = vmatpush.msra.mxu0 %v1288
    %2482 = vmatmul.f32.gmra.mxu0 %v2284
    %v2483 = vpop.f32.mrf.mxu0
    %v2484 = vadd.f32 %v2464, %v2483
    %2485 = vdwg.mxu0
    %v2486 = vadd.f32 %v1709, %v2324
    %v2487 = vadd.f32 %v1729, %v2364
    %v2488 = vadd.f32 %v1749, %v2404
    %v2489 = vadd.f32 %v1769, %v2444
    %v2490 = vadd.f32 %v1789, %v2484
    %v2491 = vxor.u32 %v2486, 2147483648
    %v2492 = vxor.u32 %v2487, 2147483648
    %v2493 = vmul.f32 %v2491, 1.442695
    %v2494 = vpow.pop %v2493
    %v2495 = vmul.f32 %v2492, 1.442695
    %v2496 = vpow.pop %v2495
    %v2497 = vadd.f32 %v2494, 1.0
    %v2498 = vadd.f32 %v2496, 1.0
    %v2499 = vrcp.pop %v2497
    %v2500 = vmul.f32 %v2497, %v2499
    %v2501 = vsub.f32 1.0, %v2500
    %v2502 = vmul.f32 %v2499, %v2501
    %v2503 = vadd.f32 %v2499, %v2502
    %vm2504 = vweird.f32 %v2497
    %vm2505 = vweird.f32 %v2499
    %vm2506 = vmor %vm2504, %vm2505
    %v2507 = vsel %vm2506, %v2499, %v2503
    %v2508 = vand.u32 2147483647, %v2497
    %vm2509 = vcmp.eq.f32.partialorder %v2508, 8.507059e+37
    %v2510 = vand.u32 %v2497, 2147483648
    %v2511 = vor.u32 1.1754944e-38, %v2510
    %v2512 = vsel %vm2509, %v2511, %v2507
    %v2513 = vmul.f32 1.0, %v2512
    %v2514 = vrcp.pop %v2498
    %v2515 = vmul.f32 %v2498, %v2514
    %v2516 = vsub.f32 1.0, %v2515
    %v2517 = vmul.f32 %v2514, %v2516
    %v2518 = vadd.f32 %v2514, %v2517
    %vm2519 = vweird.f32 %v2498
    %vm2520 = vweird.f32 %v2514
    %vm2521 = vmor %vm2519, %vm2520
    %v2522 = vsel %vm2521, %v2514, %v2518
    %v2523 = vand.u32 2147483647, %v2498
    %vm2524 = vcmp.eq.f32.partialorder %v2523, 8.507059e+37
    %v2525 = vand.u32 %v2498, 2147483648
    %v2526 = vor.u32 1.1754944e-38, %v2525
    %v2527 = vsel %vm2524, %v2526, %v2522
    %v2528 = vmul.f32 1.0, %v2527
    %v2529 = vxor.u32 %v2488, 2147483648
    %v2530 = vmul.f32 %v2529, 1.442695
    %v2531 = vpow.pop %v2530
    %v2532 = vadd.f32 %v2531, 1.0
    %v2533 = vrcp.pop %v2532
    %v2534 = vmul.f32 %v2532, %v2533
    %v2535 = vsub.f32 1.0, %v2534
    %v2536 = vmul.f32 %v2533, %v2535
    %v2537 = vadd.f32 %v2533, %v2536
    %vm2538 = vweird.f32 %v2532
    %vm2539 = vweird.f32 %v2533
    %vm2540 = vmor %vm2538, %vm2539
    %v2541 = vsel %vm2540, %v2533, %v2537
    %v2542 = vand.u32 2147483647, %v2532
    %vm2543 = vcmp.eq.f32.partialorder %v2542, 8.507059e+37
    %v2544 = vand.u32 %v2532, 2147483648
    %v2545 = vor.u32 1.1754944e-38, %v2544
    %v2546 = vsel %vm2543, %v2545, %v2541
    %v2547 = vmul.f32 1.0, %v2546
    %v2548 = vtanh.pop %v2488
    %v2549 = vtanh.pop %v2489
    %v2550 = vxor.u32 %v2489, 2147483648
    %v2551 = vxor.u32 %v2490, 2147483648
    %v2552 = vmul.f32 %v2550, 1.442695
    %v2553 = vpow.pop %v2552
    %v2554 = vmul.f32 %v2551, 1.442695
    %v2555 = vpow.pop %v2554
    %v2556 = vadd.f32 %v2553, 1.0
    %v2557 = vadd.f32 %v2555, 1.0
    %v2558 = vrcp.pop %v2556
    %v2559 = vmul.f32 %v2556, %v2558
    %v2560 = vsub.f32 1.0, %v2559
    %v2561 = vmul.f32 %v2558, %v2560
    %v2562 = vadd.f32 %v2558, %v2561
    %vm2563 = vweird.f32 %v2556
    %vm2564 = vweird.f32 %v2558
    %vm2565 = vmor %vm2563, %vm2564
    %v2566 = vsel %vm2565, %v2558, %v2562
    %v2567 = vand.u32 2147483647, %v2556
    %vm2568 = vcmp.eq.f32.partialorder %v2567, 8.507059e+37
    %v2569 = vand.u32 %v2556, 2147483648
    %v2570 = vor.u32 1.1754944e-38, %v2569
    %v2571 = vsel %vm2568, %v2570, %v2566
    %v2572 = vmul.f32 1.0, %v2571
    %v2573 = vrcp.pop %v2557
    %v2574 = vmul.f32 %v2557, %v2573
    %v2575 = vsub.f32 1.0, %v2574
    %v2576 = vmul.f32 %v2573, %v2575
    %v2577 = vadd.f32 %v2573, %v2576
    %vm2578 = vweird.f32 %v2557
    %vm2579 = vweird.f32 %v2573
    %vm2580 = vmor %vm2578, %vm2579
    %v2581 = vsel %vm2580, %v2573, %v2577
    %v2582 = vand.u32 2147483647, %v2557
    %vm2583 = vcmp.eq.f32.partialorder %v2582, 8.507059e+37
    %v2584 = vand.u32 %v2557, 2147483648
    %v2585 = vor.u32 1.1754944e-38, %v2584
    %v2586 = vsel %vm2583, %v2585, %v2581
    %v2587 = vmul.f32 1.0, %v2586
    %v2588 = vmul.f32 %v2528, %v2261
    %v2589 = vmul.f32 %v2547, %v2262
    %2592 = vrot.lane.b32.xlu0 %v2548, 64
    %v2593 = vpop.permute.xlu0 %2592
    %2594 = vrot.lane.b32.xlu0 %v2549, 64
    %v2595 = vpop.permute.xlu0 %2594
    %v2596 = vsel %vm1896, %v2593, %v2595
    %v2599 = vmul.f32 %v2513, %v2596
    %v2600 = vmul.f32 %v2528, %v2595
    %2603 = vrot.lane.b32.xlu0 %v2599, 32
    %v2604 = vpop.permute.xlu0 %2603
    %2605 = vrot.lane.b32.xlu0 %v2600, 32
    %v2606 = vpop.permute.xlu0 %2605
    %v2607 = vsel %vm1908, %v2604, %v2606
    %v2610 = vadd.f32 %v2588, %v2604
    %v2611 = vadd.f32 %v2589, %v2607
    %v2612 = vtanh.pop %v2610
    %v2613 = vtanh.pop %v2611
    %2616 = vrot.lane.b32.xlu0 %v2612, 64
    %v2617 = vpop.permute.xlu0 %2616
    %2618 = vrot.lane.b32.xlu0 %v2613, 64
    %v2619 = vpop.permute.xlu0 %2618
    %v2620 = vsel %vm1896, %v2617, %v2619
    %v2623 = vmul.f32 %v2572, %v2617
    %v2624 = vmul.f32 %v2587, %v2620
    %v2626 = vperm.slane %v1407, 0
    %v2627 = vperm.slane %v1407, 1
    %v2628 = vperm.slane %v1407, 2
    %v2629 = vperm.slane %v1407, 3
    %v2630 = vperm.slane %v1407, 4
    %2636 = vmatpush.msra.mxu0 %v1179
    %2637 = vmatpush.msra.mxu0 %v1174
    %2638 = vmatpush.msra.mxu0 %v1169
    %2639 = vmatpush.msra.mxu0 %v1164
    %2640 = vmatpush.msra.mxu0 %v1159
    %2641 = vmatpush.msra.mxu0 %v1154
    %2642 = vmatpush.msra.mxu0 %v1149
    %2643 = vmatpush.msra.mxu0 %v1144
    %2644 = vmatpush.msra.mxu0 %v1139
    %2645 = vmatpush.msra.mxu0 %v1134
    %2646 = vmatpush.msra.mxu0 %v1129
    %2647 = vmatpush.msra.mxu0 %v1124
    %2648 = vmatpush.msra.mxu0 %v1119
    %2649 = vmatpush.msra.mxu0 %v1114
    %2650 = vmatpush.msra.mxu0 %v1109
    %2651 = vmatpush.msra.mxu0 %v1104
    %2652 = vmatmul.f32.gmra.mxu0 %v1933
    %v2653 = vpop.f32.mrf.mxu0
    %v2654 = vadd.f32 %v2626, %v2653
    %2655 = vdwg.mxu0
    %2656 = vmatpush.msra.mxu0 0.0
    %2657 = vmatpush.msra.mxu0 0.0
    %2658 = vmatpush.msra.mxu0 0.0
    %2659 = vmatpush.msra.mxu0 0.0
    %2660 = vmatpush.msra.mxu0 0.0
    %2661 = vmatpush.msra.mxu0 0.0
    %2662 = vmatpush.msra.mxu0 0.0
    %2663 = vmatpush.msra.mxu0 0.0
    %2664 = vmatpush.msra.mxu0 0.0
    %2665 = vmatpush.msra.mxu0 0.0
    %2666 = vmatpush.msra.mxu0 0.0
    %2667 = vmatpush.msra.mxu0 0.0
    %2668 = vmatpush.msra.mxu0 %v1199
    %2669 = vmatpush.msra.mxu0 %v1194
    %2670 = vmatpush.msra.mxu0 %v1189
    %2671 = vmatpush.msra.mxu0 %v1184
    %2672 = vmatmul.f32.gmra.mxu0 %v1935
    %v2673 = vpop.f32.mrf.mxu0
    %v2674 = vadd.f32 %v2654, %v2673
    %2675 = vdwg.mxu0
    %2676 = vmatpush.msra.mxu0 %v1180
    %2677 = vmatpush.msra.mxu0 %v1175
    %2678 = vmatpush.msra.mxu0 %v1170
    %2679 = vmatpush.msra.mxu0 %v1165
    %2680 = vmatpush.msra.mxu0 %v1160
    %2681 = vmatpush.msra.mxu0 %v1155
    %2682 = vmatpush.msra.mxu0 %v1150
    %2683 = vmatpush.msra.mxu0 %v1145
    %2684 = vmatpush.msra.mxu0 %v1140
    %2685 = vmatpush.msra.mxu0 %v1135
    %2686 = vmatpush.msra.mxu0 %v1130
    %2687 = vmatpush.msra.mxu0 %v1125
    %2688 = vmatpush.msra.mxu0 %v1120
    %2689 = vmatpush.msra.mxu0 %v1115
    %2690 = vmatpush.msra.mxu0 %v1110
    %2691 = vmatpush.msra.mxu0 %v1105
    %2692 = vmatmul.f32.gmra.mxu0 %v1933
    %v2693 = vpop.f32.mrf.mxu0
    %v2694 = vadd.f32 %v2627, %v2693
    %2695 = vdwg.mxu0
    %2696 = vmatpush.msra.mxu0 0.0
    %2697 = vmatpush.msra.mxu0 0.0
    %2698 = vmatpush.msra.mxu0 0.0
    %2699 = vmatpush.msra.mxu0 0.0
    %2700 = vmatpush.msra.mxu0 0.0
    %2701 = vmatpush.msra.mxu0 0.0
    %2702 = vmatpush.msra.mxu0 0.0
    %2703 = vmatpush.msra.mxu0 0.0
    %2704 = vmatpush.msra.mxu0 0.0
    %2705 = vmatpush.msra.mxu0 0.0
    %2706 = vmatpush.msra.mxu0 0.0
    %2707 = vmatpush.msra.mxu0 0.0
    %2708 = vmatpush.msra.mxu0 %v1200
    %2709 = vmatpush.msra.mxu0 %v1195
    %2710 = vmatpush.msra.mxu0 %v1190
    %2711 = vmatpush.msra.mxu0 %v1185
    %2712 = vmatmul.f32.gmra.mxu0 %v1935
    %v2713 = vpop.f32.mrf.mxu0
    %v2714 = vadd.f32 %v2694, %v2713
    %2715 = vdwg.mxu0
    %2716 = vmatpush.msra.mxu0 %v1181
    %2717 = vmatpush.msra.mxu0 %v1176
    %2718 = vmatpush.msra.mxu0 %v1171
    %2719 = vmatpush.msra.mxu0 %v1166
    %2720 = vmatpush.msra.mxu0 %v1161
    %2721 = vmatpush.msra.mxu0 %v1156
    %2722 = vmatpush.msra.mxu0 %v1151
    %2723 = vmatpush.msra.mxu0 %v1146
    %2724 = vmatpush.msra.mxu0 %v1141
    %2725 = vmatpush.msra.mxu0 %v1136
    %2726 = vmatpush.msra.mxu0 %v1131
    %2727 = vmatpush.msra.mxu0 %v1126
    %2728 = vmatpush.msra.mxu0 %v1121
    %2729 = vmatpush.msra.mxu0 %v1116
    %2730 = vmatpush.msra.mxu0 %v1111
    %2731 = vmatpush.msra.mxu0 %v1106
    %2732 = vmatmul.f32.gmra.mxu0 %v1933
    %v2733 = vpop.f32.mrf.mxu0
    %v2734 = vadd.f32 %v2628, %v2733
    %2735 = vdwg.mxu0
    %2736 = vmatpush.msra.mxu0 0.0
    %2737 = vmatpush.msra.mxu0 0.0
    %2738 = vmatpush.msra.mxu0 0.0
    %2739 = vmatpush.msra.mxu0 0.0
    %2740 = vmatpush.msra.mxu0 0.0
    %2741 = vmatpush.msra.mxu0 0.0
    %2742 = vmatpush.msra.mxu0 0.0
    %2743 = vmatpush.msra.mxu0 0.0
    %2744 = vmatpush.msra.mxu0 0.0
    %2745 = vmatpush.msra.mxu0 0.0
    %2746 = vmatpush.msra.mxu0 0.0
    %2747 = vmatpush.msra.mxu0 0.0
    %2748 = vmatpush.msra.mxu0 %v1201
    %2749 = vmatpush.msra.mxu0 %v1196
    %2750 = vmatpush.msra.mxu0 %v1191
    %2751 = vmatpush.msra.mxu0 %v1186
    %2752 = vmatmul.f32.gmra.mxu0 %v1935
    %v2753 = vpop.f32.mrf.mxu0
    %v2754 = vadd.f32 %v2734, %v2753
    %2755 = vdwg.mxu0
    %2756 = vmatpush.msra.mxu0 %v1182
    %2757 = vmatpush.msra.mxu0 %v1177
    %2758 = vmatpush.msra.mxu0 %v1172
    %2759 = vmatpush.msra.mxu0 %v1167
    %2760 = vmatpush.msra.mxu0 %v1162
    %2761 = vmatpush.msra.mxu0 %v1157
    %2762 = vmatpush.msra.mxu0 %v1152
    %2763 = vmatpush.msra.mxu0 %v1147
    %2764 = vmatpush.msra.mxu0 %v1142
    %2765 = vmatpush.msra.mxu0 %v1137
    %2766 = vmatpush.msra.mxu0 %v1132
    %2767 = vmatpush.msra.mxu0 %v1127
    %2768 = vmatpush.msra.mxu0 %v1122
    %2769 = vmatpush.msra.mxu0 %v1117
    %2770 = vmatpush.msra.mxu0 %v1112
    %2771 = vmatpush.msra.mxu0 %v1107
    %2772 = vmatmul.f32.gmra.mxu0 %v1933
    %v2773 = vpop.f32.mrf.mxu0
    %v2774 = vadd.f32 %v2629, %v2773
    %2775 = vdwg.mxu0
    %2776 = vmatpush.msra.mxu0 0.0
    %2777 = vmatpush.msra.mxu0 0.0
    %2778 = vmatpush.msra.mxu0 0.0
    %2779 = vmatpush.msra.mxu0 0.0
    %2780 = vmatpush.msra.mxu0 0.0
    %2781 = vmatpush.msra.mxu0 0.0
    %2782 = vmatpush.msra.mxu0 0.0
    %2783 = vmatpush.msra.mxu0 0.0
    %2784 = vmatpush.msra.mxu0 0.0
    %2785 = vmatpush.msra.mxu0 0.0
    %2786 = vmatpush.msra.mxu0 0.0
    %2787 = vmatpush.msra.mxu0 0.0
    %2788 = vmatpush.msra.mxu0 %v1202
    %2789 = vmatpush.msra.mxu0 %v1197
    %2790 = vmatpush.msra.mxu0 %v1192
    %2791 = vmatpush.msra.mxu0 %v1187
    %2792 = vmatmul.f32.gmra.mxu0 %v1935
    %v2793 = vpop.f32.mrf.mxu0
    %v2794 = vadd.f32 %v2774, %v2793
    %2795 = vdwg.mxu0
    %2796 = vmatpush.msra.mxu0 %v1183
    %2797 = vmatpush.msra.mxu0 %v1178
    %2798 = vmatpush.msra.mxu0 %v1173
    %2799 = vmatpush.msra.mxu0 %v1168
    %2800 = vmatpush.msra.mxu0 %v1163
    %2801 = vmatpush.msra.mxu0 %v1158
    %2802 = vmatpush.msra.mxu0 %v1153
    %2803 = vmatpush.msra.mxu0 %v1148
    %2804 = vmatpush.msra.mxu0 %v1143
    %2805 = vmatpush.msra.mxu0 %v1138
    %2806 = vmatpush.msra.mxu0 %v1133
    %2807 = vmatpush.msra.mxu0 %v1128
    %2808 = vmatpush.msra.mxu0 %v1123
    %2809 = vmatpush.msra.mxu0 %v1118
    %2810 = vmatpush.msra.mxu0 %v1113
    %2811 = vmatpush.msra.mxu0 %v1108
    %2812 = vmatmul.f32.gmra.mxu0 %v1933
    %v2813 = vpop.f32.mrf.mxu0
    %v2814 = vadd.f32 %v2630, %v2813
    %2815 = vdwg.mxu0
    %2816 = vmatpush.msra.mxu0 0.0
    %2817 = vmatpush.msra.mxu0 0.0
    %2818 = vmatpush.msra.mxu0 0.0
    %2819 = vmatpush.msra.mxu0 0.0
    %2820 = vmatpush.msra.mxu0 0.0
    %2821 = vmatpush.msra.mxu0 0.0
    %2822 = vmatpush.msra.mxu0 0.0
    %2823 = vmatpush.msra.mxu0 0.0
    %2824 = vmatpush.msra.mxu0 0.0
    %2825 = vmatpush.msra.mxu0 0.0
    %2826 = vmatpush.msra.mxu0 0.0
    %2827 = vmatpush.msra.mxu0 0.0
    %2828 = vmatpush.msra.mxu0 %v1203
    %2829 = vmatpush.msra.mxu0 %v1198
    %2830 = vmatpush.msra.mxu0 %v1193
    %2831 = vmatpush.msra.mxu0 %v1188
    %2832 = vmatmul.f32.gmra.mxu0 %v1935
    %v2833 = vpop.f32.mrf.mxu0
    %v2834 = vadd.f32 %v2814, %v2833
    %2835 = vdwg.mxu0
    %2836 = vmatpush.msra.mxu0 %v1179
    %2837 = vmatpush.msra.mxu0 %v1174
    %2838 = vmatpush.msra.mxu0 %v1169
    %2839 = vmatpush.msra.mxu0 %v1164
    %2840 = vmatpush.msra.mxu0 %v1159
    %2841 = vmatpush.msra.mxu0 %v1154
    %2842 = vmatpush.msra.mxu0 %v1149
    %2843 = vmatpush.msra.mxu0 %v1144
    %2844 = vmatpush.msra.mxu0 %v1139
    %2845 = vmatpush.msra.mxu0 %v1134
    %2846 = vmatpush.msra.mxu0 %v1129
    %2847 = vmatpush.msra.mxu0 %v1124
    %2848 = vmatpush.msra.mxu0 %v1119
    %2849 = vmatpush.msra.mxu0 %v1114
    %2850 = vmatpush.msra.mxu0 %v1109
    %2851 = vmatpush.msra.mxu0 %v1104
    %2852 = vmatmul.f32.gmra.mxu0 %v2282
    %v2853 = vpop.f32.mrf.mxu0
    %v2854 = vadd.f32 %v2626, %v2853
    %2855 = vdwg.mxu0
    %2856 = vmatpush.msra.mxu0 0.0
    %2857 = vmatpush.msra.mxu0 0.0
    %2858 = vmatpush.msra.mxu0 0.0
    %2859 = vmatpush.msra.mxu0 0.0
    %2860 = vmatpush.msra.mxu0 0.0
    %2861 = vmatpush.msra.mxu0 0.0
    %2862 = vmatpush.msra.mxu0 0.0
    %2863 = vmatpush.msra.mxu0 0.0
    %2864 = vmatpush.msra.mxu0 0.0
    %2865 = vmatpush.msra.mxu0 0.0
    %2866 = vmatpush.msra.mxu0 0.0
    %2867 = vmatpush.msra.mxu0 0.0
    %2868 = vmatpush.msra.mxu0 %v1199
    %2869 = vmatpush.msra.mxu0 %v1194
    %2870 = vmatpush.msra.mxu0 %v1189
    %2871 = vmatpush.msra.mxu0 %v1184
    %2872 = vmatmul.f32.gmra.mxu0 %v2284
    %v2873 = vpop.f32.mrf.mxu0
    %v2874 = vadd.f32 %v2854, %v2873
    %2875 = vdwg.mxu0
    %2876 = vmatpush.msra.mxu0 %v1180
    %2877 = vmatpush.msra.mxu0 %v1175
    %2878 = vmatpush.msra.mxu0 %v1170
    %2879 = vmatpush.msra.mxu0 %v1165
    %2880 = vmatpush.msra.mxu0 %v1160
    %2881 = vmatpush.msra.mxu0 %v1155
    %2882 = vmatpush.msra.mxu0 %v1150
    %2883 = vmatpush.msra.mxu0 %v1145
    %2884 = vmatpush.msra.mxu0 %v1140
    %2885 = vmatpush.msra.mxu0 %v1135
    %2886 = vmatpush.msra.mxu0 %v1130
    %2887 = vmatpush.msra.mxu0 %v1125
    %2888 = vmatpush.msra.mxu0 %v1120
    %2889 = vmatpush.msra.mxu0 %v1115
    %2890 = vmatpush.msra.mxu0 %v1110
    %2891 = vmatpush.msra.mxu0 %v1105
    %2892 = vmatmul.f32.gmra.mxu0 %v2282
    %v2893 = vpop.f32.mrf.mxu0
    %v2894 = vadd.f32 %v2627, %v2893
    %2895 = vdwg.mxu0
    %2896 = vmatpush.msra.mxu0 0.0
    %2897 = vmatpush.msra.mxu0 0.0
    %2898 = vmatpush.msra.mxu0 0.0
    %2899 = vmatpush.msra.mxu0 0.0
    %2900 = vmatpush.msra.mxu0 0.0
    %2901 = vmatpush.msra.mxu0 0.0
    %2902 = vmatpush.msra.mxu0 0.0
    %2903 = vmatpush.msra.mxu0 0.0
    %2904 = vmatpush.msra.mxu0 0.0
    %2905 = vmatpush.msra.mxu0 0.0
    %2906 = vmatpush.msra.mxu0 0.0
    %2907 = vmatpush.msra.mxu0 0.0
    %2908 = vmatpush.msra.mxu0 %v1200
    %2909 = vmatpush.msra.mxu0 %v1195
    %2910 = vmatpush.msra.mxu0 %v1190
    %2911 = vmatpush.msra.mxu0 %v1185
    %2912 = vmatmul.f32.gmra.mxu0 %v2284
    %v2913 = vpop.f32.mrf.mxu0
    %v2914 = vadd.f32 %v2894, %v2913
    %2915 = vdwg.mxu0
    %2916 = vmatpush.msra.mxu0 %v1181
    %2917 = vmatpush.msra.mxu0 %v1176
    %2918 = vmatpush.msra.mxu0 %v1171
    %2919 = vmatpush.msra.mxu0 %v1166
    %2920 = vmatpush.msra.mxu0 %v1161
    %2921 = vmatpush.msra.mxu0 %v1156
    %2922 = vmatpush.msra.mxu0 %v1151
    %2923 = vmatpush.msra.mxu0 %v1146
    %2924 = vmatpush.msra.mxu0 %v1141
    %2925 = vmatpush.msra.mxu0 %v1136
    %2926 = vmatpush.msra.mxu0 %v1131
    %2927 = vmatpush.msra.mxu0 %v1126
    %2928 = vmatpush.msra.mxu0 %v1121
    %2929 = vmatpush.msra.mxu0 %v1116
    %2930 = vmatpush.msra.mxu0 %v1111
    %2931 = vmatpush.msra.mxu0 %v1106
    %2932 = vmatmul.f32.gmra.mxu0 %v2282
    %v2933 = vpop.f32.mrf.mxu0
    %v2934 = vadd.f32 %v2628, %v2933
    %2935 = vdwg.mxu0
    %2936 = vmatpush.msra.mxu0 0.0
    %2937 = vmatpush.msra.mxu0 0.0
    %2938 = vmatpush.msra.mxu0 0.0
    %2939 = vmatpush.msra.mxu0 0.0
    %2940 = vmatpush.msra.mxu0 0.0
    %2941 = vmatpush.msra.mxu0 0.0
    %2942 = vmatpush.msra.mxu0 0.0
    %2943 = vmatpush.msra.mxu0 0.0
    %2944 = vmatpush.msra.mxu0 0.0
    %2945 = vmatpush.msra.mxu0 0.0
    %2946 = vmatpush.msra.mxu0 0.0
    %2947 = vmatpush.msra.mxu0 0.0
    %2948 = vmatpush.msra.mxu0 %v1201
    %2949 = vmatpush.msra.mxu0 %v1196
    %2950 = vmatpush.msra.mxu0 %v1191
    %2951 = vmatpush.msra.mxu0 %v1186
    %2952 = vmatmul.f32.gmra.mxu0 %v2284
    %v2953 = vpop.f32.mrf.mxu0
    %v2954 = vadd.f32 %v2934, %v2953
    %2955 = vdwg.mxu0
    %2956 = vmatpush.msra.mxu0 %v1182
    %2957 = vmatpush.msra.mxu0 %v1177
    %2958 = vmatpush.msra.mxu0 %v1172
    %2959 = vmatpush.msra.mxu0 %v1167
    %2960 = vmatpush.msra.mxu0 %v1162
    %2961 = vmatpush.msra.mxu0 %v1157
    %2962 = vmatpush.msra.mxu0 %v1152
    %2963 = vmatpush.msra.mxu0 %v1147
    %2964 = vmatpush.msra.mxu0 %v1142
    %2965 = vmatpush.msra.mxu0 %v1137
    %2966 = vmatpush.msra.mxu0 %v1132
    %2967 = vmatpush.msra.mxu0 %v1127
    %2968 = vmatpush.msra.mxu0 %v1122
    %2969 = vmatpush.msra.mxu0 %v1117
    %2970 = vmatpush.msra.mxu0 %v1112
    %2971 = vmatpush.msra.mxu0 %v1107
    %2972 = vmatmul.f32.gmra.mxu0 %v2282
    %v2973 = vpop.f32.mrf.mxu0
    %v2974 = vadd.f32 %v2629, %v2973
    %2975 = vdwg.mxu0
    %2976 = vmatpush.msra.mxu0 0.0
    %2977 = vmatpush.msra.mxu0 0.0
    %2978 = vmatpush.msra.mxu0 0.0
    %2979 = vmatpush.msra.mxu0 0.0
    %2980 = vmatpush.msra.mxu0 0.0
    %2981 = vmatpush.msra.mxu0 0.0
    %2982 = vmatpush.msra.mxu0 0.0
    %2983 = vmatpush.msra.mxu0 0.0
    %2984 = vmatpush.msra.mxu0 0.0
    %2985 = vmatpush.msra.mxu0 0.0
    %2986 = vmatpush.msra.mxu0 0.0
    %2987 = vmatpush.msra.mxu0 0.0
    %2988 = vmatpush.msra.mxu0 %v1202
    %2989 = vmatpush.msra.mxu0 %v1197
    %2990 = vmatpush.msra.mxu0 %v1192
    %2991 = vmatpush.msra.mxu0 %v1187
    %2992 = vmatmul.f32.gmra.mxu0 %v2284
    %v2993 = vpop.f32.mrf.mxu0
    %v2994 = vadd.f32 %v2974, %v2993
    %2995 = vdwg.mxu0
    %2996 = vmatpush.msra.mxu0 %v1183
    %2997 = vmatpush.msra.mxu0 %v1178
    %2998 = vmatpush.msra.mxu0 %v1173
    %2999 = vmatpush.msra.mxu0 %v1168
    %3000 = vmatpush.msra.mxu0 %v1163
    %3001 = vmatpush.msra.mxu0 %v1158
    %3002 = vmatpush.msra.mxu0 %v1153
    %3003 = vmatpush.msra.mxu0 %v1148
    %3004 = vmatpush.msra.mxu0 %v1143
    %3005 = vmatpush.msra.mxu0 %v1138
    %3006 = vmatpush.msra.mxu0 %v1133
    %3007 = vmatpush.msra.mxu0 %v1128
    %3008 = vmatpush.msra.mxu0 %v1123
    %3009 = vmatpush.msra.mxu0 %v1118
    %3010 = vmatpush.msra.mxu0 %v1113
    %3011 = vmatpush.msra.mxu0 %v1108
    %3012 = vmatmul.f32.gmra.mxu0 %v2282
    %v3013 = vpop.f32.mrf.mxu0
    %v3014 = vadd.f32 %v2630, %v3013
    %3015 = vdwg.mxu0
    %3016 = vmatpush.msra.mxu0 0.0
    %3017 = vmatpush.msra.mxu0 0.0
    %3018 = vmatpush.msra.mxu0 0.0
    %3019 = vmatpush.msra.mxu0 0.0
    %3020 = vmatpush.msra.mxu0 0.0
    %3021 = vmatpush.msra.mxu0 0.0
    %3022 = vmatpush.msra.mxu0 0.0
    %3023 = vmatpush.msra.mxu0 0.0
    %3024 = vmatpush.msra.mxu0 0.0
    %3025 = vmatpush.msra.mxu0 0.0
    %3026 = vmatpush.msra.mxu0 0.0
    %3027 = vmatpush.msra.mxu0 0.0
    %3028 = vmatpush.msra.mxu0 %v1203
    %3029 = vmatpush.msra.mxu0 %v1198
    %3030 = vmatpush.msra.mxu0 %v1193
    %3031 = vmatpush.msra.mxu0 %v1188
    %3032 = vmatmul.f32.gmra.mxu0 %v2284
    %v3033 = vpop.f32.mrf.mxu0
    %v3034 = vadd.f32 %v3014, %v3033
    %3035 = vdwg.mxu0
    %3038 = vrot.lane.b32.xlu0 %v2623, 32
    %v3039 = vpop.permute.xlu0 %3038
    %3040 = vrot.lane.b32.xlu0 %v2624, 32
    %v3041 = vpop.permute.xlu0 %3040
    %v3042 = vsel %vm1908, %v3039, %v3041
    %v3044 = vsel %vm1908, %v3041, 0
    %3046 = vmatpush.msra.mxu0 %v1179
    %3047 = vmatpush.msra.mxu0 %v1174
    %3048 = vmatpush.msra.mxu0 %v1169
    %3049 = vmatpush.msra.mxu0 %v1164
    %3050 = vmatpush.msra.mxu0 %v1159
    %3051 = vmatpush.msra.mxu0 %v1154
    %3052 = vmatpush.msra.mxu0 %v1149
    %3053 = vmatpush.msra.mxu0 %v1144
    %3054 = vmatpush.msra.mxu0 %v1139
    %3055 = vmatpush.msra.mxu0 %v1134
    %3056 = vmatpush.msra.mxu0 %v1129
    %3057 = vmatpush.msra.mxu0 %v1124
    %3058 = vmatpush.msra.mxu0 %v1119
    %3059 = vmatpush.msra.mxu0 %v1114
    %3060 = vmatpush.msra.mxu0 %v1109
    %3061 = vmatpush.msra.mxu0 %v1104
    %3062 = vmatmul.f32.gmra.mxu0 %v3042
    %v3063 = vpop.f32.mrf.mxu0
    %v3064 = vadd.f32 %v2626, %v3063
    %3065 = vdwg.mxu0
    %3066 = vmatpush.msra.mxu0 0.0
    %3067 = vmatpush.msra.mxu0 0.0
    %3068 = vmatpush.msra.mxu0 0.0
    %3069 = vmatpush.msra.mxu0 0.0
    %3070 = vmatpush.msra.mxu0 0.0
    %3071 = vmatpush.msra.mxu0 0.0
    %3072 = vmatpush.msra.mxu0 0.0
    %3073 = vmatpush.msra.mxu0 0.0
    %3074 = vmatpush.msra.mxu0 0.0
    %3075 = vmatpush.msra.mxu0 0.0
    %3076 = vmatpush.msra.mxu0 0.0
    %3077 = vmatpush.msra.mxu0 0.0
    %3078 = vmatpush.msra.mxu0 %v1199
    %3079 = vmatpush.msra.mxu0 %v1194
    %3080 = vmatpush.msra.mxu0 %v1189
    %3081 = vmatpush.msra.mxu0 %v1184
    %3082 = vmatmul.f32.gmra.mxu0 %v3044
    %v3083 = vpop.f32.mrf.mxu0
    %v3084 = vadd.f32 %v3064, %v3083
    %3085 = vdwg.mxu0
    %3086 = vmatpush.msra.mxu0 %v1180
    %3087 = vmatpush.msra.mxu0 %v1175
    %3088 = vmatpush.msra.mxu0 %v1170
    %3089 = vmatpush.msra.mxu0 %v1165
    %3090 = vmatpush.msra.mxu0 %v1160
    %3091 = vmatpush.msra.mxu0 %v1155
    %3092 = vmatpush.msra.mxu0 %v1150
    %3093 = vmatpush.msra.mxu0 %v1145
    %3094 = vmatpush.msra.mxu0 %v1140
    %3095 = vmatpush.msra.mxu0 %v1135
    %3096 = vmatpush.msra.mxu0 %v1130
    %3097 = vmatpush.msra.mxu0 %v1125
    %3098 = vmatpush.msra.mxu0 %v1120
    %3099 = vmatpush.msra.mxu0 %v1115
    %3100 = vmatpush.msra.mxu0 %v1110
    %3101 = vmatpush.msra.mxu0 %v1105
    %3102 = vmatmul.f32.gmra.mxu0 %v3042
    %v3103 = vpop.f32.mrf.mxu0
    %v3104 = vadd.f32 %v2627, %v3103
    %3105 = vdwg.mxu0
    %3106 = vmatpush.msra.mxu0 0.0
    %3107 = vmatpush.msra.mxu0 0.0
    %3108 = vmatpush.msra.mxu0 0.0
    %3109 = vmatpush.msra.mxu0 0.0
    %3110 = vmatpush.msra.mxu0 0.0
    %3111 = vmatpush.msra.mxu0 0.0
    %3112 = vmatpush.msra.mxu0 0.0
    %3113 = vmatpush.msra.mxu0 0.0
    %3114 = vmatpush.msra.mxu0 0.0
    %3115 = vmatpush.msra.mxu0 0.0
    %3116 = vmatpush.msra.mxu0 0.0
    %3117 = vmatpush.msra.mxu0 0.0
    %3118 = vmatpush.msra.mxu0 %v1200
    %3119 = vmatpush.msra.mxu0 %v1195
    %3120 = vmatpush.msra.mxu0 %v1190
    %3121 = vmatpush.msra.mxu0 %v1185
    %3122 = vmatmul.f32.gmra.mxu0 %v3044
    %v3123 = vpop.f32.mrf.mxu0
    %v3124 = vadd.f32 %v3104, %v3123
    %3125 = vdwg.mxu0
    %3126 = vmatpush.msra.mxu0 %v1181
    %3127 = vmatpush.msra.mxu0 %v1176
    %3128 = vmatpush.msra.mxu0 %v1171
    %3129 = vmatpush.msra.mxu0 %v1166
    %3130 = vmatpush.msra.mxu0 %v1161
    %3131 = vmatpush.msra.mxu0 %v1156
    %3132 = vmatpush.msra.mxu0 %v1151
    %3133 = vmatpush.msra.mxu0 %v1146
    %3134 = vmatpush.msra.mxu0 %v1141
    %3135 = vmatpush.msra.mxu0 %v1136
    %3136 = vmatpush.msra.mxu0 %v1131
    %3137 = vmatpush.msra.mxu0 %v1126
    %3138 = vmatpush.msra.mxu0 %v1121
    %3139 = vmatpush.msra.mxu0 %v1116
    %3140 = vmatpush.msra.mxu0 %v1111
    %3141 = vmatpush.msra.mxu0 %v1106
    %3142 = vmatmul.f32.gmra.mxu0 %v3042
    %v3143 = vpop.f32.mrf.mxu0
    %v3144 = vadd.f32 %v2628, %v3143
    %3145 = vdwg.mxu0
    %3146 = vmatpush.msra.mxu0 0.0
    %3147 = vmatpush.msra.mxu0 0.0
    %3148 = vmatpush.msra.mxu0 0.0
    %3149 = vmatpush.msra.mxu0 0.0
    %3150 = vmatpush.msra.mxu0 0.0
    %3151 = vmatpush.msra.mxu0 0.0
    %3152 = vmatpush.msra.mxu0 0.0
    %3153 = vmatpush.msra.mxu0 0.0
    %3154 = vmatpush.msra.mxu0 0.0
    %3155 = vmatpush.msra.mxu0 0.0
    %3156 = vmatpush.msra.mxu0 0.0
    %3157 = vmatpush.msra.mxu0 0.0
    %3158 = vmatpush.msra.mxu0 %v1201
    %3159 = vmatpush.msra.mxu0 %v1196
    %3160 = vmatpush.msra.mxu0 %v1191
    %3161 = vmatpush.msra.mxu0 %v1186
    %3162 = vmatmul.f32.gmra.mxu0 %v3044
    %v3163 = vpop.f32.mrf.mxu0
    %v3164 = vadd.f32 %v3144, %v3163
    %3165 = vdwg.mxu0
    %3166 = vmatpush.msra.mxu0 %v1182
    %3167 = vmatpush.msra.mxu0 %v1177
    %3168 = vmatpush.msra.mxu0 %v1172
    %3169 = vmatpush.msra.mxu0 %v1167
    %3170 = vmatpush.msra.mxu0 %v1162
    %3171 = vmatpush.msra.mxu0 %v1157
    %3172 = vmatpush.msra.mxu0 %v1152
    %3173 = vmatpush.msra.mxu0 %v1147
    %3174 = vmatpush.msra.mxu0 %v1142
    %3175 = vmatpush.msra.mxu0 %v1137
    %3176 = vmatpush.msra.mxu0 %v1132
    %3177 = vmatpush.msra.mxu0 %v1127
    %3178 = vmatpush.msra.mxu0 %v1122
    %3179 = vmatpush.msra.mxu0 %v1117
    %3180 = vmatpush.msra.mxu0 %v1112
    %3181 = vmatpush.msra.mxu0 %v1107
    %3182 = vmatmul.f32.gmra.mxu0 %v3042
    %v3183 = vpop.f32.mrf.mxu0
    %v3184 = vadd.f32 %v2629, %v3183
    %3185 = vdwg.mxu0
    %3186 = vmatpush.msra.mxu0 0.0
    %3187 = vmatpush.msra.mxu0 0.0
    %3188 = vmatpush.msra.mxu0 0.0
    %3189 = vmatpush.msra.mxu0 0.0
    %3190 = vmatpush.msra.mxu0 0.0
    %3191 = vmatpush.msra.mxu0 0.0
    %3192 = vmatpush.msra.mxu0 0.0
    %3193 = vmatpush.msra.mxu0 0.0
    %3194 = vmatpush.msra.mxu0 0.0
    %3195 = vmatpush.msra.mxu0 0.0
    %3196 = vmatpush.msra.mxu0 0.0
    %3197 = vmatpush.msra.mxu0 0.0
    %3198 = vmatpush.msra.mxu0 %v1202
    %3199 = vmatpush.msra.mxu0 %v1197
    %3200 = vmatpush.msra.mxu0 %v1192
    %3201 = vmatpush.msra.mxu0 %v1187
    %3202 = vmatmul.f32.gmra.mxu0 %v3044
    %v3203 = vpop.f32.mrf.mxu0
    %v3204 = vadd.f32 %v3184, %v3203
    %3205 = vdwg.mxu0
    %3206 = vmatpush.msra.mxu0 %v1183
    %3207 = vmatpush.msra.mxu0 %v1178
    %3208 = vmatpush.msra.mxu0 %v1173
    %3209 = vmatpush.msra.mxu0 %v1168
    %3210 = vmatpush.msra.mxu0 %v1163
    %3211 = vmatpush.msra.mxu0 %v1158
    %3212 = vmatpush.msra.mxu0 %v1153
    %3213 = vmatpush.msra.mxu0 %v1148
    %3214 = vmatpush.msra.mxu0 %v1143
    %3215 = vmatpush.msra.mxu0 %v1138
    %3216 = vmatpush.msra.mxu0 %v1133
    %3217 = vmatpush.msra.mxu0 %v1128
    %3218 = vmatpush.msra.mxu0 %v1123
    %3219 = vmatpush.msra.mxu0 %v1118
    %3220 = vmatpush.msra.mxu0 %v1113
    %3221 = vmatpush.msra.mxu0 %v1108
    %3222 = vmatmul.f32.gmra.mxu0 %v3042
    %v3223 = vpop.f32.mrf.mxu0
    %v3224 = vadd.f32 %v2630, %v3223
    %3225 = vdwg.mxu0
    %3226 = vmatpush.msra.mxu0 0.0
    %3227 = vmatpush.msra.mxu0 0.0
    %3228 = vmatpush.msra.mxu0 0.0
    %3229 = vmatpush.msra.mxu0 0.0
    %3230 = vmatpush.msra.mxu0 0.0
    %3231 = vmatpush.msra.mxu0 0.0
    %3232 = vmatpush.msra.mxu0 0.0
    %3233 = vmatpush.msra.mxu0 0.0
    %3234 = vmatpush.msra.mxu0 0.0
    %3235 = vmatpush.msra.mxu0 0.0
    %3236 = vmatpush.msra.mxu0 0.0
    %3237 = vmatpush.msra.mxu0 0.0
    %3238 = vmatpush.msra.mxu0 %v1203
    %3239 = vmatpush.msra.mxu0 %v1198
    %3240 = vmatpush.msra.mxu0 %v1193
    %3241 = vmatpush.msra.mxu0 %v1188
    %3242 = vmatmul.f32.gmra.mxu0 %v3044
    %v3243 = vpop.f32.mrf.mxu0
    %v3244 = vadd.f32 %v3224, %v3243
    %3245 = vdwg.mxu0
    %v3246 = vxor.u32 %v2674, 2147483648
    %v3247 = vxor.u32 %v2714, 2147483648
    %v3248 = vmul.f32 %v3246, 1.442695
    %v3249 = vpow.pop %v3248
    %v3250 = vmul.f32 %v3247, 1.442695
    %v3251 = vpow.pop %v3250
    %v3252 = vadd.f32 %v3249, 1.0
    %v3253 = vadd.f32 %v3251, 1.0
    %v3254 = vrcp.pop %v3252
    %v3255 = vmul.f32 %v3252, %v3254
    %v3256 = vsub.f32 1.0, %v3255
    %v3257 = vmul.f32 %v3254, %v3256
    %v3258 = vadd.f32 %v3254, %v3257
    %vm3259 = vweird.f32 %v3252
    %vm3260 = vweird.f32 %v3254
    %vm3261 = vmor %vm3259, %vm3260
    %v3262 = vsel %vm3261, %v3254, %v3258
    %v3263 = vand.u32 2147483647, %v3252
    %vm3264 = vcmp.eq.f32.partialorder %v3263, 8.507059e+37
    %v3265 = vand.u32 %v3252, 2147483648
    %v3266 = vor.u32 1.1754944e-38, %v3265
    %v3267 = vsel %vm3264, %v3266, %v3262
    %v3268 = vmul.f32 1.0, %v3267
    %v3269 = vrcp.pop %v3253
    %v3270 = vmul.f32 %v3253, %v3269
    %v3271 = vsub.f32 1.0, %v3270
    %v3272 = vmul.f32 %v3269, %v3271
    %v3273 = vadd.f32 %v3269, %v3272
    %vm3274 = vweird.f32 %v3253
    %vm3275 = vweird.f32 %v3269
    %vm3276 = vmor %vm3274, %vm3275
    %v3277 = vsel %vm3276, %v3269, %v3273
    %v3278 = vand.u32 2147483647, %v3253
    %vm3279 = vcmp.eq.f32.partialorder %v3278, 8.507059e+37
    %v3280 = vand.u32 %v3253, 2147483648
    %v3281 = vor.u32 1.1754944e-38, %v3280
    %v3282 = vsel %vm3279, %v3281, %v3277
    %v3283 = vmul.f32 1.0, %v3282
    %v3284 = vxor.u32 %v2754, 2147483648
    %v3285 = vmul.f32 %v3284, 1.442695
    %v3286 = vpow.pop %v3285
    %v3287 = vadd.f32 %v3286, 1.0
    %v3288 = vrcp.pop %v3287
    %v3289 = vmul.f32 %v3287, %v3288
    %v3290 = vsub.f32 1.0, %v3289
    %v3291 = vmul.f32 %v3288, %v3290
    %v3292 = vadd.f32 %v3288, %v3291
    %vm3293 = vweird.f32 %v3287
    %vm3294 = vweird.f32 %v3288
    %vm3295 = vmor %vm3293, %vm3294
    %v3296 = vsel %vm3295, %v3288, %v3292
    %v3297 = vand.u32 2147483647, %v3287
    %vm3298 = vcmp.eq.f32.partialorder %v3297, 8.507059e+37
    %v3299 = vand.u32 %v3287, 2147483648
    %v3300 = vor.u32 1.1754944e-38, %v3299
    %v3301 = vsel %vm3298, %v3300, %v3296
    %v3302 = vmul.f32 1.0, %v3301
    %v3303 = vtanh.pop %v2754
    %v3304 = vtanh.pop %v2794
    %v3305 = vxor.u32 %v2794, 2147483648
    %v3306 = vxor.u32 %v2834, 2147483648
    %v3307 = vmul.f32 %v3305, 1.442695
    %v3308 = vpow.pop %v3307
    %v3309 = vmul.f32 %v3306, 1.442695
    %v3310 = vpow.pop %v3309
    %v3311 = vadd.f32 %v3308, 1.0
    %v3312 = vadd.f32 %v3310, 1.0
    %v3313 = vrcp.pop %v3311
    %v3314 = vmul.f32 %v3311, %v3313
    %v3315 = vsub.f32 1.0, %v3314
    %v3316 = vmul.f32 %v3313, %v3315
    %v3317 = vadd.f32 %v3313, %v3316
    %vm3318 = vweird.f32 %v3311
    %vm3319 = vweird.f32 %v3313
    %vm3320 = vmor %vm3318, %vm3319
    %v3321 = vsel %vm3320, %v3313, %v3317
    %v3322 = vand.u32 2147483647, %v3311
    %vm3323 = vcmp.eq.f32.partialorder %v3322, 8.507059e+37
    %v3324 = vand.u32 %v3311, 2147483648
    %v3325 = vor.u32 1.1754944e-38, %v3324
    %v3326 = vsel %vm3323, %v3325, %v3321
    %v3327 = vmul.f32 1.0, %v3326
    %v3328 = vrcp.pop %v3312
    %v3329 = vmul.f32 %v3312, %v3328
    %v3330 = vsub.f32 1.0, %v3329
    %v3331 = vmul.f32 %v3328, %v3330
    %v3332 = vadd.f32 %v3328, %v3331
    %vm3333 = vweird.f32 %v3312
    %vm3334 = vweird.f32 %v3328
    %vm3335 = vmor %vm3333, %vm3334
    %v3336 = vsel %vm3335, %v3328, %v3332
    %v3337 = vand.u32 2147483647, %v3312
    %vm3338 = vcmp.eq.f32.partialorder %v3337, 8.507059e+37
    %v3339 = vand.u32 %v3312, 2147483648
    %v3340 = vor.u32 1.1754944e-38, %v3339
    %v3341 = vsel %vm3338, %v3340, %v3336
    %v3342 = vmul.f32 1.0, %v3341
    %v3343 = vmul.f32 %v3283, 0.0
    %v3344 = vmul.f32 %v3302, 0.0
    %3347 = vrot.lane.b32.xlu0 %v3303, 64
    %v3348 = vpop.permute.xlu0 %3347
    %3349 = vrot.lane.b32.xlu0 %v3304, 64
    %v3350 = vpop.permute.xlu0 %3349
    %v3351 = vsel %vm1896, %v3348, %v3350
    %v3354 = vmul.f32 %v3268, %v3351
    %v3355 = vmul.f32 %v3283, %v3350
    %3358 = vrot.lane.b32.xlu0 %v3354, 32
    %v3359 = vpop.permute.xlu0 %3358
    %3360 = vrot.lane.b32.xlu0 %v3355, 32
    %v3361 = vpop.permute.xlu0 %3360
    %v3362 = vsel %vm1908, %v3359, %v3361
    %v3365 = vadd.f32 %v3343, %v3359
    %v3366 = vadd.f32 %v3344, %v3362
    %v3367 = vtanh.pop %v3365
    %v3368 = vtanh.pop %v3366
    %3371 = vrot.lane.b32.xlu0 %v3367, 64
    %v3372 = vpop.permute.xlu0 %3371
    %3373 = vrot.lane.b32.xlu0 %v3368, 64
    %v3374 = vpop.permute.xlu0 %3373
    %v3375 = vsel %vm1896, %v3372, %v3374
    %v3378 = vmul.f32 %v3327, %v3372
    %v3379 = vmul.f32 %v3342, %v3375
    %3382 = vrot.lane.b32.xlu0 %v3378, 32
    %v3383 = vpop.permute.xlu0 %3382
    %3384 = vrot.lane.b32.xlu0 %v3379, 32
    %v3385 = vpop.permute.xlu0 %3384
    %v3386 = vsel %vm1908, %v3383, %v3385
    %v3388 = vsel %vm1908, %v3385, 0
    %3390 = vmatpush.msra.mxu0 %v1380
    %3391 = vmatpush.msra.mxu0 %v1375
    %3392 = vmatpush.msra.mxu0 %v1370
    %3393 = vmatpush.msra.mxu0 %v1365
    %3394 = vmatpush.msra.mxu0 %v1360
    %3395 = vmatpush.msra.mxu0 %v1355
    %3396 = vmatpush.msra.mxu0 %v1350
    %3397 = vmatpush.msra.mxu0 %v1345
    %3398 = vmatpush.msra.mxu0 %v1340
    %3399 = vmatpush.msra.mxu0 %v1335
    %3400 = vmatpush.msra.mxu0 %v1330
    %3401 = vmatpush.msra.mxu0 %v1325
    %3402 = vmatpush.msra.mxu0 %v1320
    %3403 = vmatpush.msra.mxu0 %v1315
    %3404 = vmatpush.msra.mxu0 %v1310
    %3405 = vmatpush.msra.mxu0 %v1305
    %3406 = vmatmul.f32.gmra.mxu0 %v3386
    %v3407 = vpop.f32.mrf.mxu0
    %v3408 = vadd.f32 0.0, %v3407
    %3409 = vdwg.mxu0
    %3410 = vmatpush.msra.mxu0 0.0
    %3411 = vmatpush.msra.mxu0 0.0
    %3412 = vmatpush.msra.mxu0 0.0
    %3413 = vmatpush.msra.mxu0 0.0
    %3414 = vmatpush.msra.mxu0 0.0
    %3415 = vmatpush.msra.mxu0 0.0
    %3416 = vmatpush.msra.mxu0 0.0
    %3417 = vmatpush.msra.mxu0 0.0
    %3418 = vmatpush.msra.mxu0 0.0
    %3419 = vmatpush.msra.mxu0 0.0
    %3420 = vmatpush.msra.mxu0 0.0
    %3421 = vmatpush.msra.mxu0 0.0
    %3422 = vmatpush.msra.mxu0 %v1400
    %3423 = vmatpush.msra.mxu0 %v1395
    %3424 = vmatpush.msra.mxu0 %v1390
    %3425 = vmatpush.msra.mxu0 %v1385
    %3426 = vmatmul.f32.gmra.mxu0 %v3388
    %v3427 = vpop.f32.mrf.mxu0
    %v3428 = vadd.f32 %v3408, %v3427
    %3429 = vdwg.mxu0
    %3430 = vmatpush.msra.mxu0 %v1381
    %3431 = vmatpush.msra.mxu0 %v1376
    %3432 = vmatpush.msra.mxu0 %v1371
    %3433 = vmatpush.msra.mxu0 %v1366
    %3434 = vmatpush.msra.mxu0 %v1361
    %3435 = vmatpush.msra.mxu0 %v1356
    %3436 = vmatpush.msra.mxu0 %v1351
    %3437 = vmatpush.msra.mxu0 %v1346
    %3438 = vmatpush.msra.mxu0 %v1341
    %3439 = vmatpush.msra.mxu0 %v1336
    %3440 = vmatpush.msra.mxu0 %v1331
    %3441 = vmatpush.msra.mxu0 %v1326
    %3442 = vmatpush.msra.mxu0 %v1321
    %3443 = vmatpush.msra.mxu0 %v1316
    %3444 = vmatpush.msra.mxu0 %v1311
    %3445 = vmatpush.msra.mxu0 %v1306
    %3446 = vmatmul.f32.gmra.mxu0 %v3386
    %v3447 = vpop.f32.mrf.mxu0
    %v3448 = vadd.f32 0.0, %v3447
    %3449 = vdwg.mxu0
    %3450 = vmatpush.msra.mxu0 0.0
    %3451 = vmatpush.msra.mxu0 0.0
    %3452 = vmatpush.msra.mxu0 0.0
    %3453 = vmatpush.msra.mxu0 0.0
    %3454 = vmatpush.msra.mxu0 0.0
    %3455 = vmatpush.msra.mxu0 0.0
    %3456 = vmatpush.msra.mxu0 0.0
    %3457 = vmatpush.msra.mxu0 0.0
    %3458 = vmatpush.msra.mxu0 0.0
    %3459 = vmatpush.msra.mxu0 0.0
    %3460 = vmatpush.msra.mxu0 0.0
    %3461 = vmatpush.msra.mxu0 0.0
    %3462 = vmatpush.msra.mxu0 %v1401
    %3463 = vmatpush.msra.mxu0 %v1396
    %3464 = vmatpush.msra.mxu0 %v1391
    %3465 = vmatpush.msra.mxu0 %v1386
    %3466 = vmatmul.f32.gmra.mxu0 %v3388
    %v3467 = vpop.f32.mrf.mxu0
    %v3468 = vadd.f32 %v3448, %v3467
    %3469 = vdwg.mxu0
    %3470 = vmatpush.msra.mxu0 %v1382
    %3471 = vmatpush.msra.mxu0 %v1377
    %3472 = vmatpush.msra.mxu0 %v1372
    %3473 = vmatpush.msra.mxu0 %v1367
    %3474 = vmatpush.msra.mxu0 %v1362
    %3475 = vmatpush.msra.mxu0 %v1357
    %3476 = vmatpush.msra.mxu0 %v1352
    %3477 = vmatpush.msra.mxu0 %v1347
    %3478 = vmatpush.msra.mxu0 %v1342
    %3479 = vmatpush.msra.mxu0 %v1337
    %3480 = vmatpush.msra.mxu0 %v1332
    %3481 = vmatpush.msra.mxu0 %v1327
    %3482 = vmatpush.msra.mxu0 %v1322
    %3483 = vmatpush.msra.mxu0 %v1317
    %3484 = vmatpush.msra.mxu0 %v1312
    %3485 = vmatpush.msra.mxu0 %v1307
    %3486 = vmatmul.f32.gmra.mxu0 %v3386
    %v3487 = vpop.f32.mrf.mxu0
    %v3488 = vadd.f32 0.0, %v3487
    %3489 = vdwg.mxu0
    %3490 = vmatpush.msra.mxu0 0.0
    %3491 = vmatpush.msra.mxu0 0.0
    %3492 = vmatpush.msra.mxu0 0.0
    %3493 = vmatpush.msra.mxu0 0.0
    %3494 = vmatpush.msra.mxu0 0.0
    %3495 = vmatpush.msra.mxu0 0.0
    %3496 = vmatpush.msra.mxu0 0.0
    %3497 = vmatpush.msra.mxu0 0.0
    %3498 = vmatpush.msra.mxu0 0.0
    %3499 = vmatpush.msra.mxu0 0.0
    %3500 = vmatpush.msra.mxu0 0.0
    %3501 = vmatpush.msra.mxu0 0.0
    %3502 = vmatpush.msra.mxu0 %v1402
    %3503 = vmatpush.msra.mxu0 %v1397
    %3504 = vmatpush.msra.mxu0 %v1392
    %3505 = vmatpush.msra.mxu0 %v1387
    %3506 = vmatmul.f32.gmra.mxu0 %v3388
    %v3507 = vpop.f32.mrf.mxu0
    %v3508 = vadd.f32 %v3488, %v3507
    %3509 = vdwg.mxu0
    %3510 = vmatpush.msra.mxu0 %v1383
    %3511 = vmatpush.msra.mxu0 %v1378
    %3512 = vmatpush.msra.mxu0 %v1373
    %3513 = vmatpush.msra.mxu0 %v1368
    %3514 = vmatpush.msra.mxu0 %v1363
    %3515 = vmatpush.msra.mxu0 %v1358
    %3516 = vmatpush.msra.mxu0 %v1353
    %3517 = vmatpush.msra.mxu0 %v1348
    %3518 = vmatpush.msra.mxu0 %v1343
    %3519 = vmatpush.msra.mxu0 %v1338
    %3520 = vmatpush.msra.mxu0 %v1333
    %3521 = vmatpush.msra.mxu0 %v1328
    %3522 = vmatpush.msra.mxu0 %v1323
    %3523 = vmatpush.msra.mxu0 %v1318
    %3524 = vmatpush.msra.mxu0 %v1313
    %3525 = vmatpush.msra.mxu0 %v1308
    %3526 = vmatmul.f32.gmra.mxu0 %v3386
    %v3527 = vpop.f32.mrf.mxu0
    %v3528 = vadd.f32 0.0, %v3527
    %3529 = vdwg.mxu0
    %3530 = vmatpush.msra.mxu0 0.0
    %3531 = vmatpush.msra.mxu0 0.0
    %3532 = vmatpush.msra.mxu0 0.0
    %3533 = vmatpush.msra.mxu0 0.0
    %3534 = vmatpush.msra.mxu0 0.0
    %3535 = vmatpush.msra.mxu0 0.0
    %3536 = vmatpush.msra.mxu0 0.0
    %3537 = vmatpush.msra.mxu0 0.0
    %3538 = vmatpush.msra.mxu0 0.0
    %3539 = vmatpush.msra.mxu0 0.0
    %3540 = vmatpush.msra.mxu0 0.0
    %3541 = vmatpush.msra.mxu0 0.0
    %3542 = vmatpush.msra.mxu0 %v1403
    %3543 = vmatpush.msra.mxu0 %v1398
    %3544 = vmatpush.msra.mxu0 %v1393
    %3545 = vmatpush.msra.mxu0 %v1388
    %3546 = vmatmul.f32.gmra.mxu0 %v3388
    %v3547 = vpop.f32.mrf.mxu0
    %v3548 = vadd.f32 %v3528, %v3547
    %3549 = vdwg.mxu0
    %3550 = vmatpush.msra.mxu0 %v1384
    %3551 = vmatpush.msra.mxu0 %v1379
    %3552 = vmatpush.msra.mxu0 %v1374
    %3553 = vmatpush.msra.mxu0 %v1369
    %3554 = vmatpush.msra.mxu0 %v1364
    %3555 = vmatpush.msra.mxu0 %v1359
    %3556 = vmatpush.msra.mxu0 %v1354
    %3557 = vmatpush.msra.mxu0 %v1349
    %3558 = vmatpush.msra.mxu0 %v1344
    %3559 = vmatpush.msra.mxu0 %v1339
    %3560 = vmatpush.msra.mxu0 %v1334
    %3561 = vmatpush.msra.mxu0 %v1329
    %3562 = vmatpush.msra.mxu0 %v1324
    %3563 = vmatpush.msra.mxu0 %v1319
    %3564 = vmatpush.msra.mxu0 %v1314
    %3565 = vmatpush.msra.mxu0 %v1309
    %3566 = vmatmul.f32.gmra.mxu0 %v3386
    %v3567 = vpop.f32.mrf.mxu0
    %v3568 = vadd.f32 0.0, %v3567
    %3569 = vdwg.mxu0
    %3570 = vmatpush.msra.mxu0 0.0
    %3571 = vmatpush.msra.mxu0 0.0
    %3572 = vmatpush.msra.mxu0 0.0
    %3573 = vmatpush.msra.mxu0 0.0
    %3574 = vmatpush.msra.mxu0 0.0
    %3575 = vmatpush.msra.mxu0 0.0
    %3576 = vmatpush.msra.mxu0 0.0
    %3577 = vmatpush.msra.mxu0 0.0
    %3578 = vmatpush.msra.mxu0 0.0
    %3579 = vmatpush.msra.mxu0 0.0
    %3580 = vmatpush.msra.mxu0 0.0
    %3581 = vmatpush.msra.mxu0 0.0
    %3582 = vmatpush.msra.mxu0 %v1404
    %3583 = vmatpush.msra.mxu0 %v1399
    %3584 = vmatpush.msra.mxu0 %v1394
    %3585 = vmatpush.msra.mxu0 %v1389
    %3586 = vmatmul.f32.gmra.mxu0 %v3388
    %v3587 = vpop.f32.mrf.mxu0
    %v3588 = vadd.f32 %v3568, %v3587
    %3589 = vdwg.mxu0
    %v3590 = vadd.f32 %v2874, %v3428
    %v3591 = vadd.f32 %v2914, %v3468
    %v3592 = vadd.f32 %v2954, %v3508
    %v3593 = vadd.f32 %v2994, %v3548
    %v3594 = vadd.f32 %v3034, %v3588
    %v3595 = vxor.u32 %v3590, 2147483648
    %v3596 = vxor.u32 %v3591, 2147483648
    %v3597 = vmul.f32 %v3595, 1.442695
    %v3598 = vpow.pop %v3597
    %v3599 = vmul.f32 %v3596, 1.442695
    %v3600 = vpow.pop %v3599
    %v3601 = vadd.f32 %v3598, 1.0
    %v3602 = vadd.f32 %v3600, 1.0
    %v3603 = vrcp.pop %v3601
    %v3604 = vmul.f32 %v3601, %v3603
    %v3605 = vsub.f32 1.0, %v3604
    %v3606 = vmul.f32 %v3603, %v3605
    %v3607 = vadd.f32 %v3603, %v3606
    %vm3608 = vweird.f32 %v3601
    %vm3609 = vweird.f32 %v3603
    %vm3610 = vmor %vm3608, %vm3609
    %v3611 = vsel %vm3610, %v3603, %v3607
    %v3612 = vand.u32 2147483647, %v3601
    %vm3613 = vcmp.eq.f32.partialorder %v3612, 8.507059e+37
    %v3614 = vand.u32 %v3601, 2147483648
    %v3615 = vor.u32 1.1754944e-38, %v3614
    %v3616 = vsel %vm3613, %v3615, %v3611
    %v3617 = vmul.f32 1.0, %v3616
    %v3618 = vrcp.pop %v3602
    %v3619 = vmul.f32 %v3602, %v3618
    %v3620 = vsub.f32 1.0, %v3619
    %v3621 = vmul.f32 %v3618, %v3620
    %v3622 = vadd.f32 %v3618, %v3621
    %vm3623 = vweird.f32 %v3602
    %vm3624 = vweird.f32 %v3618
    %vm3625 = vmor %vm3623, %vm3624
    %v3626 = vsel %vm3625, %v3618, %v3622
    %v3627 = vand.u32 2147483647, %v3602
    %vm3628 = vcmp.eq.f32.partialorder %v3627, 8.507059e+37
    %v3629 = vand.u32 %v3602, 2147483648
    %v3630 = vor.u32 1.1754944e-38, %v3629
    %v3631 = vsel %vm3628, %v3630, %v3626
    %v3632 = vmul.f32 1.0, %v3631
    %v3633 = vxor.u32 %v3592, 2147483648
    %v3634 = vmul.f32 %v3633, 1.442695
    %v3635 = vpow.pop %v3634
    %v3636 = vadd.f32 %v3635, 1.0
    %v3637 = vrcp.pop %v3636
    %v3638 = vmul.f32 %v3636, %v3637
    %v3639 = vsub.f32 1.0, %v3638
    %v3640 = vmul.f32 %v3637, %v3639
    %v3641 = vadd.f32 %v3637, %v3640
    %vm3642 = vweird.f32 %v3636
    %vm3643 = vweird.f32 %v3637
    %vm3644 = vmor %vm3642, %vm3643
    %v3645 = vsel %vm3644, %v3637, %v3641
    %v3646 = vand.u32 2147483647, %v3636
    %vm3647 = vcmp.eq.f32.partialorder %v3646, 8.507059e+37
    %v3648 = vand.u32 %v3636, 2147483648
    %v3649 = vor.u32 1.1754944e-38, %v3648
    %v3650 = vsel %vm3647, %v3649, %v3645
    %v3651 = vmul.f32 1.0, %v3650
    %v3652 = vtanh.pop %v3592
    %v3653 = vtanh.pop %v3593
    %v3654 = vxor.u32 %v3593, 2147483648
    %v3655 = vxor.u32 %v3594, 2147483648
    %v3656 = vmul.f32 %v3654, 1.442695
    %v3657 = vpow.pop %v3656
    %v3658 = vmul.f32 %v3655, 1.442695
    %v3659 = vpow.pop %v3658
    %v3660 = vadd.f32 %v3657, 1.0
    %v3661 = vadd.f32 %v3659, 1.0
    %v3662 = vrcp.pop %v3660
    %v3663 = vmul.f32 %v3660, %v3662
    %v3664 = vsub.f32 1.0, %v3663
    %v3665 = vmul.f32 %v3662, %v3664
    %v3666 = vadd.f32 %v3662, %v3665
    %vm3667 = vweird.f32 %v3660
    %vm3668 = vweird.f32 %v3662
    %vm3669 = vmor %vm3667, %vm3668
    %v3670 = vsel %vm3669, %v3662, %v3666
    %v3671 = vand.u32 2147483647, %v3660
    %vm3672 = vcmp.eq.f32.partialorder %v3671, 8.507059e+37
    %v3673 = vand.u32 %v3660, 2147483648
    %v3674 = vor.u32 1.1754944e-38, %v3673
    %v3675 = vsel %vm3672, %v3674, %v3670
    %v3676 = vmul.f32 1.0, %v3675
    %v3677 = vrcp.pop %v3661
    %v3678 = vmul.f32 %v3661, %v3677
    %v3679 = vsub.f32 1.0, %v3678
    %v3680 = vmul.f32 %v3677, %v3679
    %v3681 = vadd.f32 %v3677, %v3680
    %vm3682 = vweird.f32 %v3661
    %vm3683 = vweird.f32 %v3677
    %vm3684 = vmor %vm3682, %vm3683
    %v3685 = vsel %vm3684, %v3677, %v3681
    %v3686 = vand.u32 2147483647, %v3661
    %vm3687 = vcmp.eq.f32.partialorder %v3686, 8.507059e+37
    %v3688 = vand.u32 %v3661, 2147483648
    %v3689 = vor.u32 1.1754944e-38, %v3688
    %v3690 = vsel %vm3687, %v3689, %v3685
    %v3691 = vmul.f32 1.0, %v3690
    %v3692 = vmul.f32 %v3632, %v3365
    %v3693 = vmul.f32 %v3651, %v3366
    %3696 = vrot.lane.b32.xlu0 %v3652, 64
    %v3697 = vpop.permute.xlu0 %3696
    %3698 = vrot.lane.b32.xlu0 %v3653, 64
    %v3699 = vpop.permute.xlu0 %3698
    %v3700 = vsel %vm1896, %v3697, %v3699
    %v3703 = vmul.f32 %v3617, %v3700
    %v3704 = vmul.f32 %v3632, %v3699
    %3707 = vrot.lane.b32.xlu0 %v3703, 32
    %v3708 = vpop.permute.xlu0 %3707
    %3709 = vrot.lane.b32.xlu0 %v3704, 32
    %v3710 = vpop.permute.xlu0 %3709
    %v3711 = vsel %vm1908, %v3708, %v3710
    %v3714 = vadd.f32 %v3692, %v3708
    %v3715 = vadd.f32 %v3693, %v3711
    %v3716 = vtanh.pop %v3714
    %v3717 = vtanh.pop %v3715
    %3720 = vrot.lane.b32.xlu0 %v3716, 64
    %v3721 = vpop.permute.xlu0 %3720
    %3722 = vrot.lane.b32.xlu0 %v3717, 64
    %v3723 = vpop.permute.xlu0 %3722
    %v3724 = vsel %vm1896, %v3721, %v3723
    %v3727 = vmul.f32 %v3676, %v3721
    %v3728 = vmul.f32 %v3691, %v3724
    %3731 = vrot.lane.b32.xlu0 %v3727, 32
    %v3732 = vpop.permute.xlu0 %3731
    %3733 = vrot.lane.b32.xlu0 %v3728, 32
    %v3734 = vpop.permute.xlu0 %3733
    %v3735 = vsel %vm1908, %v3732, %v3734
    %v3737 = vsel %vm1908, %v3734, 0
    %3739 = vmatpush.msra.mxu0 %v1380
    %3740 = vmatpush.msra.mxu0 %v1375
    %3741 = vmatpush.msra.mxu0 %v1370
    %3742 = vmatpush.msra.mxu0 %v1365
    %3743 = vmatpush.msra.mxu0 %v1360
    %3744 = vmatpush.msra.mxu0 %v1355
    %3745 = vmatpush.msra.mxu0 %v1350
    %3746 = vmatpush.msra.mxu0 %v1345
    %3747 = vmatpush.msra.mxu0 %v1340
    %3748 = vmatpush.msra.mxu0 %v1335
    %3749 = vmatpush.msra.mxu0 %v1330
    %3750 = vmatpush.msra.mxu0 %v1325
    %3751 = vmatpush.msra.mxu0 %v1320
    %3752 = vmatpush.msra.mxu0 %v1315
    %3753 = vmatpush.msra.mxu0 %v1310
    %3754 = vmatpush.msra.mxu0 %v1305
    %3755 = vmatmul.f32.gmra.mxu0 %v3735
    %v3756 = vpop.f32.mrf.mxu0
    %v3757 = vadd.f32 0.0, %v3756
    %3758 = vdwg.mxu0
    %3759 = vmatpush.msra.mxu0 0.0
    %3760 = vmatpush.msra.mxu0 0.0
    %3761 = vmatpush.msra.mxu0 0.0
    %3762 = vmatpush.msra.mxu0 0.0
    %3763 = vmatpush.msra.mxu0 0.0
    %3764 = vmatpush.msra.mxu0 0.0
    %3765 = vmatpush.msra.mxu0 0.0
    %3766 = vmatpush.msra.mxu0 0.0
    %3767 = vmatpush.msra.mxu0 0.0
    %3768 = vmatpush.msra.mxu0 0.0
    %3769 = vmatpush.msra.mxu0 0.0
    %3770 = vmatpush.msra.mxu0 0.0
    %3771 = vmatpush.msra.mxu0 %v1400
    %3772 = vmatpush.msra.mxu0 %v1395
    %3773 = vmatpush.msra.mxu0 %v1390
    %3774 = vmatpush.msra.mxu0 %v1385
    %3775 = vmatmul.f32.gmra.mxu0 %v3737
    %v3776 = vpop.f32.mrf.mxu0
    %v3777 = vadd.f32 %v3757, %v3776
    %3778 = vdwg.mxu0
    %3779 = vmatpush.msra.mxu0 %v1381
    %3780 = vmatpush.msra.mxu0 %v1376
    %3781 = vmatpush.msra.mxu0 %v1371
    %3782 = vmatpush.msra.mxu0 %v1366
    %3783 = vmatpush.msra.mxu0 %v1361
    %3784 = vmatpush.msra.mxu0 %v1356
    %3785 = vmatpush.msra.mxu0 %v1351
    %3786 = vmatpush.msra.mxu0 %v1346
    %3787 = vmatpush.msra.mxu0 %v1341
    %3788 = vmatpush.msra.mxu0 %v1336
    %3789 = vmatpush.msra.mxu0 %v1331
    %3790 = vmatpush.msra.mxu0 %v1326
    %3791 = vmatpush.msra.mxu0 %v1321
    %3792 = vmatpush.msra.mxu0 %v1316
    %3793 = vmatpush.msra.mxu0 %v1311
    %3794 = vmatpush.msra.mxu0 %v1306
    %3795 = vmatmul.f32.gmra.mxu0 %v3735
    %v3796 = vpop.f32.mrf.mxu0
    %v3797 = vadd.f32 0.0, %v3796
    %3798 = vdwg.mxu0
    %3799 = vmatpush.msra.mxu0 0.0
    %3800 = vmatpush.msra.mxu0 0.0
    %3801 = vmatpush.msra.mxu0 0.0
    %3802 = vmatpush.msra.mxu0 0.0
    %3803 = vmatpush.msra.mxu0 0.0
    %3804 = vmatpush.msra.mxu0 0.0
    %3805 = vmatpush.msra.mxu0 0.0
    %3806 = vmatpush.msra.mxu0 0.0
    %3807 = vmatpush.msra.mxu0 0.0
    %3808 = vmatpush.msra.mxu0 0.0
    %3809 = vmatpush.msra.mxu0 0.0
    %3810 = vmatpush.msra.mxu0 0.0
    %3811 = vmatpush.msra.mxu0 %v1401
    %3812 = vmatpush.msra.mxu0 %v1396
    %3813 = vmatpush.msra.mxu0 %v1391
    %3814 = vmatpush.msra.mxu0 %v1386
    %3815 = vmatmul.f32.gmra.mxu0 %v3737
    %v3816 = vpop.f32.mrf.mxu0
    %v3817 = vadd.f32 %v3797, %v3816
    %3818 = vdwg.mxu0
    %3819 = vmatpush.msra.mxu0 %v1382
    %3820 = vmatpush.msra.mxu0 %v1377
    %3821 = vmatpush.msra.mxu0 %v1372
    %3822 = vmatpush.msra.mxu0 %v1367
    %3823 = vmatpush.msra.mxu0 %v1362
    %3824 = vmatpush.msra.mxu0 %v1357
    %3825 = vmatpush.msra.mxu0 %v1352
    %3826 = vmatpush.msra.mxu0 %v1347
    %3827 = vmatpush.msra.mxu0 %v1342
    %3828 = vmatpush.msra.mxu0 %v1337
    %3829 = vmatpush.msra.mxu0 %v1332
    %3830 = vmatpush.msra.mxu0 %v1327
    %3831 = vmatpush.msra.mxu0 %v1322
    %3832 = vmatpush.msra.mxu0 %v1317
    %3833 = vmatpush.msra.mxu0 %v1312
    %3834 = vmatpush.msra.mxu0 %v1307
    %3835 = vmatmul.f32.gmra.mxu0 %v3735
    %v3836 = vpop.f32.mrf.mxu0
    %v3837 = vadd.f32 0.0, %v3836
    %3838 = vdwg.mxu0
    %3839 = vmatpush.msra.mxu0 0.0
    %3840 = vmatpush.msra.mxu0 0.0
    %3841 = vmatpush.msra.mxu0 0.0
    %3842 = vmatpush.msra.mxu0 0.0
    %3843 = vmatpush.msra.mxu0 0.0
    %3844 = vmatpush.msra.mxu0 0.0
    %3845 = vmatpush.msra.mxu0 0.0
    %3846 = vmatpush.msra.mxu0 0.0
    %3847 = vmatpush.msra.mxu0 0.0
    %3848 = vmatpush.msra.mxu0 0.0
    %3849 = vmatpush.msra.mxu0 0.0
    %3850 = vmatpush.msra.mxu0 0.0
    %3851 = vmatpush.msra.mxu0 %v1402
    %3852 = vmatpush.msra.mxu0 %v1397
    %3853 = vmatpush.msra.mxu0 %v1392
    %3854 = vmatpush.msra.mxu0 %v1387
    %3855 = vmatmul.f32.gmra.mxu0 %v3737
    %v3856 = vpop.f32.mrf.mxu0
    %v3857 = vadd.f32 %v3837, %v3856
    %3858 = vdwg.mxu0
    %3859 = vmatpush.msra.mxu0 %v1383
    %3860 = vmatpush.msra.mxu0 %v1378
    %3861 = vmatpush.msra.mxu0 %v1373
    %3862 = vmatpush.msra.mxu0 %v1368
    %3863 = vmatpush.msra.mxu0 %v1363
    %3864 = vmatpush.msra.mxu0 %v1358
    %3865 = vmatpush.msra.mxu0 %v1353
    %3866 = vmatpush.msra.mxu0 %v1348
    %3867 = vmatpush.msra.mxu0 %v1343
    %3868 = vmatpush.msra.mxu0 %v1338
    %3869 = vmatpush.msra.mxu0 %v1333
    %3870 = vmatpush.msra.mxu0 %v1328
    %3871 = vmatpush.msra.mxu0 %v1323
    %3872 = vmatpush.msra.mxu0 %v1318
    %3873 = vmatpush.msra.mxu0 %v1313
    %3874 = vmatpush.msra.mxu0 %v1308
    %3875 = vmatmul.f32.gmra.mxu0 %v3735
    %v3876 = vpop.f32.mrf.mxu0
    %v3877 = vadd.f32 0.0, %v3876
    %3878 = vdwg.mxu0
    %3879 = vmatpush.msra.mxu0 0.0
    %3880 = vmatpush.msra.mxu0 0.0
    %3881 = vmatpush.msra.mxu0 0.0
    %3882 = vmatpush.msra.mxu0 0.0
    %3883 = vmatpush.msra.mxu0 0.0
    %3884 = vmatpush.msra.mxu0 0.0
    %3885 = vmatpush.msra.mxu0 0.0
    %3886 = vmatpush.msra.mxu0 0.0
    %3887 = vmatpush.msra.mxu0 0.0
    %3888 = vmatpush.msra.mxu0 0.0
    %3889 = vmatpush.msra.mxu0 0.0
    %3890 = vmatpush.msra.mxu0 0.0
    %3891 = vmatpush.msra.mxu0 %v1403
    %3892 = vmatpush.msra.mxu0 %v1398
    %3893 = vmatpush.msra.mxu0 %v1393
    %3894 = vmatpush.msra.mxu0 %v1388
    %3895 = vmatmul.f32.gmra.mxu0 %v3737
    %v3896 = vpop.f32.mrf.mxu0
    %v3897 = vadd.f32 %v3877, %v3896
    %3898 = vdwg.mxu0
    %3899 = vmatpush.msra.mxu0 %v1384
    %3900 = vmatpush.msra.mxu0 %v1379
    %3901 = vmatpush.msra.mxu0 %v1374
    %3902 = vmatpush.msra.mxu0 %v1369
    %3903 = vmatpush.msra.mxu0 %v1364
    %3904 = vmatpush.msra.mxu0 %v1359
    %3905 = vmatpush.msra.mxu0 %v1354
    %3906 = vmatpush.msra.mxu0 %v1349
    %3907 = vmatpush.msra.mxu0 %v1344
    %3908 = vmatpush.msra.mxu0 %v1339
    %3909 = vmatpush.msra.mxu0 %v1334
    %3910 = vmatpush.msra.mxu0 %v1329
    %3911 = vmatpush.msra.mxu0 %v1324
    %3912 = vmatpush.msra.mxu0 %v1319
    %3913 = vmatpush.msra.mxu0 %v1314
    %3914 = vmatpush.msra.mxu0 %v1309
    %3915 = vmatmul.f32.gmra.mxu0 %v3735
    %v3916 = vpop.f32.mrf.mxu0
    %v3917 = vadd.f32 0.0, %v3916
    %3918 = vdwg.mxu0
    %3919 = vmatpush.msra.mxu0 0.0
    %3920 = vmatpush.msra.mxu0 0.0
    %3921 = vmatpush.msra.mxu0 0.0
    %3922 = vmatpush.msra.mxu0 0.0
    %3923 = vmatpush.msra.mxu0 0.0
    %3924 = vmatpush.msra.mxu0 0.0
    %3925 = vmatpush.msra.mxu0 0.0
    %3926 = vmatpush.msra.mxu0 0.0
    %3927 = vmatpush.msra.mxu0 0.0
    %3928 = vmatpush.msra.mxu0 0.0
    %3929 = vmatpush.msra.mxu0 0.0
    %3930 = vmatpush.msra.mxu0 0.0
    %3931 = vmatpush.msra.mxu0 %v1404
    %3932 = vmatpush.msra.mxu0 %v1399
    %3933 = vmatpush.msra.mxu0 %v1394
    %3934 = vmatpush.msra.mxu0 %v1389
    %3935 = vmatmul.f32.gmra.mxu0 %v3737
    %v3936 = vpop.f32.mrf.mxu0
    %v3937 = vadd.f32 %v3917, %v3936
    %3938 = vdwg.mxu0
    %v3939 = vadd.f32 %v3084, %v3777
    %v3940 = vadd.f32 %v3124, %v3817
    %v3941 = vadd.f32 %v3164, %v3857
    %v3942 = vadd.f32 %v3204, %v3897
    %v3943 = vadd.f32 %v3244, %v3937
    %v3944 = vxor.u32 %v3939, 2147483648
    %v3945 = vxor.u32 %v3940, 2147483648
    %v3946 = vmul.f32 %v3944, 1.442695
    %v3947 = vpow.pop %v3946
    %v3948 = vmul.f32 %v3945, 1.442695
    %v3949 = vpow.pop %v3948
    %v3950 = vadd.f32 %v3947, 1.0
    %v3951 = vadd.f32 %v3949, 1.0
    %v3952 = vrcp.pop %v3950
    %v3953 = vmul.f32 %v3950, %v3952
    %v3954 = vsub.f32 1.0, %v3953
    %v3955 = vmul.f32 %v3952, %v3954
    %v3956 = vadd.f32 %v3952, %v3955
    %vm3957 = vweird.f32 %v3950
    %vm3958 = vweird.f32 %v3952
    %vm3959 = vmor %vm3957, %vm3958
    %v3960 = vsel %vm3959, %v3952, %v3956
    %v3961 = vand.u32 2147483647, %v3950
    %vm3962 = vcmp.eq.f32.partialorder %v3961, 8.507059e+37
    %v3963 = vand.u32 %v3950, 2147483648
    %v3964 = vor.u32 1.1754944e-38, %v3963
    %v3965 = vsel %vm3962, %v3964, %v3960
    %v3966 = vmul.f32 1.0, %v3965
    %v3967 = vrcp.pop %v3951
    %v3968 = vmul.f32 %v3951, %v3967
    %v3969 = vsub.f32 1.0, %v3968
    %v3970 = vmul.f32 %v3967, %v3969
    %v3971 = vadd.f32 %v3967, %v3970
    %vm3972 = vweird.f32 %v3951
    %vm3973 = vweird.f32 %v3967
    %vm3974 = vmor %vm3972, %vm3973
    %v3975 = vsel %vm3974, %v3967, %v3971
    %v3976 = vand.u32 2147483647, %v3951
    %vm3977 = vcmp.eq.f32.partialorder %v3976, 8.507059e+37
    %v3978 = vand.u32 %v3951, 2147483648
    %v3979 = vor.u32 1.1754944e-38, %v3978
    %v3980 = vsel %vm3977, %v3979, %v3975
    %v3981 = vmul.f32 1.0, %v3980
    %v3982 = vxor.u32 %v3941, 2147483648
    %v3983 = vmul.f32 %v3982, 1.442695
    %v3984 = vpow.pop %v3983
    %v3985 = vadd.f32 %v3984, 1.0
    %v3986 = vrcp.pop %v3985
    %v3987 = vmul.f32 %v3985, %v3986
    %v3988 = vsub.f32 1.0, %v3987
    %v3989 = vmul.f32 %v3986, %v3988
    %v3990 = vadd.f32 %v3986, %v3989
    %vm3991 = vweird.f32 %v3985
    %vm3992 = vweird.f32 %v3986
    %vm3993 = vmor %vm3991, %vm3992
    %v3994 = vsel %vm3993, %v3986, %v3990
    %v3995 = vand.u32 2147483647, %v3985
    %vm3996 = vcmp.eq.f32.partialorder %v3995, 8.507059e+37
    %v3997 = vand.u32 %v3985, 2147483648
    %v3998 = vor.u32 1.1754944e-38, %v3997
    %v3999 = vsel %vm3996, %v3998, %v3994
    %v4000 = vmul.f32 1.0, %v3999
    %v4001 = vtanh.pop %v3941
    %v4002 = vtanh.pop %v3942
    %v4003 = vxor.u32 %v3942, 2147483648
    %v4004 = vxor.u32 %v3943, 2147483648
    %v4005 = vmul.f32 %v4003, 1.442695
    %v4006 = vpow.pop %v4005
    %v4007 = vmul.f32 %v4004, 1.442695
    %v4008 = vpow.pop %v4007
    %v4009 = vadd.f32 %v4006, 1.0
    %v4010 = vadd.f32 %v4008, 1.0
    %v4011 = vrcp.pop %v4009
    %v4012 = vmul.f32 %v4009, %v4011
    %v4013 = vsub.f32 1.0, %v4012
    %v4014 = vmul.f32 %v4011, %v4013
    %v4015 = vadd.f32 %v4011, %v4014
    %vm4016 = vweird.f32 %v4009
    %vm4017 = vweird.f32 %v4011
    %vm4018 = vmor %vm4016, %vm4017
    %v4019 = vsel %vm4018, %v4011, %v4015
    %v4020 = vand.u32 2147483647, %v4009
    %vm4021 = vcmp.eq.f32.partialorder %v4020, 8.507059e+37
    %v4022 = vand.u32 %v4009, 2147483648
    %v4023 = vor.u32 1.1754944e-38, %v4022
    %v4024 = vsel %vm4021, %v4023, %v4019
    %v4025 = vmul.f32 1.0, %v4024
    %v4026 = vrcp.pop %v4010
    %v4027 = vmul.f32 %v4010, %v4026
    %v4028 = vsub.f32 1.0, %v4027
    %v4029 = vmul.f32 %v4026, %v4028
    %v4030 = vadd.f32 %v4026, %v4029
    %vm4031 = vweird.f32 %v4010
    %vm4032 = vweird.f32 %v4026
    %vm4033 = vmor %vm4031, %vm4032
    %v4034 = vsel %vm4033, %v4026, %v4030
    %v4035 = vand.u32 2147483647, %v4010
    %vm4036 = vcmp.eq.f32.partialorder %v4035, 8.507059e+37
    %v4037 = vand.u32 %v4010, 2147483648
    %v4038 = vor.u32 1.1754944e-38, %v4037
    %v4039 = vsel %vm4036, %v4038, %v4034
    %v4040 = vmul.f32 1.0, %v4039
    %v4041 = vmul.f32 %v3981, %v3714
    %v4042 = vmul.f32 %v4000, %v3715
    %4045 = vrot.lane.b32.xlu0 %v4001, 64
    %v4046 = vpop.permute.xlu0 %4045
    %4047 = vrot.lane.b32.xlu0 %v4002, 64
    %v4048 = vpop.permute.xlu0 %4047
    %v4049 = vsel %vm1896, %v4046, %v4048
    %v4052 = vmul.f32 %v3966, %v4049
    %v4053 = vmul.f32 %v3981, %v4048
    %4056 = vrot.lane.b32.xlu0 %v4052, 32
    %v4057 = vpop.permute.xlu0 %4056
    %4058 = vrot.lane.b32.xlu0 %v4053, 32
    %v4059 = vpop.permute.xlu0 %4058
    %v4060 = vsel %vm1908, %v4057, %v4059
    %v4063 = vadd.f32 %v4041, %v4057
    %v4064 = vadd.f32 %v4042, %v4060
    %v4065 = vtanh.pop %v4063
    %v4066 = vtanh.pop %v4064
    %4069 = vrot.lane.b32.xlu0 %v4065, 64
    %v4070 = vpop.permute.xlu0 %4069
    %4071 = vrot.lane.b32.xlu0 %v4066, 64
    %v4072 = vpop.permute.xlu0 %4071
    %v4073 = vsel %vm1896, %v4070, %v4072
    %v4076 = vmul.f32 %v4025, %v4070
    %v4077 = vmul.f32 %v4040, %v4073
    %v4078 = vld [vmem:[%s13] sm:$0xff]
    %v4079 = vld [vmem:[%s13 + $0x8] sm:$0xff]
    %v4080 = vld [vmem:[%s13 + $0x10] sm:$0xff]
    %v4081 = vld [vmem:[%s13 + $0x18] sm:$0xff]
    %v4082 = vld [vmem:[%s13 + $0x20] sm:$0xff]
    %v4083 = vld [vmem:[%s13 + $0x28] sm:$0xff]
    %v4084 = vld [vmem:[%s13 + $0x30] sm:$0xff]
    %v4085 = vld [vmem:[%s13 + $0x38] sm:$0xff]
    %v4086 = vld [vmem:[%s13 + $0x40] sm:$0xff]
    %v4087 = vld [vmem:[%s13 + $0x48] sm:$0xff]
    %v4088 = vld [vmem:[%s13 + $0x50] sm:$0xff]
    %v4089 = vld [vmem:[%s13 + $0x58] sm:$0xff]
    %v4090 = vld [vmem:[%s13 + $0x60] sm:$0xff]
    %v4091 = vld [vmem:[%s13 + $0x68] sm:$0xff]
    %v4092 = vld [vmem:[%s13 + $0x70] sm:$0xff]
    %v4093 = vld [vmem:[%s13 + $0x78] sm:$0xff]
    %v4094 = vld [vmem:[%s13 + $0x80] sm:$0xff]
    %v4095 = vld [vmem:[%s13 + $0x88] sm:$0xff]
    %v4096 = vld [vmem:[%s13 + $0x90] sm:$0xff]
    %v4097 = vld [vmem:[%s13 + $0x98] sm:$0xff]
    %v4098 = vld [vmem:[%s13 + $0xa0] sm:$0xff]
    %v4099 = vld [vmem:[%s13 + $0xa8] sm:$0xff]
    %v4100 = vld [vmem:[%s13 + $0xb0] sm:$0xff]
    %v4101 = vld [vmem:[%s13 + $0xb8] sm:$0xff]
    %v4102 = vld [vmem:[%s13 + $0xc0] sm:$0xff]
    %v4103 = vld [vmem:[%s13 + $0xc8] sm:$0xff]
    %v4104 = vld [vmem:[%s13 + $0xd0] sm:$0xff]
    %v4105 = vld [vmem:[%s13 + $0xd8] sm:$0xff]
    %v4106 = vld [vmem:[%s13 + $0xe0] sm:$0xff]
    %v4107 = vld [vmem:[%s13 + $0xe8] sm:$0xff]
    %v4108 = vld [vmem:[%s13 + $0xf0] sm:$0xff]
    %v4109 = vld [vmem:[%s13 + $0xf8] sm:$0xff]
    %v4110 = vld [vmem:[%s13 + $0x100] sm:$0xff]
    %v4111 = vld [vmem:[%s13 + $0x108] sm:$0xff]
    %v4112 = vld [vmem:[%s13 + $0x110] sm:$0xff]
    %v4113 = vld [vmem:[%s13 + $0x118] sm:$0xff]
    %v4114 = vld [vmem:[%s13 + $0x120] sm:$0xff]
    %v4115 = vld [vmem:[%s13 + $0x128] sm:$0xff]
    %v4116 = vld [vmem:[%s13 + $0x130] sm:$0xff]
    %v4117 = vld [vmem:[%s13 + $0x138] sm:$0xff]
    %4120 = vrot.lane.b32.xlu0 %v4076, 32
    %v4121 = vpop.permute.xlu0 %4120
    %4122 = vrot.lane.b32.xlu0 %v4077, 32
    %v4123 = vpop.permute.xlu0 %4122
    %v4124 = vsel %vm1908, %v4121, %v4123
    %v4126 = vsel %vm1908, %v4123, 0
    %4128 = vmatpush.msra.mxu0 %v4113
    %4129 = vmatpush.msra.mxu0 %v4112
    %4130 = vmatpush.msra.mxu0 %v4111
    %4131 = vmatpush.msra.mxu0 %v4110
    %4132 = vmatpush.msra.mxu0 %v4109
    %4133 = vmatpush.msra.mxu0 %v4108
    %4134 = vmatpush.msra.mxu0 %v4107
    %4135 = vmatpush.msra.mxu0 %v4106
    %4136 = vmatpush.msra.mxu0 %v4105
    %4137 = vmatpush.msra.mxu0 %v4104
    %4138 = vmatpush.msra.mxu0 %v4103
    %4139 = vmatpush.msra.mxu0 %v4102
    %4140 = vmatpush.msra.mxu0 %v4101
    %4141 = vmatpush.msra.mxu0 %v4100
    %4142 = vmatpush.msra.mxu0 %v4099
    %4143 = vmatpush.msra.mxu0 %v4098
    %4144 = vmatmul.f32.gmra.mxu0 %v4124
    %v4145 = vpop.f32.mrf.mxu0
    %v4146 = vadd.f32 0.0, %v4145
    %4147 = vdwg.mxu0
    %4148 = vmatpush.msra.mxu0 0.0
    %4149 = vmatpush.msra.mxu0 0.0
    %4150 = vmatpush.msra.mxu0 0.0
    %4151 = vmatpush.msra.mxu0 0.0
    %4152 = vmatpush.msra.mxu0 0.0
    %4153 = vmatpush.msra.mxu0 0.0
    %4154 = vmatpush.msra.mxu0 0.0
    %4155 = vmatpush.msra.mxu0 0.0
    %4156 = vmatpush.msra.mxu0 0.0
    %4157 = vmatpush.msra.mxu0 0.0
    %4158 = vmatpush.msra.mxu0 0.0
    %4159 = vmatpush.msra.mxu0 0.0
    %4160 = vmatpush.msra.mxu0 %v4117
    %4161 = vmatpush.msra.mxu0 %v4116
    %4162 = vmatpush.msra.mxu0 %v4115
    %4163 = vmatpush.msra.mxu0 %v4114
    %4164 = vmatmul.f32.gmra.mxu0 %v4126
    %v4165 = vpop.f32.mrf.mxu0
    %v4166 = vadd.f32 %v4146, %v4165
    %4167 = vdwg.mxu0
    %4168 = vmatpush.msra.mxu0 %v4093
    %4169 = vmatpush.msra.mxu0 %v4092
    %4170 = vmatpush.msra.mxu0 %v4091
    %4171 = vmatpush.msra.mxu0 %v4090
    %4172 = vmatpush.msra.mxu0 %v4089
    %4173 = vmatpush.msra.mxu0 %v4088
    %4174 = vmatpush.msra.mxu0 %v4087
    %4175 = vmatpush.msra.mxu0 %v4086
    %4176 = vmatpush.msra.mxu0 %v4085
    %4177 = vmatpush.msra.mxu0 %v4084
    %4178 = vmatpush.msra.mxu0 %v4083
    %4179 = vmatpush.msra.mxu0 %v4082
    %4180 = vmatpush.msra.mxu0 %v4081
    %4181 = vmatpush.msra.mxu0 %v4080
    %4182 = vmatpush.msra.mxu0 %v4079
    %4183 = vmatpush.msra.mxu0 %v4078
    %4184 = vmatmul.f32.gmra.mxu0 %v3042
    %v4185 = vpop.f32.mrf.mxu0
    %v4186 = vadd.f32 %v4166, %v4185
    %4187 = vdwg.mxu0
    %4188 = vmatpush.msra.mxu0 0.0
    %4189 = vmatpush.msra.mxu0 0.0
    %4190 = vmatpush.msra.mxu0 0.0
    %4191 = vmatpush.msra.mxu0 0.0
    %4192 = vmatpush.msra.mxu0 0.0
    %4193 = vmatpush.msra.mxu0 0.0
    %4194 = vmatpush.msra.mxu0 0.0
    %4195 = vmatpush.msra.mxu0 0.0
    %4196 = vmatpush.msra.mxu0 0.0
    %4197 = vmatpush.msra.mxu0 0.0
    %4198 = vmatpush.msra.mxu0 0.0
    %4199 = vmatpush.msra.mxu0 0.0
    %4200 = vmatpush.msra.mxu0 %v4097
    %4201 = vmatpush.msra.mxu0 %v4096
    %4202 = vmatpush.msra.mxu0 %v4095
    %4203 = vmatpush.msra.mxu0 %v4094
    %4204 = vmatmul.f32.gmra.mxu0 %v3044
    %v4205 = vpop.f32.mrf.mxu0
    %v4206 = vadd.f32 %v4186, %v4205
    %4207 = vdwg.mxu0
    %v4208 = vld [vmem:[#allocation2] sm:$0x1]
    %v4210 = vperm.slane %v4208, 0
    %v4212 = vadd.f32 %v4206, %v4210
    %v4213 = vxor.u32 %v4212, 2147483648
    %v4214 = vmul.f32 %v4213, 1.442695
    %v4215 = vpow.pop %v4214
    %v4216 = vadd.f32 %v4215, 1.0
    %v4217 = vrcp.pop %v4216
    %v4218 = vmul.f32 %v4216, %v4217
    %v4219 = vsub.f32 1.0, %v4218
    %v4220 = vmul.f32 %v4217, %v4219
    %v4221 = vadd.f32 %v4217, %v4220
    %vm4222 = vweird.f32 %v4216
    %vm4223 = vweird.f32 %v4217
    %vm4224 = vmor %vm4222, %vm4223
    %v4225 = vsel %vm4224, %v4217, %v4221
    %v4226 = vand.u32 2147483647, %v4216
    %vm4227 = vcmp.eq.f32.partialorder %v4226, 8.507059e+37
    %v4228 = vand.u32 %v4216, 2147483648
    %v4229 = vor.u32 1.1754944e-38, %v4228
    %v4230 = vsel %vm4227, %v4229, %v4225
    %v4231 = vmul.f32 1.0, %v4230
    %vm4232 = vcmask 1024
    %4233 = vst.msk [vmem:[%s15] sm:$0x3] %vm4232, %v4231
    // Predicated region
    $region70: #{tpu_custom_call.1} parent=1 // pred_check
      _
    $region71: #{tpu_custom_call.1} parent=1 // pred_check_branch
      %4235 = sbr.rel (0) target = $region73
    $region72: #{tpu_custom_call.1} parent=1 // pred_region
      _
    $region73: #{tpu_custom_call.1} parent=1 // pred_fallthru
      _
    // Predicated region
    $region74: #{tpu_custom_call.1} parent=1 // pred_check
      _
    $region75: #{tpu_custom_call.1} parent=1 // pred_check_branch
      %4237 = sbr.rel (0) target = $region77
    $region76: #{tpu_custom_call.1} parent=1 // pred_region
      _
    $region77: #{tpu_custom_call.1} parent=1 // pred_fallthru
      _
    %4238 = vsyncpa [#allocation4], 1
    %4239 = vsyncpa [#allocation6], 1

</llo_original>
